<compile_context>
chip_gen: v7x
topology: tpu7x:2x2x1
jax: 0.10.0
libtpu: 0.0.40
codegen_flags: <defaults>
</compile_context>

<pallas_src>
import math

import jax
import jax.numpy as jnp
from jax.experimental import pallas as pl
from jax.experimental.pallas import tpu as pltpu

N_DIM = 3
N_CLASSES = 2
TIME_EMB_DIM = 128       # module constructor arg (default 512; small for test)
LN_EPS = 1e-5            # PyTorch nn.LayerNorm default
COND_WIDTH = 1024        # 128(p1*d1) + 128(p2) + 256(pb) + 256(pu1) + 128(pu2) + 128(pu3)
TB = 8                   # batch tile (grid over batch; parallel across cores)
WEIGHT_DTYPE = jnp.bfloat16   # bf16 matmul weights, f32 accumulation (flip to f32 for v5e/exact parity)

# ---------------------------------------------------------------------------
# Row indices into the single packed "vec" array (shape [NUM_VEC_ROWS, 1024]).
# ---------------------------------------------------------------------------
(R_TM_B1, R_TM_B2,
 R_N1_G, R_N1_B,
 R_D2_B, R_N2_G, R_N2_B,
 R_BN_B, R_NB_G, R_NB_B,
 R_U1_B, R_NU1_G, R_NU1_B,
 R_RP_B,
 R_U2_B, R_NU2_G, R_NU2_B,
 R_U3_B, R_NU3_G, R_NU3_B,
 R_F_B,
 R_D1_0, R_D1_1, R_D1_2,
 R_NULL) = range(25)
R_EMB0 = 25                       # rows R_EMB0 .. R_EMB0+N_CLASSES-1 : class embedding table
R_BALL = R_EMB0 + N_CLASSES       # fused conditioning bias, full 1024 lanes
NUM_VEC_ROWS = R_BALL + 1


# ---------------------------------------------------------------------------
# Pallas kernel: ConditionalEmbedding + time MLP + fused conditioning + U-Net
# ---------------------------------------------------------------------------
def unet_kernel(x_ref, sin_ref, y_ref, vec_ref,
                w128_ref, wp_ref, w256_ref, wd2_ref, wrp_ref, wu3_ref, wf_ref,
                out_ref):
    f32 = jnp.float32

    def vrow(i, w):                       # [1, w] row of the packed vector array
        return vec_ref[i:i + 1, 0:w]

    def mm(a, w):                         # bf16 MXU matmul, f32 accumulation
        return jnp.dot(a.astype(w.dtype), w, preferred_element_type=f32)

    def silu(a):
        return a * jax.nn.sigmoid(a)

    def layernorm(a, gi, bi):
        d = a.shape[-1]
        mu = jnp.mean(a, axis=-1, keepdims=True)
        var = jnp.mean((a - mu) * (a - mu), axis=-1, keepdims=True)
        return (a - mu) * jax.lax.rsqrt(var + LN_EPS) * vrow(gi, d) + vrow(bi, d)

    x = x_ref[...]                        # [TB, 3]   f32
    sin = sin_ref[...]                    # [TB, 128] f32 (sinusoidal featurization)
    y = y_ref[...]                        # [TB, 1]   int32 labels (-1 => null embedding)

    # ---- ConditionalEmbedding (the spec module), exact f32 select chain ----
    y_emb = jnp.broadcast_to(vrow(R_NULL, 128), (x.shape[0], 128))
    for c in range(N_CLASSES):
        y_emb = jnp.where(y == c, vrow(R_EMB0 + c, 128), y_emb)

    # ---- time_mlp: Linear -> SiLU -> Linear ----
    t_emb = mm(silu(mm(sin, w128_ref[0]) + vrow(R_TM_B1, 128)),
               w128_ref[1]) + vrow(R_TM_B2, 128)                       # [TB,128]

    # ---- all six conditioning projections as ONE lane-dense matmul pass ----
    # cond = [t_emb | y_emb]; kept split to avoid a lane concat:
    #   cond @ P_all = t_emb @ P_t + y_emb @ P_c
    cond_all = (mm(t_emb, wp_ref[0]) + mm(y_emb, wp_ref[1])
                + vrow(R_BALL, COND_WIDTH))                            # [TB,1024]

    # ---- encoder ----
    # down1 with the p1/d1 fold: (x + cond@p1 + p1_b)@d1 + d1_b
    #                         == x@d1 + cond@(p1@d1) + (p1_b@d1 + d1_b)
    # x@d1 is 3 VPU FMAs (no K=3 MXU pass); cond@(p1@d1)+bias is cond_all[:, :128].
    h1_pre = (x[:, 0:1] * vrow(R_D1_0, 128)
              + x[:, 1:2] * vrow(R_D1_1, 128)
              + x[:, 2:3] * vrow(R_D1_2, 128)
              + cond_all[:, 0:128])
    h1 = layernorm(silu(h1_pre), R_N1_G, R_N1_B)                       # [TB,128]

    h2 = layernorm(silu(mm(h1 + cond_all[:, 128:256], wd2_ref[...])
                        + vrow(R_D2_B, 256)),
                   R_N2_G, R_N2_B)                                     # [TB,256]

    # ---- bottleneck ----
    hb = layernorm(silu(mm(h2 + cond_all[:, 256:512], w256_ref[0])
                        + vrow(R_BN_B, 256)),
                   R_NB_G, R_NB_B)                                     # [TB,256]

    # ---- decoder (skip concats replaced by split-weight accumulation) ----
    h = layernorm(silu(mm(hb + cond_all[:, 512:768], w256_ref[1])
                       + mm(h2, w256_ref[2]) + vrow(R_U1_B, 256)),
                  R_NU1_G, R_NU1_B)                                    # [TB,256]

    h = mm(h, wrp_ref[...]) + vrow(R_RP_B, 128)                        # [TB,128]

    h = layernorm(silu(mm(h + cond_all[:, 768:896], w128_ref[2])
                       + mm(h1, w128_ref[3]) + vrow(R_U2_B, 128)),
                  R_NU2_G, R_NU2_B)                                    # [TB,128]

    h = layernorm(silu(mm(h + cond_all[:, 896:1024], wu3_ref[0])
                       + mm(h1, wu3_ref[1]) + vrow(R_U3_B, 64)),
                  R_NU3_G, R_NU3_B)                                    # [TB,64]

    out_ref[...] = mm(h, wf_ref[...]) + vrow(R_F_B, N_DIM)             # [TB,3]


# ---------------------------------------------------------------------------
# JAX glue (runs inside the same jit as the pallas_call)
# ---------------------------------------------------------------------------
def sinusoidal_embeddings(t, dim):
    # TODO(synk): kept outside the Pallas kernel — Mosaic sin/cos lowering is
    # version-dependent; it fuses into the same jit so the overhead is one tiny fusion.
    half = dim // 2
    freqs = jnp.exp(jnp.arange(half, dtype=jnp.float32)
                    * (-math.log(10000.0) / (half - 1)))
    emb = t.astype(jnp.float32)[:, None] * freqs[None, :]
    emb = jnp.concatenate([jnp.sin(emb), jnp.cos(emb)], axis=-1)
    norm = jnp.sqrt(jnp.sum(emb * emb, axis=-1, keepdims=True))
    return emb / norm


def init_params(key):
    """Builds the packed parameter set. All Linear weights stored as [in, out]."""
    D = TIME_EMB_DIM
    keys = iter(jax.random.split(key, 40))

    def dense(fan_in, fan_out):
        kw, kb = jax.random.split(next(keys))
        bound = 1.0 / math.sqrt(fan_in)
        w = jax.random.uniform(kw, (fan_in, fan_out), jnp.float32, -bound, bound)
        b = jax.random.uniform(kb, (1, fan_out), jnp.float32, -bound, bound)
        return w, b

    def proj_pair(out_dim):   # time_proj_k(t) + class_proj_k(y) == [t|y] @ [Wt;Wc] + (bt+bc)
        wt, bt = dense(D, out_dim)
        wc, bc = dense(D, out_dim)
        return jnp.concatenate([wt, wc], axis=0), bt + bc

    emb_table = jax.random.normal(next(keys), (N_CLASSES, D), jnp.float32)
    null_emb = jnp.zeros((1, D), jnp.float32)

    tm_w1, tm_b1 = dense(D, D)
    tm_w2, tm_b2 = dense(D, D)

    p1_w, p1_b = proj_pair(N_DIM)
    p2_w, p2_b = proj_pair(128)
    pb_w, pb_b = proj_pair(256)
    pu1_w, pu1_b = proj_pair(256)
    pu2_w, pu2_b = proj_pair(128)
    pu3_w, pu3_b = proj_pair(128)
    # NOTE: time_proj_3 / class_proj_3 exist in the torch __init__ but are unused in forward.

    d1_w, d1_b = dense(N_DIM, 128)
    d2_w, d2_b = dense(128, 256)
    bn_w, bn_b = dense(256, 256)
    u1_w, u1_b = dense(512, 256)
    rp_w, rp_b = dense(256, 128)
    u2_w, u2_b = dense(256, 128)
    u3_w, u3_b = dense(256, 64)
    f_w, f_b = dense(64, N_DIM)

    ones = lambda d: jnp.ones((1, d), jnp.float32)
    zeros = lambda d: jnp.zeros((1, d), jnp.float32)
    n1_g, n1_b = ones(128), zeros(128)
    n2_g, n2_b = ones(256), zeros(256)
    nb_g, nb_b = ones(256), zeros(256)
    nu1_g, nu1_b = ones(256), zeros(256)
    nu2_g, nu2_b = ones(128), zeros(128)
    nu3_g, nu3_b = ones(64), zeros(64)

    # --- fold p1 through d1 ---
    p1d1_w = p1_w @ d1_w                      # [256,128]
    p1d1_b = p1_b @ d1_w + d1_b               # [1,128]

    # --- fuse all conditioning projections into one [256,1024] matrix ---
    P_full = jnp.concatenate([p1d1_w, p2_w, pb_w, pu1_w, pu2_w, pu3_w], axis=1)  # [256,1024]
    b_all = jnp.concatenate([p1d1_b, p2_b, pb_b, pu1_b, pu2_b, pu3_b], axis=1)   # [1,1024]

    wdt = WEIGHT_DTYPE
    params = {
        "w128": jnp.stack([tm_w1, tm_w2, u2_w[:128], u2_w[128:]]).astype(wdt),   # [4,128,128]
        "wp":   jnp.stack([P_full[:D], P_full[D:]]).astype(wdt),                 # [2,128,1024]
        "w256": jnp.stack([bn_w, u1_w[:256], u1_w[256:]]).astype(wdt),           # [3,256,256]
        "wd2":  d2_w.astype(wdt),                                                # [128,256]
        "wrp":  rp_w.astype(wdt),                                                # [256,128]
        "wu3":  jnp.stack([u3_w[:128], u3_w[128:]]).astype(wdt),                 # [2,128,64]
        "wf":   f_w.astype(wdt),                                                 # [64,3]
    }

    # --- pack every small vector (biases, LN affine, d1 rows, embedding table,
    #     fused conditioning bias) into ONE f32 [rows, 1024] array -> one DMA.
    def row(v):
        v = jnp.reshape(v, (1, -1)).astype(jnp.float32)
        return jnp.pad(v, ((0, 0), (0, COND_WIDTH - v.shape[1])))

    rows = [None] * NUM_VEC_ROWS
    rows[R_TM_B1] = row(tm_b1); rows[R_TM_B2] = row(tm_b2)
    rows[R_N1_G] = row(n1_g);   rows[R_N1_B] = row(n1_b)
    rows[R_D2_B] = row(d2_b);   rows[R_N2_G] = row(n2_g);   rows[R_N2_B] = row(n2_b)
    rows[R_BN_B] = row(bn_b);   rows[R_NB_G] = row(nb_g);   rows[R_NB_B] = row(nb_b)
    rows[R_U1_B] = row(u1_b);   rows[R_NU1_G] = row(nu1_g); rows[R_NU1_B] = row(nu1_b)
    rows[R_RP_B] = row(rp_b)
    rows[R_U2_B] = row(u2_b);   rows[R_NU2_G] = row(nu2_g); rows[R_NU2_B] = row(nu2_b)
    rows[R_U3_B] = row(u3_b);   rows[R_NU3_G] = row(nu3_g); rows[R_NU3_B] = row(nu3_b)
    rows[R_F_B] = row(f_b)
    rows[R_D1_0] = row(d1_w[0]); rows[R_D1_1] = row(d1_w[1]); rows[R_D1_2] = row(d1_w[2])
    rows[R_NULL] = row(null_emb)
    for c in range(N_CLASSES):
        rows[R_EMB0 + c] = row(emb_table[c])
    rows[R_BALL] = row(b_all)
    params["vec"] = jnp.concatenate(rows, axis=0)                                # [28,1024]

    return params


@jax.jit
def conditional_unet1d(x, t, y, params):
    B = x.shape[0]
    sin_emb = sinusoidal_embeddings(t, TIME_EMB_DIM)                  # [B,128]

    # pad batch to a multiple of the batch tile
    Bp = ((B + TB - 1) // TB) * TB
    pad = Bp - B
    xs = jnp.pad(x.astype(jnp.float32), ((0, pad), (0, 0)))
    ss = jnp.pad(sin_emb, ((0, pad), (0, 0)))
    ys = jnp.pad(y.astype(jnp.int32).reshape(-1, 1), ((0, pad), (0, 0)),
                 constant_values=-1)

    def batch_spec(w):
        return pl.BlockSpec((TB, w), lambda i: (i, 0))

    def full_spec(shape):
        nd = len(shape)
        return pl.BlockSpec(shape, lambda i, _nd=nd: (0,) * _nd)

    in_specs = [
        batch_spec(N_DIM),                 # x
        batch_spec(TIME_EMB_DIM),          # sinusoidal features
        batch_spec(1),                     # labels
        full_spec(params["vec"].shape),    # packed vectors (resident)
        full_spec(params["w128"].shape),
        full_spec(params["wp"].shape),
        full_spec(params["w256"].shape),
        full_spec(params["wd2"].shape),
        full_spec(params["wrp"].shape),
        full_spec(params["wu3"].shape),
        full_spec(params["wf"].shape),
    ]

    out = pl.pallas_call(
        unet_kernel,
        out_shape=jax.ShapeDtypeStruct((Bp, N_DIM), jnp.float32),
        grid=(Bp // TB,),
        in_specs=in_specs,
        out_specs=batch_spec(N_DIM),
        compiler_params=pltpu.CompilerParams(
            dimension_semantics=("parallel",)),
    )(xs, ss, ys,
      params["vec"], params["w128"], params["wp"], params["w256"],
      params["wd2"], params["wrp"], params["wu3"], params["wf"])
    return out[:B]


if __name__ == "__main__":
    B = 8
    key = jax.random.PRNGKey(0)
    kp, kx, kt, ky = jax.random.split(key, 4)

    params = init_params(kp)

    x = jax.random.normal(kx, (B, N_DIM), jnp.float32)
    t = jax.random.randint(kt, (B,), 0, 1000)
    # labels include -1 to exercise the null-embedding path of ConditionalEmbedding
    y = jax.random.randint(ky, (B,), -1, N_CLASSES)

    out = conditional_unet1d(x, t, y, params)
    out = jax.block_until_ready(out)

    assert out.shape == (B, N_DIM)
    assert bool(jnp.all(jnp.isfinite(out)))
    print("KERNEL_OK")
</pallas_src>

<mosaic_0001>
module attributes {stable_mosaic.version = 11 : i64} {
  func.func @unet_kernel(%arg0: i32, %arg1: memref<8x3xf32, #tpu.memory_space<vmem>>, %arg2: memref<8x128xf32, #tpu.memory_space<vmem>>, %arg3: memref<8x1xi32, #tpu.memory_space<vmem>>, %arg4: memref<28x1024xf32, #tpu.memory_space<vmem>>, %arg5: memref<4x128x128xbf16, #tpu.memory_space<vmem>>, %arg6: memref<2x128x1024xbf16, #tpu.memory_space<vmem>>, %arg7: memref<3x256x256xbf16, #tpu.memory_space<vmem>>, %arg8: memref<128x256xbf16, #tpu.memory_space<vmem>>, %arg9: memref<256x128xbf16, #tpu.memory_space<vmem>>, %arg10: memref<2x128x64xbf16, #tpu.memory_space<vmem>>, %arg11: memref<64x3xbf16, #tpu.memory_space<vmem>>, %arg12: memref<8x3xf32, #tpu.memory_space<vmem>>) attributes {dimension_semantics = [#tpu.dimension_semantics<parallel>], iteration_bounds = array<i64: 1>, scalar_prefetch = 0 : i64, scratch_operands = 0 : i64, tpu.core_type = #tpu.core_type<tc>, window_params = [{transform_indices = @transform_0, window_bounds = array<i64: 8, 3>}, {transform_indices = @transform_1, window_bounds = array<i64: 8, 128>}, {transform_indices = @transform_2, window_bounds = array<i64: 8, 1>}, {pipeline_mode = #tpu.pipeline_mode<synchronous>, transform_indices = @transform_3, window_bounds = array<i64: 28, 1024>}, {pipeline_mode = #tpu.pipeline_mode<synchronous>, transform_indices = @transform_4, window_bounds = array<i64: 4, 128, 128>}, {pipeline_mode = #tpu.pipeline_mode<synchronous>, transform_indices = @transform_5, window_bounds = array<i64: 2, 128, 1024>}, {pipeline_mode = #tpu.pipeline_mode<synchronous>, transform_indices = @transform_6, window_bounds = array<i64: 3, 256, 256>}, {pipeline_mode = #tpu.pipeline_mode<synchronous>, transform_indices = @transform_7, window_bounds = array<i64: 128, 256>}, {pipeline_mode = #tpu.pipeline_mode<synchronous>, transform_indices = @transform_8, window_bounds = array<i64: 256, 128>}, {pipeline_mode = #tpu.pipeline_mode<synchronous>, transform_indices = @transform_9, window_bounds = array<i64: 2, 128, 64>}, {pipeline_mode = #tpu.pipeline_mode<synchronous>, transform_indices = @transform_10, window_bounds = array<i64: 64, 3>}, {transform_indices = @transform_11, window_bounds = array<i64: 8, 3>}]} {
    %c0 = arith.constant 0 : index
    %c0_0 = arith.constant 0 : index
    %0 = vector.load %arg1[%c0, %c0_0] : memref<8x3xf32, #tpu.memory_space<vmem>>, vector<8x3xf32>
    %c0_1 = arith.constant 0 : index
    %c0_2 = arith.constant 0 : index
    %1 = vector.load %arg2[%c0_1, %c0_2] : memref<8x128xf32, #tpu.memory_space<vmem>>, vector<8x128xf32>
    %c0_3 = arith.constant 0 : index
    %c0_4 = arith.constant 0 : index
    %2 = vector.load %arg3[%c0_3, %c0_4] : memref<8x1xi32, #tpu.memory_space<vmem>>, vector<8x1xi32>
    %c24 = arith.constant 24 : index
    %c0_5 = arith.constant 0 : index
    %3 = vector.load %arg4[%c24, %c0_5] : memref<28x1024xf32, #tpu.memory_space<vmem>>, vector<1x128xf32>
    %4 = vector.shape_cast %3 : vector<1x128xf32> to vector<1x128xf32>
    %5 = vector.broadcast %4 : vector<1x128xf32> to vector<8x128xf32>
    %c0_i32 = arith.constant 0 : i32
    %6 = vector.broadcast %c0_i32 : i32 to vector<8x1xi32>
    %7 = arith.cmpi eq, %2, %6 : vector<8x1xi32>
    %c25 = arith.constant 25 : index
    %c0_6 = arith.constant 0 : index
    %8 = vector.load %arg4[%c25, %c0_6] : memref<28x1024xf32, #tpu.memory_space<vmem>>, vector<1x128xf32>
    %9 = vector.shape_cast %7 : vector<8x1xi1> to vector<8x1xi1>
    %10 = vector.broadcast %9 : vector<8x1xi1> to vector<8x128xi1>
    %11 = vector.shape_cast %8 : vector<1x128xf32> to vector<1x128xf32>
    %12 = vector.broadcast %11 : vector<1x128xf32> to vector<8x128xf32>
    %13 = arith.select %10, %12, %5 : vector<8x128xi1>, vector<8x128xf32>
    %c1_i32 = arith.constant 1 : i32
    %14 = vector.broadcast %c1_i32 : i32 to vector<8x1xi32>
    %15 = arith.cmpi eq, %2, %14 : vector<8x1xi32>
    %c26 = arith.constant 26 : index
    %c0_7 = arith.constant 0 : index
    %16 = vector.load %arg4[%c26, %c0_7] : memref<28x1024xf32, #tpu.memory_space<vmem>>, vector<1x128xf32>
    %17 = vector.shape_cast %15 : vector<8x1xi1> to vector<8x1xi1>
    %18 = vector.broadcast %17 : vector<8x1xi1> to vector<8x128xi1>
    %19 = vector.shape_cast %16 : vector<1x128xf32> to vector<1x128xf32>
    %20 = vector.broadcast %19 : vector<1x128xf32> to vector<8x128xf32>
    %21 = arith.select %18, %20, %13 : vector<8x128xi1>, vector<8x128xf32>
    %c0_8 = arith.constant 0 : index
    %c0_9 = arith.constant 0 : index
    %c0_10 = arith.constant 0 : index
    %22 = vector.load %arg5[%c0_8, %c0_9, %c0_10] : memref<4x128x128xbf16, #tpu.memory_space<vmem>>, vector<1x128x128xbf16>
    %23 = vector.shape_cast %22 : vector<1x128x128xbf16> to vector<128x128xbf16>
    %24 = arith.truncf %1 : vector<8x128xf32> to vector<8x128xbf16>
    %cst = arith.constant dense<0.000000e+00> : vector<8x128xf32>
    %25 = tpu.matmul %24, %23, %cst {dimension_numbers = #tpu.dot_dimension_numbers<[1], [0], [0], [1], [0, 0, 1, 1], [], []>} : vector<8x128xbf16>, vector<128x128xbf16>, vector<8x128xf32> -> vector<8x128xf32>
    %c0_11 = arith.constant 0 : index
    %c0_12 = arith.constant 0 : index
    %26 = vector.load %arg4[%c0_11, %c0_12] : memref<28x1024xf32, #tpu.memory_space<vmem>>, vector<1x128xf32>
    %27 = vector.broadcast %26 : vector<1x128xf32> to vector<8x128xf32>
    %28 = arith.addf %25, %27 : vector<8x128xf32>
    %29 = arith.negf %28 : vector<8x128xf32>
    %30 = math.exp %29 : vector<8x128xf32>
    %cst_13 = arith.constant 1.000000e+00 : f32
    %31 = vector.broadcast %cst_13 : f32 to vector<8x128xf32>
    %32 = arith.addf %31, %30 : vector<8x128xf32>
    %33 = arith.divf %31, %32 : vector<8x128xf32>
    %34 = arith.mulf %28, %33 : vector<8x128xf32>
    %c1 = arith.constant 1 : index
    %c0_14 = arith.constant 0 : index
    %c0_15 = arith.constant 0 : index
    %35 = vector.load %arg5[%c1, %c0_14, %c0_15] : memref<4x128x128xbf16, #tpu.memory_space<vmem>>, vector<1x128x128xbf16>
    %36 = vector.shape_cast %35 : vector<1x128x128xbf16> to vector<128x128xbf16>
    %37 = arith.truncf %34 : vector<8x128xf32> to vector<8x128xbf16>
    %cst_16 = arith.constant dense<0.000000e+00> : vector<8x128xf32>
    %38 = tpu.matmul %37, %36, %cst_16 {dimension_numbers = #tpu.dot_dimension_numbers<[1], [0], [0], [1], [0, 0, 1, 1], [], []>} : vector<8x128xbf16>, vector<128x128xbf16>, vector<8x128xf32> -> vector<8x128xf32>
    %c1_17 = arith.constant 1 : index
    %c0_18 = arith.constant 0 : index
    %39 = vector.load %arg4[%c1_17, %c0_18] : memref<28x1024xf32, #tpu.memory_space<vmem>>, vector<1x128xf32>
    %40 = vector.broadcast %39 : vector<1x128xf32> to vector<8x128xf32>
    %41 = arith.addf %38, %40 : vector<8x128xf32>
    %c0_19 = arith.constant 0 : index
    %c0_20 = arith.constant 0 : index
    %c0_21 = arith.constant 0 : index
    %42 = vector.load %arg6[%c0_19, %c0_20, %c0_21] : memref<2x128x1024xbf16, #tpu.memory_space<vmem>>, vector<1x128x1024xbf16>
    %43 = vector.shape_cast %42 : vector<1x128x1024xbf16> to vector<128x1024xbf16>
    %44 = arith.truncf %41 : vector<8x128xf32> to vector<8x128xbf16>
    %cst_22 = arith.constant dense<0.000000e+00> : vector<8x1024xf32>
    %45 = tpu.matmul %44, %43, %cst_22 {dimension_numbers = #tpu.dot_dimension_numbers<[1], [0], [0], [1], [0, 0, 1, 1], [], []>} : vector<8x128xbf16>, vector<128x1024xbf16>, vector<8x1024xf32> -> vector<8x1024xf32>
    %c1_23 = arith.constant 1 : index
    %c0_24 = arith.constant 0 : index
    %c0_25 = arith.constant 0 : index
    %46 = vector.load %arg6[%c1_23, %c0_24, %c0_25] : memref<2x128x1024xbf16, #tpu.memory_space<vmem>>, vector<1x128x1024xbf16>
    %47 = vector.shape_cast %46 : vector<1x128x1024xbf16> to vector<128x1024xbf16>
    %48 = arith.truncf %21 : vector<8x128xf32> to vector<8x128xbf16>
    %cst_26 = arith.constant dense<0.000000e+00> : vector<8x1024xf32>
    %49 = tpu.matmul %48, %47, %cst_26 {dimension_numbers = #tpu.dot_dimension_numbers<[1], [0], [0], [1], [0, 0, 1, 1], [], []>} : vector<8x128xbf16>, vector<128x1024xbf16>, vector<8x1024xf32> -> vector<8x1024xf32>
    %50 = arith.addf %45, %49 : vector<8x1024xf32>
    %c27 = arith.constant 27 : index
    %c0_27 = arith.constant 0 : index
    %51 = vector.load %arg4[%c27, %c0_27] : memref<28x1024xf32, #tpu.memory_space<vmem>>, vector<1x1024xf32>
    %52 = vector.broadcast %51 : vector<1x1024xf32> to vector<8x1024xf32>
    %53 = arith.addf %50, %52 : vector<8x1024xf32>
    %54 = vector.extract_strided_slice %0 {offsets = [0, 0], sizes = [8, 1], strides = [1, 1]} : vector<8x3xf32> to vector<8x1xf32>
    %c21 = arith.constant 21 : index
    %c0_28 = arith.constant 0 : index
    %55 = vector.load %arg4[%c21, %c0_28] : memref<28x1024xf32, #tpu.memory_space<vmem>>, vector<1x128xf32>
    %56 = vector.broadcast %54 : vector<8x1xf32> to vector<8x128xf32>
    %57 = vector.broadcast %55 : vector<1x128xf32> to vector<8x128xf32>
    %58 = arith.mulf %56, %57 : vector<8x128xf32>
    %59 = vector.extract_strided_slice %0 {offsets = [0, 1], sizes = [8, 1], strides = [1, 1]} : vector<8x3xf32> to vector<8x1xf32>
    %c22 = arith.constant 22 : index
    %c0_29 = arith.constant 0 : index
    %60 = vector.load %arg4[%c22, %c0_29] : memref<28x1024xf32, #tpu.memory_space<vmem>>, vector<1x128xf32>
    %61 = vector.broadcast %59 : vector<8x1xf32> to vector<8x128xf32>
    %62 = vector.broadcast %60 : vector<1x128xf32> to vector<8x128xf32>
    %63 = arith.mulf %61, %62 : vector<8x128xf32>
    %64 = arith.addf %58, %63 : vector<8x128xf32>
    %65 = vector.extract_strided_slice %0 {offsets = [0, 2], sizes = [8, 1], strides = [1, 1]} : vector<8x3xf32> to vector<8x1xf32>
    %c23 = arith.constant 23 : index
    %c0_30 = arith.constant 0 : index
    %66 = vector.load %arg4[%c23, %c0_30] : memref<28x1024xf32, #tpu.memory_space<vmem>>, vector<1x128xf32>
    %67 = vector.broadcast %65 : vector<8x1xf32> to vector<8x128xf32>
    %68 = vector.broadcast %66 : vector<1x128xf32> to vector<8x128xf32>
    %69 = arith.mulf %67, %68 : vector<8x128xf32>
    %70 = arith.addf %64, %69 : vector<8x128xf32>
    %71 = vector.extract_strided_slice %53 {offsets = [0, 0], sizes = [8, 128], strides = [1, 1]} : vector<8x1024xf32> to vector<8x128xf32>
    %72 = arith.addf %70, %71 : vector<8x128xf32>
    %73 = arith.negf %72 : vector<8x128xf32>
    %74 = math.exp %73 : vector<8x128xf32>
    %cst_31 = arith.constant 1.000000e+00 : f32
    %75 = vector.broadcast %cst_31 : f32 to vector<8x128xf32>
    %76 = arith.addf %75, %74 : vector<8x128xf32>
    %77 = arith.divf %75, %76 : vector<8x128xf32>
    %78 = arith.mulf %72, %77 : vector<8x128xf32>
    %cst_32 = arith.constant dense<0.000000e+00> : vector<8xf32>
    %79 = vector.multi_reduction <add>, %78, %cst_32 [1] : vector<8x128xf32> to vector<8xf32>
    %80 = vector.shape_cast %79 : vector<8xf32> to vector<8x1xf32>
    %cst_33 = arith.constant 1.280000e+02 : f32
    %81 = vector.broadcast %cst_33 : f32 to vector<8x1xf32>
    %82 = arith.divf %80, %81 : vector<8x1xf32>
    %83 = vector.broadcast %82 : vector<8x1xf32> to vector<8x128xf32>
    %84 = arith.subf %78, %83 : vector<8x128xf32>
    %85 = vector.broadcast %82 : vector<8x1xf32> to vector<8x128xf32>
    %86 = arith.subf %78, %85 : vector<8x128xf32>
    %87 = arith.mulf %84, %86 : vector<8x128xf32>
    %cst_34 = arith.constant dense<0.000000e+00> : vector<8xf32>
    %88 = vector.multi_reduction <add>, %87, %cst_34 [1] : vector<8x128xf32> to vector<8xf32>
    %89 = vector.shape_cast %88 : vector<8xf32> to vector<8x1xf32>
    %cst_35 = arith.constant 1.280000e+02 : f32
    %90 = vector.broadcast %cst_35 : f32 to vector<8x1xf32>
    %91 = arith.divf %89, %90 : vector<8x1xf32>
    %92 = vector.broadcast %82 : vector<8x1xf32> to vector<8x128xf32>
    %93 = arith.subf %78, %92 : vector<8x128xf32>
    %cst_36 = arith.constant 9.99999974E-6 : f32
    %94 = vector.broadcast %cst_36 : f32 to vector<8x1xf32>
    %95 = arith.addf %91, %94 : vector<8x1xf32>
    %96 = math.rsqrt %95 : vector<8x1xf32>
    %97 = vector.broadcast %96 : vector<8x1xf32> to vector<8x128xf32>
    %98 = arith.mulf %93, %97 : vector<8x128xf32>
    %c2 = arith.constant 2 : index
    %c0_37 = arith.constant 0 : index
    %99 = vector.load %arg4[%c2, %c0_37] : memref<28x1024xf32, #tpu.memory_space<vmem>>, vector<1x128xf32>
    %100 = vector.broadcast %99 : vector<1x128xf32> to vector<8x128xf32>
    %101 = arith.mulf %98, %100 : vector<8x128xf32>
    %c3 = arith.constant 3 : index
    %c0_38 = arith.constant 0 : index
    %102 = vector.load %arg4[%c3, %c0_38] : memref<28x1024xf32, #tpu.memory_space<vmem>>, vector<1x128xf32>
    %103 = vector.broadcast %102 : vector<1x128xf32> to vector<8x128xf32>
    %104 = arith.addf %101, %103 : vector<8x128xf32>
    %105 = vector.extract_strided_slice %53 {offsets = [0, 128], sizes = [8, 128], strides = [1, 1]} : vector<8x1024xf32> to vector<8x128xf32>
    %106 = arith.addf %104, %105 : vector<8x128xf32>
    %c0_39 = arith.constant 0 : index
    %c0_40 = arith.constant 0 : index
    %107 = vector.load %arg8[%c0_39, %c0_40] : memref<128x256xbf16, #tpu.memory_space<vmem>>, vector<128x256xbf16>
    %108 = arith.truncf %106 : vector<8x128xf32> to vector<8x128xbf16>
    %cst_41 = arith.constant dense<0.000000e+00> : vector<8x256xf32>
    %109 = tpu.matmul %108, %107, %cst_41 {dimension_numbers = #tpu.dot_dimension_numbers<[1], [0], [0], [1], [0, 0, 1, 1], [], []>} : vector<8x128xbf16>, vector<128x256xbf16>, vector<8x256xf32> -> vector<8x256xf32>
    %c4 = arith.constant 4 : index
    %c0_42 = arith.constant 0 : index
    %110 = vector.load %arg4[%c4, %c0_42] : memref<28x1024xf32, #tpu.memory_space<vmem>>, vector<1x256xf32>
    %111 = vector.broadcast %110 : vector<1x256xf32> to vector<8x256xf32>
    %112 = arith.addf %109, %111 : vector<8x256xf32>
    %113 = arith.negf %112 : vector<8x256xf32>
    %114 = math.exp %113 : vector<8x256xf32>
    %cst_43 = arith.constant 1.000000e+00 : f32
    %115 = vector.broadcast %cst_43 : f32 to vector<8x256xf32>
    %116 = arith.addf %115, %114 : vector<8x256xf32>
    %117 = arith.divf %115, %116 : vector<8x256xf32>
    %118 = arith.mulf %112, %117 : vector<8x256xf32>
    %cst_44 = arith.constant dense<0.000000e+00> : vector<8xf32>
    %119 = vector.multi_reduction <add>, %118, %cst_44 [1] : vector<8x256xf32> to vector<8xf32>
    %120 = vector.shape_cast %119 : vector<8xf32> to vector<8x1xf32>
    %cst_45 = arith.constant 2.560000e+02 : f32
    %121 = vector.broadcast %cst_45 : f32 to vector<8x1xf32>
    %122 = arith.divf %120, %121 : vector<8x1xf32>
    %123 = vector.broadcast %122 : vector<8x1xf32> to vector<8x256xf32>
    %124 = arith.subf %118, %123 : vector<8x256xf32>
    %125 = vector.broadcast %122 : vector<8x1xf32> to vector<8x256xf32>
    %126 = arith.subf %118, %125 : vector<8x256xf32>
    %127 = arith.mulf %124, %126 : vector<8x256xf32>
    %cst_46 = arith.constant dense<0.000000e+00> : vector<8xf32>
    %128 = vector.multi_reduction <add>, %127, %cst_46 [1] : vector<8x256xf32> to vector<8xf32>
    %129 = vector.shape_cast %128 : vector<8xf32> to vector<8x1xf32>
    %cst_47 = arith.constant 2.560000e+02 : f32
    %130 = vector.broadcast %cst_47 : f32 to vector<8x1xf32>
    %131 = arith.divf %129, %130 : vector<8x1xf32>
    %132 = vector.broadcast %122 : vector<8x1xf32> to vector<8x256xf32>
    %133 = arith.subf %118, %132 : vector<8x256xf32>
    %cst_48 = arith.constant 9.99999974E-6 : f32
    %134 = vector.broadcast %cst_48 : f32 to vector<8x1xf32>
    %135 = arith.addf %131, %134 : vector<8x1xf32>
    %136 = math.rsqrt %135 : vector<8x1xf32>
    %137 = vector.broadcast %136 : vector<8x1xf32> to vector<8x256xf32>
    %138 = arith.mulf %133, %137 : vector<8x256xf32>
    %c5 = arith.constant 5 : index
    %c0_49 = arith.constant 0 : index
    %139 = vector.load %arg4[%c5, %c0_49] : memref<28x1024xf32, #tpu.memory_space<vmem>>, vector<1x256xf32>
    %140 = vector.broadcast %139 : vector<1x256xf32> to vector<8x256xf32>
    %141 = arith.mulf %138, %140 : vector<8x256xf32>
    %c6 = arith.constant 6 : index
    %c0_50 = arith.constant 0 : index
    %142 = vector.load %arg4[%c6, %c0_50] : memref<28x1024xf32, #tpu.memory_space<vmem>>, vector<1x256xf32>
    %143 = vector.broadcast %142 : vector<1x256xf32> to vector<8x256xf32>
    %144 = arith.addf %141, %143 : vector<8x256xf32>
    %145 = vector.extract_strided_slice %53 {offsets = [0, 256], sizes = [8, 256], strides = [1, 1]} : vector<8x1024xf32> to vector<8x256xf32>
    %146 = arith.addf %144, %145 : vector<8x256xf32>
    %c0_51 = arith.constant 0 : index
    %c0_52 = arith.constant 0 : index
    %c0_53 = arith.constant 0 : index
    %147 = vector.load %arg7[%c0_51, %c0_52, %c0_53] : memref<3x256x256xbf16, #tpu.memory_space<vmem>>, vector<1x256x256xbf16>
    %148 = vector.shape_cast %147 : vector<1x256x256xbf16> to vector<256x256xbf16>
    %149 = arith.truncf %146 : vector<8x256xf32> to vector<8x256xbf16>
    %cst_54 = arith.constant dense<0.000000e+00> : vector<8x256xf32>
    %150 = tpu.matmul %149, %148, %cst_54 {dimension_numbers = #tpu.dot_dimension_numbers<[1], [0], [0], [1], [0, 0, 1, 1], [], []>} : vector<8x256xbf16>, vector<256x256xbf16>, vector<8x256xf32> -> vector<8x256xf32>
    %c7 = arith.constant 7 : index
    %c0_55 = arith.constant 0 : index
    %151 = vector.load %arg4[%c7, %c0_55] : memref<28x1024xf32, #tpu.memory_space<vmem>>, vector<1x256xf32>
    %152 = vector.broadcast %151 : vector<1x256xf32> to vector<8x256xf32>
    %153 = arith.addf %150, %152 : vector<8x256xf32>
    %154 = arith.negf %153 : vector<8x256xf32>
    %155 = math.exp %154 : vector<8x256xf32>
    %cst_56 = arith.constant 1.000000e+00 : f32
    %156 = vector.broadcast %cst_56 : f32 to vector<8x256xf32>
    %157 = arith.addf %156, %155 : vector<8x256xf32>
    %158 = arith.divf %156, %157 : vector<8x256xf32>
    %159 = arith.mulf %153, %158 : vector<8x256xf32>
    %cst_57 = arith.constant dense<0.000000e+00> : vector<8xf32>
    %160 = vector.multi_reduction <add>, %159, %cst_57 [1] : vector<8x256xf32> to vector<8xf32>
    %161 = vector.shape_cast %160 : vector<8xf32> to vector<8x1xf32>
    %cst_58 = arith.constant 2.560000e+02 : f32
    %162 = vector.broadcast %cst_58 : f32 to vector<8x1xf32>
    %163 = arith.divf %161, %162 : vector<8x1xf32>
    %164 = vector.broadcast %163 : vector<8x1xf32> to vector<8x256xf32>
    %165 = arith.subf %159, %164 : vector<8x256xf32>
    %166 = vector.broadcast %163 : vector<8x1xf32> to vector<8x256xf32>
    %167 = arith.subf %159, %166 : vector<8x256xf32>
    %168 = arith.mulf %165, %167 : vector<8x256xf32>
    %cst_59 = arith.constant dense<0.000000e+00> : vector<8xf32>
    %169 = vector.multi_reduction <add>, %168, %cst_59 [1] : vector<8x256xf32> to vector<8xf32>
    %170 = vector.shape_cast %169 : vector<8xf32> to vector<8x1xf32>
    %cst_60 = arith.constant 2.560000e+02 : f32
    %171 = vector.broadcast %cst_60 : f32 to vector<8x1xf32>
    %172 = arith.divf %170, %171 : vector<8x1xf32>
    %173 = vector.broadcast %163 : vector<8x1xf32> to vector<8x256xf32>
    %174 = arith.subf %159, %173 : vector<8x256xf32>
    %cst_61 = arith.constant 9.99999974E-6 : f32
    %175 = vector.broadcast %cst_61 : f32 to vector<8x1xf32>
    %176 = arith.addf %172, %175 : vector<8x1xf32>
    %177 = math.rsqrt %176 : vector<8x1xf32>
    %178 = vector.broadcast %177 : vector<8x1xf32> to vector<8x256xf32>
    %179 = arith.mulf %174, %178 : vector<8x256xf32>
    %c8 = arith.constant 8 : index
    %c0_62 = arith.constant 0 : index
    %180 = vector.load %arg4[%c8, %c0_62] : memref<28x1024xf32, #tpu.memory_space<vmem>>, vector<1x256xf32>
    %181 = vector.broadcast %180 : vector<1x256xf32> to vector<8x256xf32>
    %182 = arith.mulf %179, %181 : vector<8x256xf32>
    %c9 = arith.constant 9 : index
    %c0_63 = arith.constant 0 : index
    %183 = vector.load %arg4[%c9, %c0_63] : memref<28x1024xf32, #tpu.memory_space<vmem>>, vector<1x256xf32>
    %184 = vector.broadcast %183 : vector<1x256xf32> to vector<8x256xf32>
    %185 = arith.addf %182, %184 : vector<8x256xf32>
    %186 = vector.extract_strided_slice %53 {offsets = [0, 512], sizes = [8, 256], strides = [1, 1]} : vector<8x1024xf32> to vector<8x256xf32>
    %187 = arith.addf %185, %186 : vector<8x256xf32>
    %c1_64 = arith.constant 1 : index
    %c0_65 = arith.constant 0 : index
    %c0_66 = arith.constant 0 : index
    %188 = vector.load %arg7[%c1_64, %c0_65, %c0_66] : memref<3x256x256xbf16, #tpu.memory_space<vmem>>, vector<1x256x256xbf16>
    %189 = vector.shape_cast %188 : vector<1x256x256xbf16> to vector<256x256xbf16>
    %190 = arith.truncf %187 : vector<8x256xf32> to vector<8x256xbf16>
    %cst_67 = arith.constant dense<0.000000e+00> : vector<8x256xf32>
    %191 = tpu.matmul %190, %189, %cst_67 {dimension_numbers = #tpu.dot_dimension_numbers<[1], [0], [0], [1], [0, 0, 1, 1], [], []>} : vector<8x256xbf16>, vector<256x256xbf16>, vector<8x256xf32> -> vector<8x256xf32>
    %c2_68 = arith.constant 2 : index
    %c0_69 = arith.constant 0 : index
    %c0_70 = arith.constant 0 : index
    %192 = vector.load %arg7[%c2_68, %c0_69, %c0_70] : memref<3x256x256xbf16, #tpu.memory_space<vmem>>, vector<1x256x256xbf16>
    %193 = vector.shape_cast %192 : vector<1x256x256xbf16> to vector<256x256xbf16>
    %194 = arith.truncf %144 : vector<8x256xf32> to vector<8x256xbf16>
    %cst_71 = arith.constant dense<0.000000e+00> : vector<8x256xf32>
    %195 = tpu.matmul %194, %193, %cst_71 {dimension_numbers = #tpu.dot_dimension_numbers<[1], [0], [0], [1], [0, 0, 1, 1], [], []>} : vector<8x256xbf16>, vector<256x256xbf16>, vector<8x256xf32> -> vector<8x256xf32>
    %196 = arith.addf %191, %195 : vector<8x256xf32>
    %c10 = arith.constant 10 : index
    %c0_72 = arith.constant 0 : index
    %197 = vector.load %arg4[%c10, %c0_72] : memref<28x1024xf32, #tpu.memory_space<vmem>>, vector<1x256xf32>
    %198 = vector.broadcast %197 : vector<1x256xf32> to vector<8x256xf32>
    %199 = arith.addf %196, %198 : vector<8x256xf32>
    %200 = arith.negf %199 : vector<8x256xf32>
    %201 = math.exp %200 : vector<8x256xf32>
    %cst_73 = arith.constant 1.000000e+00 : f32
    %202 = vector.broadcast %cst_73 : f32 to vector<8x256xf32>
    %203 = arith.addf %202, %201 : vector<8x256xf32>
    %204 = arith.divf %202, %203 : vector<8x256xf32>
    %205 = arith.mulf %199, %204 : vector<8x256xf32>
    %cst_74 = arith.constant dense<0.000000e+00> : vector<8xf32>
    %206 = vector.multi_reduction <add>, %205, %cst_74 [1] : vector<8x256xf32> to vector<8xf32>
    %207 = vector.shape_cast %206 : vector<8xf32> to vector<8x1xf32>
    %cst_75 = arith.constant 2.560000e+02 : f32
    %208 = vector.broadcast %cst_75 : f32 to vector<8x1xf32>
    %209 = arith.divf %207, %208 : vector<8x1xf32>
    %210 = vector.broadcast %209 : vector<8x1xf32> to vector<8x256xf32>
    %211 = arith.subf %205, %210 : vector<8x256xf32>
    %212 = vector.broadcast %209 : vector<8x1xf32> to vector<8x256xf32>
    %213 = arith.subf %205, %212 : vector<8x256xf32>
    %214 = arith.mulf %211, %213 : vector<8x256xf32>
    %cst_76 = arith.constant dense<0.000000e+00> : vector<8xf32>
    %215 = vector.multi_reduction <add>, %214, %cst_76 [1] : vector<8x256xf32> to vector<8xf32>
    %216 = vector.shape_cast %215 : vector<8xf32> to vector<8x1xf32>
    %cst_77 = arith.constant 2.560000e+02 : f32
    %217 = vector.broadcast %cst_77 : f32 to vector<8x1xf32>
    %218 = arith.divf %216, %217 : vector<8x1xf32>
    %219 = vector.broadcast %209 : vector<8x1xf32> to vector<8x256xf32>
    %220 = arith.subf %205, %219 : vector<8x256xf32>
    %cst_78 = arith.constant 9.99999974E-6 : f32
    %221 = vector.broadcast %cst_78 : f32 to vector<8x1xf32>
    %222 = arith.addf %218, %221 : vector<8x1xf32>
    %223 = math.rsqrt %222 : vector<8x1xf32>
    %224 = vector.broadcast %223 : vector<8x1xf32> to vector<8x256xf32>
    %225 = arith.mulf %220, %224 : vector<8x256xf32>
    %c11 = arith.constant 11 : index
    %c0_79 = arith.constant 0 : index
    %226 = vector.load %arg4[%c11, %c0_79] : memref<28x1024xf32, #tpu.memory_space<vmem>>, vector<1x256xf32>
    %227 = vector.broadcast %226 : vector<1x256xf32> to vector<8x256xf32>
    %228 = arith.mulf %225, %227 : vector<8x256xf32>
    %c12 = arith.constant 12 : index
    %c0_80 = arith.constant 0 : index
    %229 = vector.load %arg4[%c12, %c0_80] : memref<28x1024xf32, #tpu.memory_space<vmem>>, vector<1x256xf32>
    %230 = vector.broadcast %229 : vector<1x256xf32> to vector<8x256xf32>
    %231 = arith.addf %228, %230 : vector<8x256xf32>
    %c0_81 = arith.constant 0 : index
    %c0_82 = arith.constant 0 : index
    %232 = vector.load %arg9[%c0_81, %c0_82] : memref<256x128xbf16, #tpu.memory_space<vmem>>, vector<256x128xbf16>
    %233 = arith.truncf %231 : vector<8x256xf32> to vector<8x256xbf16>
    %cst_83 = arith.constant dense<0.000000e+00> : vector<8x128xf32>
    %234 = tpu.matmul %233, %232, %cst_83 {dimension_numbers = #tpu.dot_dimension_numbers<[1], [0], [0], [1], [0, 0, 1, 1], [], []>} : vector<8x256xbf16>, vector<256x128xbf16>, vector<8x128xf32> -> vector<8x128xf32>
    %c13 = arith.constant 13 : index
    %c0_84 = arith.constant 0 : index
    %235 = vector.load %arg4[%c13, %c0_84] : memref<28x1024xf32, #tpu.memory_space<vmem>>, vector<1x128xf32>
    %236 = vector.broadcast %235 : vector<1x128xf32> to vector<8x128xf32>
    %237 = arith.addf %234, %236 : vector<8x128xf32>
    %238 = vector.extract_strided_slice %53 {offsets = [0, 768], sizes = [8, 128], strides = [1, 1]} : vector<8x1024xf32> to vector<8x128xf32>
    %239 = arith.addf %237, %238 : vector<8x128xf32>
    %c2_85 = arith.constant 2 : index
    %c0_86 = arith.constant 0 : index
    %c0_87 = arith.constant 0 : index
    %240 = vector.load %arg5[%c2_85, %c0_86, %c0_87] : memref<4x128x128xbf16, #tpu.memory_space<vmem>>, vector<1x128x128xbf16>
    %241 = vector.shape_cast %240 : vector<1x128x128xbf16> to vector<128x128xbf16>
    %242 = arith.truncf %239 : vector<8x128xf32> to vector<8x128xbf16>
    %cst_88 = arith.constant dense<0.000000e+00> : vector<8x128xf32>
    %243 = tpu.matmul %242, %241, %cst_88 {dimension_numbers = #tpu.dot_dimension_numbers<[1], [0], [0], [1], [0, 0, 1, 1], [], []>} : vector<8x128xbf16>, vector<128x128xbf16>, vector<8x128xf32> -> vector<8x128xf32>
    %c3_89 = arith.constant 3 : index
    %c0_90 = arith.constant 0 : index
    %c0_91 = arith.constant 0 : index
    %244 = vector.load %arg5[%c3_89, %c0_90, %c0_91] : memref<4x128x128xbf16, #tpu.memory_space<vmem>>, vector<1x128x128xbf16>
    %245 = vector.shape_cast %244 : vector<1x128x128xbf16> to vector<128x128xbf16>
    %246 = arith.truncf %104 : vector<8x128xf32> to vector<8x128xbf16>
    %cst_92 = arith.constant dense<0.000000e+00> : vector<8x128xf32>
    %247 = tpu.matmul %246, %245, %cst_92 {dimension_numbers = #tpu.dot_dimension_numbers<[1], [0], [0], [1], [0, 0, 1, 1], [], []>} : vector<8x128xbf16>, vector<128x128xbf16>, vector<8x128xf32> -> vector<8x128xf32>
    %248 = arith.addf %243, %247 : vector<8x128xf32>
    %c14 = arith.constant 14 : index
    %c0_93 = arith.constant 0 : index
    %249 = vector.load %arg4[%c14, %c0_93] : memref<28x1024xf32, #tpu.memory_space<vmem>>, vector<1x128xf32>
    %250 = vector.broadcast %249 : vector<1x128xf32> to vector<8x128xf32>
    %251 = arith.addf %248, %250 : vector<8x128xf32>
    %252 = arith.negf %251 : vector<8x128xf32>
    %253 = math.exp %252 : vector<8x128xf32>
    %cst_94 = arith.constant 1.000000e+00 : f32
    %254 = vector.broadcast %cst_94 : f32 to vector<8x128xf32>
    %255 = arith.addf %254, %253 : vector<8x128xf32>
    %256 = arith.divf %254, %255 : vector<8x128xf32>
    %257 = arith.mulf %251, %256 : vector<8x128xf32>
    %cst_95 = arith.constant dense<0.000000e+00> : vector<8xf32>
    %258 = vector.multi_reduction <add>, %257, %cst_95 [1] : vector<8x128xf32> to vector<8xf32>
    %259 = vector.shape_cast %258 : vector<8xf32> to vector<8x1xf32>
    %cst_96 = arith.constant 1.280000e+02 : f32
    %260 = vector.broadcast %cst_96 : f32 to vector<8x1xf32>
    %261 = arith.divf %259, %260 : vector<8x1xf32>
    %262 = vector.broadcast %261 : vector<8x1xf32> to vector<8x128xf32>
    %263 = arith.subf %257, %262 : vector<8x128xf32>
    %264 = vector.broadcast %261 : vector<8x1xf32> to vector<8x128xf32>
    %265 = arith.subf %257, %264 : vector<8x128xf32>
    %266 = arith.mulf %263, %265 : vector<8x128xf32>
    %cst_97 = arith.constant dense<0.000000e+00> : vector<8xf32>
    %267 = vector.multi_reduction <add>, %266, %cst_97 [1] : vector<8x128xf32> to vector<8xf32>
    %268 = vector.shape_cast %267 : vector<8xf32> to vector<8x1xf32>
    %cst_98 = arith.constant 1.280000e+02 : f32
    %269 = vector.broadcast %cst_98 : f32 to vector<8x1xf32>
    %270 = arith.divf %268, %269 : vector<8x1xf32>
    %271 = vector.broadcast %261 : vector<8x1xf32> to vector<8x128xf32>
    %272 = arith.subf %257, %271 : vector<8x128xf32>
    %cst_99 = arith.constant 9.99999974E-6 : f32
    %273 = vector.broadcast %cst_99 : f32 to vector<8x1xf32>
    %274 = arith.addf %270, %273 : vector<8x1xf32>
    %275 = math.rsqrt %274 : vector<8x1xf32>
    %276 = vector.broadcast %275 : vector<8x1xf32> to vector<8x128xf32>
    %277 = arith.mulf %272, %276 : vector<8x128xf32>
    %c15 = arith.constant 15 : index
    %c0_100 = arith.constant 0 : index
    %278 = vector.load %arg4[%c15, %c0_100] : memref<28x1024xf32, #tpu.memory_space<vmem>>, vector<1x128xf32>
    %279 = vector.broadcast %278 : vector<1x128xf32> to vector<8x128xf32>
    %280 = arith.mulf %277, %279 : vector<8x128xf32>
    %c16 = arith.constant 16 : index
    %c0_101 = arith.constant 0 : index
    %281 = vector.load %arg4[%c16, %c0_101] : memref<28x1024xf32, #tpu.memory_space<vmem>>, vector<1x128xf32>
    %282 = vector.broadcast %281 : vector<1x128xf32> to vector<8x128xf32>
    %283 = arith.addf %280, %282 : vector<8x128xf32>
    %284 = vector.extract_strided_slice %53 {offsets = [0, 896], sizes = [8, 128], strides = [1, 1]} : vector<8x1024xf32> to vector<8x128xf32>
    %285 = arith.addf %283, %284 : vector<8x128xf32>
    %c0_102 = arith.constant 0 : index
    %c0_103 = arith.constant 0 : index
    %c0_104 = arith.constant 0 : index
    %286 = vector.load %arg10[%c0_102, %c0_103, %c0_104] : memref<2x128x64xbf16, #tpu.memory_space<vmem>>, vector<1x128x64xbf16>
    %287 = vector.shape_cast %286 : vector<1x128x64xbf16> to vector<128x64xbf16>
    %288 = arith.truncf %285 : vector<8x128xf32> to vector<8x128xbf16>
    %cst_105 = arith.constant dense<0.000000e+00> : vector<8x64xf32>
    %289 = tpu.matmul %288, %287, %cst_105 {dimension_numbers = #tpu.dot_dimension_numbers<[1], [0], [0], [1], [0, 0, 1, 1], [], []>} : vector<8x128xbf16>, vector<128x64xbf16>, vector<8x64xf32> -> vector<8x64xf32>
    %c1_106 = arith.constant 1 : index
    %c0_107 = arith.constant 0 : index
    %c0_108 = arith.constant 0 : index
    %290 = vector.load %arg10[%c1_106, %c0_107, %c0_108] : memref<2x128x64xbf16, #tpu.memory_space<vmem>>, vector<1x128x64xbf16>
    %291 = vector.shape_cast %290 : vector<1x128x64xbf16> to vector<128x64xbf16>
    %292 = arith.truncf %104 : vector<8x128xf32> to vector<8x128xbf16>
    %cst_109 = arith.constant dense<0.000000e+00> : vector<8x64xf32>
    %293 = tpu.matmul %292, %291, %cst_109 {dimension_numbers = #tpu.dot_dimension_numbers<[1], [0], [0], [1], [0, 0, 1, 1], [], []>} : vector<8x128xbf16>, vector<128x64xbf16>, vector<8x64xf32> -> vector<8x64xf32>
    %294 = arith.addf %289, %293 : vector<8x64xf32>
    %c17 = arith.constant 17 : index
    %c0_110 = arith.constant 0 : index
    %295 = vector.load %arg4[%c17, %c0_110] : memref<28x1024xf32, #tpu.memory_space<vmem>>, vector<1x64xf32>
    %296 = vector.broadcast %295 : vector<1x64xf32> to vector<8x64xf32>
    %297 = arith.addf %294, %296 : vector<8x64xf32>
    %298 = arith.negf %297 : vector<8x64xf32>
    %299 = math.exp %298 : vector<8x64xf32>
    %cst_111 = arith.constant 1.000000e+00 : f32
    %300 = vector.broadcast %cst_111 : f32 to vector<8x64xf32>
    %301 = arith.addf %300, %299 : vector<8x64xf32>
    %302 = arith.divf %300, %301 : vector<8x64xf32>
    %303 = arith.mulf %297, %302 : vector<8x64xf32>
    %cst_112 = arith.constant dense<0.000000e+00> : vector<8xf32>
    %304 = vector.multi_reduction <add>, %303, %cst_112 [1] : vector<8x64xf32> to vector<8xf32>
    %305 = vector.shape_cast %304 : vector<8xf32> to vector<8x1xf32>
    %cst_113 = arith.constant 6.400000e+01 : f32
    %306 = vector.broadcast %cst_113 : f32 to vector<8x1xf32>
    %307 = arith.divf %305, %306 : vector<8x1xf32>
    %308 = vector.broadcast %307 : vector<8x1xf32> to vector<8x64xf32>
    %309 = arith.subf %303, %308 : vector<8x64xf32>
    %310 = vector.broadcast %307 : vector<8x1xf32> to vector<8x64xf32>
    %311 = arith.subf %303, %310 : vector<8x64xf32>
    %312 = arith.mulf %309, %311 : vector<8x64xf32>
    %cst_114 = arith.constant dense<0.000000e+00> : vector<8xf32>
    %313 = vector.multi_reduction <add>, %312, %cst_114 [1] : vector<8x64xf32> to vector<8xf32>
    %314 = vector.shape_cast %313 : vector<8xf32> to vector<8x1xf32>
    %cst_115 = arith.constant 6.400000e+01 : f32
    %315 = vector.broadcast %cst_115 : f32 to vector<8x1xf32>
    %316 = arith.divf %314, %315 : vector<8x1xf32>
    %317 = vector.broadcast %307 : vector<8x1xf32> to vector<8x64xf32>
    %318 = arith.subf %303, %317 : vector<8x64xf32>
    %cst_116 = arith.constant 9.99999974E-6 : f32
    %319 = vector.broadcast %cst_116 : f32 to vector<8x1xf32>
    %320 = arith.addf %316, %319 : vector<8x1xf32>
    %321 = math.rsqrt %320 : vector<8x1xf32>
    %322 = vector.broadcast %321 : vector<8x1xf32> to vector<8x64xf32>
    %323 = arith.mulf %318, %322 : vector<8x64xf32>
    %c18 = arith.constant 18 : index
    %c0_117 = arith.constant 0 : index
    %324 = vector.load %arg4[%c18, %c0_117] : memref<28x1024xf32, #tpu.memory_space<vmem>>, vector<1x64xf32>
    %325 = vector.broadcast %324 : vector<1x64xf32> to vector<8x64xf32>
    %326 = arith.mulf %323, %325 : vector<8x64xf32>
    %c19 = arith.constant 19 : index
    %c0_118 = arith.constant 0 : index
    %327 = vector.load %arg4[%c19, %c0_118] : memref<28x1024xf32, #tpu.memory_space<vmem>>, vector<1x64xf32>
    %328 = vector.broadcast %327 : vector<1x64xf32> to vector<8x64xf32>
    %329 = arith.addf %326, %328 : vector<8x64xf32>
    %c0_119 = arith.constant 0 : index
    %c0_120 = arith.constant 0 : index
    %330 = vector.load %arg11[%c0_119, %c0_120] : memref<64x3xbf16, #tpu.memory_space<vmem>>, vector<64x3xbf16>
    %331 = arith.truncf %329 : vector<8x64xf32> to vector<8x64xbf16>
    %cst_121 = arith.constant dense<0.000000e+00> : vector<8x3xf32>
    %332 = tpu.matmul %331, %330, %cst_121 {dimension_numbers = #tpu.dot_dimension_numbers<[1], [0], [0], [1], [0, 0, 1, 1], [], []>} : vector<8x64xbf16>, vector<64x3xbf16>, vector<8x3xf32> -> vector<8x3xf32>
    %c20 = arith.constant 20 : index
    %c0_122 = arith.constant 0 : index
    %333 = vector.load %arg4[%c20, %c0_122] : memref<28x1024xf32, #tpu.memory_space<vmem>>, vector<1x3xf32>
    %334 = vector.broadcast %333 : vector<1x3xf32> to vector<8x3xf32>
    %335 = arith.addf %332, %334 : vector<8x3xf32>
    %c0_123 = arith.constant 0 : index
    %c0_124 = arith.constant 0 : index
    %336 = vector.load %arg12[%c0_123, %c0_124] : memref<8x3xf32, #tpu.memory_space<vmem>>, vector<8x3xf32>
    tpu.vector_store %arg12[%c0_123, %c0_124], %335 {strides = array<i32>} : memref<8x3xf32, #tpu.memory_space<vmem>>, vector<8x3xf32>,
    return
  }
  func.func @transform_0(%arg0: i32) -> (i32, i32) {
    %c0_i32 = arith.constant 0 : i32
    %c0_i32_0 = arith.constant 0 : i32
    return %arg0, %c0_i32 : i32, i32
  }
  func.func @transform_1(%arg0: i32) -> (i32, i32) {
    %c0_i32 = arith.constant 0 : i32
    %c0_i32_0 = arith.constant 0 : i32
    return %arg0, %c0_i32 : i32, i32
  }
  func.func @transform_2(%arg0: i32) -> (i32, i32) {
    %c0_i32 = arith.constant 0 : i32
    %c0_i32_0 = arith.constant 0 : i32
    return %arg0, %c0_i32 : i32, i32
  }
  func.func @transform_3(%arg0: i32) -> (i32, i32) {
    %c0_i32 = arith.constant 0 : i32
    %c0_i32_0 = arith.constant 0 : i32
    %c0_i32_1 = arith.constant 0 : i32
    return %c0_i32, %c0_i32_0 : i32, i32
  }
  func.func @transform_4(%arg0: i32) -> (i32, i32, i32) {
    %c0_i32 = arith.constant 0 : i32
    %c0_i32_0 = arith.constant 0 : i32
    %c0_i32_1 = arith.constant 0 : i32
    %c0_i32_2 = arith.constant 0 : i32
    return %c0_i32, %c0_i32_0, %c0_i32_1 : i32, i32, i32
  }
  func.func @transform_5(%arg0: i32) -> (i32, i32, i32) {
    %c0_i32 = arith.constant 0 : i32
    %c0_i32_0 = arith.constant 0 : i32
    %c0_i32_1 = arith.constant 0 : i32
    %c0_i32_2 = arith.constant 0 : i32
    return %c0_i32, %c0_i32_0, %c0_i32_1 : i32, i32, i32
  }
  func.func @transform_6(%arg0: i32) -> (i32, i32, i32) {
    %c0_i32 = arith.constant 0 : i32
    %c0_i32_0 = arith.constant 0 : i32
    %c0_i32_1 = arith.constant 0 : i32
    %c0_i32_2 = arith.constant 0 : i32
    return %c0_i32, %c0_i32_0, %c0_i32_1 : i32, i32, i32
  }
  func.func @transform_7(%arg0: i32) -> (i32, i32) {
    %c0_i32 = arith.constant 0 : i32
    %c0_i32_0 = arith.constant 0 : i32
    %c0_i32_1 = arith.constant 0 : i32
    return %c0_i32, %c0_i32_0 : i32, i32
  }
  func.func @transform_8(%arg0: i32) -> (i32, i32) {
    %c0_i32 = arith.constant 0 : i32
    %c0_i32_0 = arith.constant 0 : i32
    %c0_i32_1 = arith.constant 0 : i32
    return %c0_i32, %c0_i32_0 : i32, i32
  }
  func.func @transform_9(%arg0: i32) -> (i32, i32, i32) {
    %c0_i32 = arith.constant 0 : i32
    %c0_i32_0 = arith.constant 0 : i32
    %c0_i32_1 = arith.constant 0 : i32
    %c0_i32_2 = arith.constant 0 : i32
    return %c0_i32, %c0_i32_0, %c0_i32_1 : i32, i32, i32
  }
  func.func @transform_10(%arg0: i32) -> (i32, i32) {
    %c0_i32 = arith.constant 0 : i32
    %c0_i32_0 = arith.constant 0 : i32
    %c0_i32_1 = arith.constant 0 : i32
    return %c0_i32, %c0_i32_0 : i32, i32
  }
  func.func @transform_11(%arg0: i32) -> (i32, i32) {
    %c0_i32 = arith.constant 0 : i32
    %c0_i32_0 = arith.constant 0 : i32
    return %arg0, %c0_i32 : i32, i32
  }
}

</mosaic_0001>

<llo_original>
// kernel: conditional_unet1d.1
$region0: #{conditional_unet1d.1}
  #allocation0 [shape = 'u32[]', space=smem, size = 0x4, offset = 0x4, fixed_abs, tag = 'smem constant byte address 0x4 - core index']
  #allocation1 [shape = 'u32[144,128]{1,0:T(1,128)}', space=vmem, size = 0x12000, scoped, tag = 'internal scratch']
  %s0 = inlined_call_operand.vmem [shape: f32[8,3], index: 0, kind: input, shape index: {}]
  %s1 = inlined_call_operand.vmem [shape: f32[8,128], index: 1, kind: input, shape index: {}]
  %s2 = inlined_call_operand.vmem [shape: s32[8,1], index: 2, kind: input, shape index: {}]
  %s3 = inlined_call_operand.vmem [shape: f32[28,1024], index: 3, kind: input, shape index: {}]
  %s4 = inlined_call_operand.hbm [shape: bf16[4,128,128], index: 4, kind: input, shape index: {}]
  %s5 = inlined_call_operand.hbm [shape: bf16[2,128,1024], index: 5, kind: input, shape index: {}]
  %s6 = inlined_call_operand.hbm [shape: bf16[3,256,256], index: 6, kind: input, shape index: {}]
  %s7 = inlined_call_operand.hbm [shape: bf16[128,256], index: 7, kind: input, shape index: {}]
  %s8 = inlined_call_operand.hbm [shape: bf16[256,128], index: 8, kind: input, shape index: {}]
  %s9 = inlined_call_operand.vmem [shape: bf16[2,128,64], index: 9, kind: input, shape index: {}]
  %s10 = inlined_call_operand.vmem [shape: bf16[64,3], index: 10, kind: input, shape index: {}]
  %s11 = inlined_call_operand.vmem [shape: f32[8,3], index: 11, kind: output, shape index: {}]
  %s12 = sld [smem:[#allocation0]]
  $region74: #{conditional_unet1d.1} parent=0
    _
  %s14 = ssub.s32 1, %s12
  %s15 = scalar_select 0, %s14, %s12
  $region1: #{conditional_unet1d.1} parent=0
    #allocation2 [shape = 'u8[131072]{0}', space=vmem, size = 0x20000, scoped, tag = 'input window, operand 4, single buffered']
    #allocation3 [shape = 's32[1]{0}', space=sflag, size = 0x4, scoped, tag = 'scoped memory for conditional_unet1d.1']
    #allocation4 [shape = 'u8[524288]{0}', space=vmem, size = 0x80000, scoped, tag = 'input window, operand 5, single buffered']
    #allocation5 [shape = 's32[1]{0}', space=sflag, size = 0x4, scoped, tag = 'scoped memory for conditional_unet1d.1']
    #allocation6 [shape = 'u8[393216]{0}', space=vmem, size = 0x60000, scoped, tag = 'input window, operand 6, single buffered']
    #allocation7 [shape = 'u8[65536]{0}', space=vmem, size = 0x10000, scoped, tag = 'input window, operand 7, single buffered']
    #allocation8 [shape = 's32[1]{0}', space=sflag, size = 0x4, scoped, tag = 'scoped memory for conditional_unet1d.1']
    #allocation9 [shape = 'u8[65536]{0}', space=vmem, size = 0x10000, scoped, tag = 'input window, operand 8, single buffered']
    %16 = vsyncpa [#allocation3], 0
    %17 = vsyncpa [#allocation5], 0
    %18 = vsyncpa [#allocation8], 0
    // Predicated region
    $region2: #{conditional_unet1d.1} parent=1 // pred_check
      _
    $region3: #{conditional_unet1d.1} parent=1 // pred_check_branch
      %20 = sbr.rel (0) target = $region5
    $region4: #{conditional_unet1d.1} parent=1 // pred_region
      _
    $region5: #{conditional_unet1d.1} parent=1 // pred_fallthru
      _
    // Predicated region
    $region6: #{conditional_unet1d.1} parent=1 // pred_check
      _
    $region7: #{conditional_unet1d.1} parent=1 // pred_check_branch
      %22 = sbr.rel (0) target = $region9
    $region8: #{conditional_unet1d.1} parent=1 // pred_region
      _
    $region9: #{conditional_unet1d.1} parent=1 // pred_fallthru
      _
    // Predicated region
    $region10: #{conditional_unet1d.1} parent=1 // pred_check
      _
    $region11: #{conditional_unet1d.1} parent=1 // pred_check_branch
      %24 = sbr.rel (0) target = $region13
    $region12: #{conditional_unet1d.1} parent=1 // pred_region
      _
    $region13: #{conditional_unet1d.1} parent=1 // pred_fallthru
      _
    // Predicated region
    $region14: #{conditional_unet1d.1} parent=1 // pred_check
      _
    $region15: #{conditional_unet1d.1} parent=1 // pred_check_branch
      %26 = sbr.rel (0) target = $region17
    $region16: #{conditional_unet1d.1} parent=1 // pred_region
      _
    $region17: #{conditional_unet1d.1} parent=1 // pred_fallthru
      _
    // Predicated region
    $region18: #{conditional_unet1d.1} parent=1 // pred_check
      _
    $region19: #{conditional_unet1d.1} parent=1 // pred_check_branch
      %28 = sbr.rel (0) target = $region21
    $region20: #{conditional_unet1d.1} parent=1 // pred_region
      %s30 = ssub.s32 4096, 4096
      %31 = vsyncadd [#allocation3], %s30
      %s32 = sshll.u32 [#allocation2], 4
      %s33 = int_to_ptr.vmem [resolvable:$true] %s32
      %38 = dma.hbm_to_vmem [thread:$0]  %s4, 4096, %s33, [#allocation3], 64, 64, 4
    $region21: #{conditional_unet1d.1} parent=1 // pred_fallthru
      _
    // Predicated region
    $region22: #{conditional_unet1d.1} parent=1 // pred_check
      _
    $region23: #{conditional_unet1d.1} parent=1 // pred_check_branch
      %40 = sbr.rel (0) target = $region25
    $region24: #{conditional_unet1d.1} parent=1 // pred_region
      %s42 = ssub.s32 16384, 16384
      %43 = vsyncadd [#allocation5], %s42
      %s44 = sshll.u32 [#allocation4], 4
      %s45 = int_to_ptr.vmem [resolvable:$true] %s44
      %50 = dma.hbm_to_vmem [thread:$0]  %s5, 16384, %s45, [#allocation5], 512, 512, 32
    $region25: #{conditional_unet1d.1} parent=1 // pred_fallthru
      _
    // Predicated region
    $region26: #{conditional_unet1d.1} parent=1 // pred_check
      _
    $region27: #{conditional_unet1d.1} parent=1 // pred_check_branch
      %52 = sbr.rel (0) target = $region29
    $region28: #{conditional_unet1d.1} parent=1 // pred_region
      %s54 = ssub.s32 12288, 12288
      %55 = vsyncadd [#allocation5], %s54
      %s56 = sshll.u32 [#allocation6], 4
      %s57 = int_to_ptr.vmem [resolvable:$true] %s56
      %62 = dma.hbm_to_vmem [thread:$0]  %s6, 12288, %s57, [#allocation5], 128, 128, 8
    $region29: #{conditional_unet1d.1} parent=1 // pred_fallthru
      _
    // Predicated region
    $region30: #{conditional_unet1d.1} parent=1 // pred_check
      _
    $region31: #{conditional_unet1d.1} parent=1 // pred_check_branch
      %64 = sbr.rel (0) target = $region33
    $region32: #{conditional_unet1d.1} parent=1 // pred_region
      %s66 = ssub.s32 2048, 2048
      %67 = vsyncadd [#allocation8], %s66
      %s68 = sshll.u32 [#allocation7], 4
      %s69 = int_to_ptr.vmem [resolvable:$true] %s68
      %74 = dma.hbm_to_vmem [thread:$0]  %s7, 2048, %s69, [#allocation8], 128, 128, 8
    $region33: #{conditional_unet1d.1} parent=1 // pred_fallthru
      _
    // Predicated region
    $region34: #{conditional_unet1d.1} parent=1 // pred_check
      _
    $region35: #{conditional_unet1d.1} parent=1 // pred_check_branch
      %76 = sbr.rel (0) target = $region37
    $region36: #{conditional_unet1d.1} parent=1 // pred_region
      %s78 = ssub.s32 2048, 2048
      %79 = vsyncadd [#allocation8], %s78
      %s80 = sshll.u32 [#allocation9], 4
      %s81 = int_to_ptr.vmem [resolvable:$true] %s80
      %86 = dma.hbm_to_vmem [thread:$0]  %s8, 2048, %s81, [#allocation8], 64, 64, 4
    $region37: #{conditional_unet1d.1} parent=1 // pred_fallthru
      _
    // Predicated region
    $region38: #{conditional_unet1d.1} parent=1 // pred_check
      _
    $region39: #{conditional_unet1d.1} parent=1 // pred_check_branch
      %88 = sbr.rel (0) target = $region41
    $region40: #{conditional_unet1d.1} parent=1 // pred_region
      _
    $region41: #{conditional_unet1d.1} parent=1 // pred_fallthru
      _
    // Predicated region
    $region42: #{conditional_unet1d.1} parent=1 // pred_check
      _
    $region43: #{conditional_unet1d.1} parent=1 // pred_check_branch
      %90 = sbr.rel (0) target = $region45
    $region44: #{conditional_unet1d.1} parent=1 // pred_region
      _
    $region45: #{conditional_unet1d.1} parent=1 // pred_fallthru
      _
    // Predicated region
    $region46: #{conditional_unet1d.1} parent=1 // pred_check
      _
    $region47: #{conditional_unet1d.1} parent=1 // pred_check_branch
      %92 = sbr.rel (0) target = $region49
    $region48: #{conditional_unet1d.1} parent=1 // pred_region
      %93 = dma.done [#allocation3], 4096
    $region49: #{conditional_unet1d.1} parent=1 // pred_fallthru
      _
    // Predicated region
    $region50: #{conditional_unet1d.1} parent=1 // pred_check
      _
    $region51: #{conditional_unet1d.1} parent=1 // pred_check_branch
      %95 = sbr.rel (0) target = $region53
    $region52: #{conditional_unet1d.1} parent=1 // pred_region
      %96 = dma.done [#allocation5], 16384
    $region53: #{conditional_unet1d.1} parent=1 // pred_fallthru
      _
    // Predicated region
    $region54: #{conditional_unet1d.1} parent=1 // pred_check
      _
    $region55: #{conditional_unet1d.1} parent=1 // pred_check_branch
      %98 = sbr.rel (0) target = $region57
    $region56: #{conditional_unet1d.1} parent=1 // pred_region
      %99 = dma.done [#allocation5], 12288
    $region57: #{conditional_unet1d.1} parent=1 // pred_fallthru
      _
    // Predicated region
    $region58: #{conditional_unet1d.1} parent=1 // pred_check
      _
    $region59: #{conditional_unet1d.1} parent=1 // pred_check_branch
      %101 = sbr.rel (0) target = $region61
    $region60: #{conditional_unet1d.1} parent=1 // pred_region
      %102 = dma.done [#allocation8], 2048
    $region61: #{conditional_unet1d.1} parent=1 // pred_fallthru
      _
    // Predicated region
    $region62: #{conditional_unet1d.1} parent=1 // pred_check
      _
    $region63: #{conditional_unet1d.1} parent=1 // pred_check_branch
      %104 = sbr.rel (0) target = $region65
    $region64: #{conditional_unet1d.1} parent=1 // pred_region
      %105 = dma.done [#allocation8], 2048
    $region65: #{conditional_unet1d.1} parent=1 // pred_fallthru
      _
    %v107 = vld [vmem:[%s0] sm:$0xff]
    %v108 = vld [vmem:[%s1] sm:$0xff]
    %v109 = vld [vmem:[%s2] sm:$0xff]
    %v110 = vld [vmem:[%s3 + $0xc0] ss:$0 sm:$0xff]
    %vm111 = vcmp.eq.s32.totalorder %v109, 0
    %v112 = vld [vmem:[%s3 + $0xc1] ss:$0 sm:$0xff]
    %v113 = vsel %vm111, 1, 0
    %114 = vset.pattern.permute.xlu0 0
    %115 = vperm.xlu0 %114, %v113
    %v116 = vpop.permute.xlu0 %115
    %vm117 = vcmp.eq.s32.totalorder %v116, 1
    %v118 = vsel %vm117, %v112, %v110
    %vm119 = vcmp.eq.s32.totalorder %v109, 1
    %v120 = vld [vmem:[%s3 + $0xc2] ss:$0 sm:$0xff]
    %v121 = vsel %vm119, 1, 0
    %122 = vset.pattern.permute.xlu0 0
    %123 = vperm.xlu0 %122, %v121
    %v124 = vpop.permute.xlu0 %123
    %vm125 = vcmp.eq.s32.totalorder %v124, 1
    %v126 = vsel %vm125, %v120, %v118
    %v127 = vld [vmem:[#allocation2] sm:$0xf]
    %v128 = vld [vmem:[#allocation2 + $0x4] sm:$0xf]
    %v129 = vld [vmem:[#allocation2 + $0x8] sm:$0xf]
    %v130 = vld [vmem:[#allocation2 + $0xc] sm:$0xf]
    %v131 = vld [vmem:[#allocation2 + $0x10] sm:$0xf]
    %v132 = vld [vmem:[#allocation2 + $0x14] sm:$0xf]
    %v133 = vld [vmem:[#allocation2 + $0x18] sm:$0xf]
    %v134 = vld [vmem:[#allocation2 + $0x1c] sm:$0xf]
    %v135 = vld [vmem:[#allocation2 + $0x20] sm:$0xf]
    %v136 = vld [vmem:[#allocation2 + $0x24] sm:$0xf]
    %v137 = vld [vmem:[#allocation2 + $0x28] sm:$0xf]
    %v138 = vld [vmem:[#allocation2 + $0x2c] sm:$0xf]
    %v139 = vld [vmem:[#allocation2 + $0x30] sm:$0xf]
    %v140 = vld [vmem:[#allocation2 + $0x34] sm:$0xf]
    %v141 = vld [vmem:[#allocation2 + $0x38] sm:$0xf]
    %v142 = vld [vmem:[#allocation2 + $0x3c] sm:$0xf]
    %v143 = vpack.c.bf16 %v108, %v108
    %v144 = vld [vmem:[%s3] ss:$0 sm:$0xff]
    %v161 = vunpack.c.l.b16 %v127
    %v162 = vunpack.c.l.b16 %v128
    %v163 = vunpack.c.l.b16 %v129
    %v164 = vunpack.c.l.b16 %v130
    %v165 = vunpack.c.l.b16 %v131
    %v166 = vunpack.c.l.b16 %v132
    %v167 = vunpack.c.l.b16 %v133
    %v168 = vunpack.c.l.b16 %v134
    %v169 = vunpack.c.l.b16 %v135
    %v170 = vunpack.c.l.b16 %v136
    %v171 = vunpack.c.l.b16 %v137
    %v172 = vunpack.c.l.b16 %v138
    %v173 = vunpack.c.l.b16 %v139
    %v174 = vunpack.c.l.b16 %v140
    %v175 = vunpack.c.l.b16 %v141
    %v176 = vunpack.c.l.b16 %v142
    %v177 = vpack.c.b16 %v162, %v161
    %v178 = vpack.c.b16 %v164, %v163
    %v179 = vpack.c.b16 %v166, %v165
    %v180 = vpack.c.b16 %v168, %v167
    %v181 = vpack.c.b16 %v170, %v169
    %v182 = vpack.c.b16 %v172, %v171
    %v183 = vpack.c.b16 %v174, %v173
    %v184 = vpack.c.b16 %v176, %v175
    %193 = vmatprep.subr.bf16.mxu0 0
    %194 = vmatpush1.bf16.msra.mxu0 %v177
    %195 = vmatprep.subr.bf16.mxu0 0
    %196 = vmatpush1.bf16.msra.mxu0 %v178
    %197 = vmatprep.subr.bf16.mxu0 0
    %198 = vmatpush1.bf16.msra.mxu0 %v179
    %199 = vmatprep.subr.bf16.mxu0 0
    %200 = vmatpush1.bf16.msra.mxu0 %v180
    %201 = vmatprep.subr.bf16.mxu0 0
    %202 = vmatpush1.bf16.msra.mxu0 %v181
    %203 = vmatprep.subr.bf16.mxu0 0
    %204 = vmatpush1.bf16.msra.mxu0 %v182
    %205 = vmatprep.subr.bf16.mxu0 0
    %206 = vmatpush1.bf16.msra.mxu0 %v183
    %207 = vmatprep.subr.bf16.mxu0 0
    %208 = vmatpush1.bf16.msra.mxu0 %v184
    %209 = vmatprep.subr.bf16.mxu0 0
    %210 = vmatpush1.bf16.msra.mxu0 0
    %211 = vmatprep.subr.bf16.mxu0 0
    %212 = vmatpush1.bf16.msra.mxu0 0
    %213 = vmatprep.subr.bf16.mxu0 0
    %214 = vmatpush1.bf16.msra.mxu0 0
    %215 = vmatprep.subr.bf16.mxu0 0
    %216 = vmatpush1.bf16.msra.mxu0 0
    %217 = vmatprep.subr.bf16.mxu0 0
    %218 = vmatpush1.bf16.msra.mxu0 0
    %219 = vmatprep.subr.bf16.mxu0 0
    %220 = vmatpush1.bf16.msra.mxu0 0
    %221 = vmatprep.subr.bf16.mxu0 0
    %222 = vmatpush1.bf16.msra.mxu0 0
    %223 = vmatprep.subr.bf16.mxu0 0
    %224 = vmatpush1.bf16.msra.mxu0 0
    %225 = vmatprep.mubr.bf16.mxu0 0
    %226 = vmatmul.mubr.bf16.gmra.mrb[0].mxu0 %v143
    %v227 = vpop.f32.mrb[0].mxu0
    %v228 = vadd.f32 %v144, %v227
    %v229 = vpop.f32.mrb[0].mxu0
    %v230 = vpop.f32.mrb[0].mxu0
    %v231 = vpop.f32.mrb[0].mxu0
    %232 = vdwg.mxu0
    %v233 = vxor.u32 %v228, 2147483648
    %v234 = vmul.f32 %v233, 1.442695
    %v235 = vpow.pop %v234
    %v236 = vadd.f32 %v235, 1.0
    %v237 = vrcp.pop %v236
    %v238 = vmul.f32 1.0, %v237
    %v239 = vmul.f32 %v228, %v238
    %s240 = scalar_lea.vmem [#allocation2], 64
    %v241 = vld [vmem:[%s240] sm:$0xf]
    %v242 = vld [vmem:[%s240 + $0x4] sm:$0xf]
    %v243 = vld [vmem:[%s240 + $0x8] sm:$0xf]
    %v244 = vld [vmem:[%s240 + $0xc] sm:$0xf]
    %v245 = vld [vmem:[%s240 + $0x10] sm:$0xf]
    %v246 = vld [vmem:[%s240 + $0x14] sm:$0xf]
    %v247 = vld [vmem:[%s240 + $0x18] sm:$0xf]
    %v248 = vld [vmem:[%s240 + $0x1c] sm:$0xf]
    %v249 = vld [vmem:[%s240 + $0x20] sm:$0xf]
    %v250 = vld [vmem:[%s240 + $0x24] sm:$0xf]
    %v251 = vld [vmem:[%s240 + $0x28] sm:$0xf]
    %v252 = vld [vmem:[%s240 + $0x2c] sm:$0xf]
    %v253 = vld [vmem:[%s240 + $0x30] sm:$0xf]
    %v254 = vld [vmem:[%s240 + $0x34] sm:$0xf]
    %v255 = vld [vmem:[%s240 + $0x38] sm:$0xf]
    %v256 = vld [vmem:[%s240 + $0x3c] sm:$0xf]
    %v257 = vpack.c.bf16 %v239, %v239
    %v258 = vld [vmem:[%s3 + $0x1] ss:$0 sm:$0xff]
    %v275 = vunpack.c.l.b16 %v241
    %v276 = vunpack.c.l.b16 %v242
    %v277 = vunpack.c.l.b16 %v243
    %v278 = vunpack.c.l.b16 %v244
    %v279 = vunpack.c.l.b16 %v245
    %v280 = vunpack.c.l.b16 %v246
    %v281 = vunpack.c.l.b16 %v247
    %v282 = vunpack.c.l.b16 %v248
    %v283 = vunpack.c.l.b16 %v249
    %v284 = vunpack.c.l.b16 %v250
    %v285 = vunpack.c.l.b16 %v251
    %v286 = vunpack.c.l.b16 %v252
    %v287 = vunpack.c.l.b16 %v253
    %v288 = vunpack.c.l.b16 %v254
    %v289 = vunpack.c.l.b16 %v255
    %v290 = vunpack.c.l.b16 %v256
    %v291 = vpack.c.b16 %v276, %v275
    %v292 = vpack.c.b16 %v278, %v277
    %v293 = vpack.c.b16 %v280, %v279
    %v294 = vpack.c.b16 %v282, %v281
    %v295 = vpack.c.b16 %v284, %v283
    %v296 = vpack.c.b16 %v286, %v285
    %v297 = vpack.c.b16 %v288, %v287
    %v298 = vpack.c.b16 %v290, %v289
    %307 = vmatprep.subr.bf16.mxu0 0
    %308 = vmatpush1.bf16.msra.mxu0 %v291
    %309 = vmatprep.subr.bf16.mxu0 0
    %310 = vmatpush1.bf16.msra.mxu0 %v292
    %311 = vmatprep.subr.bf16.mxu0 0
    %312 = vmatpush1.bf16.msra.mxu0 %v293
    %313 = vmatprep.subr.bf16.mxu0 0
    %314 = vmatpush1.bf16.msra.mxu0 %v294
    %315 = vmatprep.subr.bf16.mxu0 0
    %316 = vmatpush1.bf16.msra.mxu0 %v295
    %317 = vmatprep.subr.bf16.mxu0 0
    %318 = vmatpush1.bf16.msra.mxu0 %v296
    %319 = vmatprep.subr.bf16.mxu0 0
    %320 = vmatpush1.bf16.msra.mxu0 %v297
    %321 = vmatprep.subr.bf16.mxu0 0
    %322 = vmatpush1.bf16.msra.mxu0 %v298
    %323 = vmatprep.subr.bf16.mxu0 0
    %324 = vmatpush1.bf16.msra.mxu0 0
    %325 = vmatprep.subr.bf16.mxu0 0
    %326 = vmatpush1.bf16.msra.mxu0 0
    %327 = vmatprep.subr.bf16.mxu0 0
    %328 = vmatpush1.bf16.msra.mxu0 0
    %329 = vmatprep.subr.bf16.mxu0 0
    %330 = vmatpush1.bf16.msra.mxu0 0
    %331 = vmatprep.subr.bf16.mxu0 0
    %332 = vmatpush1.bf16.msra.mxu0 0
    %333 = vmatprep.subr.bf16.mxu0 0
    %334 = vmatpush1.bf16.msra.mxu0 0
    %335 = vmatprep.subr.bf16.mxu0 0
    %336 = vmatpush1.bf16.msra.mxu0 0
    %337 = vmatprep.subr.bf16.mxu0 0
    %338 = vmatpush1.bf16.msra.mxu0 0
    %339 = vmatprep.mubr.bf16.mxu0 0
    %340 = vmatmul.mubr.bf16.gmra.mrb[0].mxu0 %v257
    %v341 = vpop.f32.mrb[0].mxu0
    %v342 = vadd.f32 %v258, %v341
    %v343 = vpop.f32.mrb[0].mxu0
    %v344 = vpop.f32.mrb[0].mxu0
    %v345 = vpop.f32.mrb[0].mxu0
    %346 = vdwg.mxu0
    %v347 = vld [vmem:[#allocation4] sm:$0xff]
    %v348 = vld [vmem:[#allocation4 + $0x8] sm:$0xff]
    %v349 = vld [vmem:[#allocation4 + $0x10] sm:$0xff]
    %v350 = vld [vmem:[#allocation4 + $0x18] sm:$0xff]
    %v351 = vld [vmem:[#allocation4 + $0x20] sm:$0xff]
    %v352 = vld [vmem:[#allocation4 + $0x28] sm:$0xff]
    %v353 = vld [vmem:[#allocation4 + $0x30] sm:$0xff]
    %v354 = vld [vmem:[#allocation4 + $0x38] sm:$0xff]
    %v355 = vld [vmem:[#allocation4 + $0x40] sm:$0xff]
    %v356 = vld [vmem:[#allocation4 + $0x48] sm:$0xff]
    %v357 = vld [vmem:[#allocation4 + $0x50] sm:$0xff]
    %v358 = vld [vmem:[#allocation4 + $0x58] sm:$0xff]
    %v359 = vld [vmem:[#allocation4 + $0x60] sm:$0xff]
    %v360 = vld [vmem:[#allocation4 + $0x68] sm:$0xff]
    %v361 = vld [vmem:[#allocation4 + $0x70] sm:$0xff]
    %v362 = vld [vmem:[#allocation4 + $0x78] sm:$0xff]
    %v363 = vld [vmem:[#allocation4 + $0x80] sm:$0xff]
    %v364 = vld [vmem:[#allocation4 + $0x88] sm:$0xff]
    %v365 = vld [vmem:[#allocation4 + $0x90] sm:$0xff]
    %v366 = vld [vmem:[#allocation4 + $0x98] sm:$0xff]
    %v367 = vld [vmem:[#allocation4 + $0xa0] sm:$0xff]
    %v368 = vld [vmem:[#allocation4 + $0xa8] sm:$0xff]
    %v369 = vld [vmem:[#allocation4 + $0xb0] sm:$0xff]
    %v370 = vld [vmem:[#allocation4 + $0xb8] sm:$0xff]
    %v371 = vld [vmem:[#allocation4 + $0xc0] sm:$0xff]
    %v372 = vld [vmem:[#allocation4 + $0xc8] sm:$0xff]
    %v373 = vld [vmem:[#allocation4 + $0xd0] sm:$0xff]
    %v374 = vld [vmem:[#allocation4 + $0xd8] sm:$0xff]
    %v375 = vld [vmem:[#allocation4 + $0xe0] sm:$0xff]
    %v376 = vld [vmem:[#allocation4 + $0xe8] sm:$0xff]
    %v377 = vld [vmem:[#allocation4 + $0xf0] sm:$0xff]
    %v378 = vld [vmem:[#allocation4 + $0xf8] sm:$0xff]
    %v379 = vld [vmem:[#allocation4 + $0x100] sm:$0xff]
    %v380 = vld [vmem:[#allocation4 + $0x108] sm:$0xff]
    %v381 = vld [vmem:[#allocation4 + $0x110] sm:$0xff]
    %v382 = vld [vmem:[#allocation4 + $0x118] sm:$0xff]
    %v383 = vld [vmem:[#allocation4 + $0x120] sm:$0xff]
    %v384 = vld [vmem:[#allocation4 + $0x128] sm:$0xff]
    %v385 = vld [vmem:[#allocation4 + $0x130] sm:$0xff]
    %v386 = vld [vmem:[#allocation4 + $0x138] sm:$0xff]
    %v387 = vld [vmem:[#allocation4 + $0x140] sm:$0xff]
    %v388 = vld [vmem:[#allocation4 + $0x148] sm:$0xff]
    %v389 = vld [vmem:[#allocation4 + $0x150] sm:$0xff]
    %v390 = vld [vmem:[#allocation4 + $0x158] sm:$0xff]
    %v391 = vld [vmem:[#allocation4 + $0x160] sm:$0xff]
    %v392 = vld [vmem:[#allocation4 + $0x168] sm:$0xff]
    %v393 = vld [vmem:[#allocation4 + $0x170] sm:$0xff]
    %v394 = vld [vmem:[#allocation4 + $0x178] sm:$0xff]
    %v395 = vld [vmem:[#allocation4 + $0x180] sm:$0xff]
    %v396 = vld [vmem:[#allocation4 + $0x188] sm:$0xff]
    %v397 = vld [vmem:[#allocation4 + $0x190] sm:$0xff]
    %v398 = vld [vmem:[#allocation4 + $0x198] sm:$0xff]
    %v399 = vld [vmem:[#allocation4 + $0x1a0] sm:$0xff]
    %v400 = vld [vmem:[#allocation4 + $0x1a8] sm:$0xff]
    %v401 = vld [vmem:[#allocation4 + $0x1b0] sm:$0xff]
    %v402 = vld [vmem:[#allocation4 + $0x1b8] sm:$0xff]
    %v403 = vld [vmem:[#allocation4 + $0x1c0] sm:$0xff]
    %v404 = vld [vmem:[#allocation4 + $0x1c8] sm:$0xff]
    %v405 = vld [vmem:[#allocation4 + $0x1d0] sm:$0xff]
    %v406 = vld [vmem:[#allocation4 + $0x1d8] sm:$0xff]
    %v407 = vld [vmem:[#allocation4 + $0x1e0] sm:$0xff]
    %v408 = vld [vmem:[#allocation4 + $0x1e8] sm:$0xff]
    %v409 = vld [vmem:[#allocation4 + $0x1f0] sm:$0xff]
    %v410 = vld [vmem:[#allocation4 + $0x1f8] sm:$0xff]
    %v411 = vpack.c.bf16 %v342, %v342
    %s412 = scalar_lea.vmem [#allocation4], 512
    %v413 = vld [vmem:[%s412] sm:$0xff]
    %v414 = vld [vmem:[%s412 + $0x8] sm:$0xff]
    %v415 = vld [vmem:[%s412 + $0x10] sm:$0xff]
    %v416 = vld [vmem:[%s412 + $0x18] sm:$0xff]
    %v417 = vld [vmem:[%s412 + $0x20] sm:$0xff]
    %v418 = vld [vmem:[%s412 + $0x28] sm:$0xff]
    %v419 = vld [vmem:[%s412 + $0x30] sm:$0xff]
    %v420 = vld [vmem:[%s412 + $0x38] sm:$0xff]
    %v421 = vld [vmem:[%s412 + $0x40] sm:$0xff]
    %v422 = vld [vmem:[%s412 + $0x48] sm:$0xff]
    %v423 = vld [vmem:[%s412 + $0x50] sm:$0xff]
    %v424 = vld [vmem:[%s412 + $0x58] sm:$0xff]
    %v425 = vld [vmem:[%s412 + $0x60] sm:$0xff]
    %v426 = vld [vmem:[%s412 + $0x68] sm:$0xff]
    %v427 = vld [vmem:[%s412 + $0x70] sm:$0xff]
    %v428 = vld [vmem:[%s412 + $0x78] sm:$0xff]
    %v429 = vld [vmem:[%s412 + $0x80] sm:$0xff]
    %v430 = vld [vmem:[%s412 + $0x88] sm:$0xff]
    %v431 = vld [vmem:[%s412 + $0x90] sm:$0xff]
    %v432 = vld [vmem:[%s412 + $0x98] sm:$0xff]
    %v433 = vld [vmem:[%s412 + $0xa0] sm:$0xff]
    %v434 = vld [vmem:[%s412 + $0xa8] sm:$0xff]
    %v435 = vld [vmem:[%s412 + $0xb0] sm:$0xff]
    %v436 = vld [vmem:[%s412 + $0xb8] sm:$0xff]
    %v437 = vld [vmem:[%s412 + $0xc0] sm:$0xff]
    %v438 = vld [vmem:[%s412 + $0xc8] sm:$0xff]
    %v439 = vld [vmem:[%s412 + $0xd0] sm:$0xff]
    %v440 = vld [vmem:[%s412 + $0xd8] sm:$0xff]
    %v441 = vld [vmem:[%s412 + $0xe0] sm:$0xff]
    %v442 = vld [vmem:[%s412 + $0xe8] sm:$0xff]
    %v443 = vld [vmem:[%s412 + $0xf0] sm:$0xff]
    %v444 = vld [vmem:[%s412 + $0xf8] sm:$0xff]
    %v445 = vld [vmem:[%s412 + $0x100] sm:$0xff]
    %v446 = vld [vmem:[%s412 + $0x108] sm:$0xff]
    %v447 = vld [vmem:[%s412 + $0x110] sm:$0xff]
    %v448 = vld [vmem:[%s412 + $0x118] sm:$0xff]
    %v449 = vld [vmem:[%s412 + $0x120] sm:$0xff]
    %v450 = vld [vmem:[%s412 + $0x128] sm:$0xff]
    %v451 = vld [vmem:[%s412 + $0x130] sm:$0xff]
    %v452 = vld [vmem:[%s412 + $0x138] sm:$0xff]
    %v453 = vld [vmem:[%s412 + $0x140] sm:$0xff]
    %v454 = vld [vmem:[%s412 + $0x148] sm:$0xff]
    %v455 = vld [vmem:[%s412 + $0x150] sm:$0xff]
    %v456 = vld [vmem:[%s412 + $0x158] sm:$0xff]
    %v457 = vld [vmem:[%s412 + $0x160] sm:$0xff]
    %v458 = vld [vmem:[%s412 + $0x168] sm:$0xff]
    %v459 = vld [vmem:[%s412 + $0x170] sm:$0xff]
    %v460 = vld [vmem:[%s412 + $0x178] sm:$0xff]
    %v461 = vld [vmem:[%s412 + $0x180] sm:$0xff]
    %v462 = vld [vmem:[%s412 + $0x188] sm:$0xff]
    %v463 = vld [vmem:[%s412 + $0x190] sm:$0xff]
    %v464 = vld [vmem:[%s412 + $0x198] sm:$0xff]
    %v465 = vld [vmem:[%s412 + $0x1a0] sm:$0xff]
    %v466 = vld [vmem:[%s412 + $0x1a8] sm:$0xff]
    %v467 = vld [vmem:[%s412 + $0x1b0] sm:$0xff]
    %v468 = vld [vmem:[%s412 + $0x1b8] sm:$0xff]
    %v469 = vld [vmem:[%s412 + $0x1c0] sm:$0xff]
    %v470 = vld [vmem:[%s412 + $0x1c8] sm:$0xff]
    %v471 = vld [vmem:[%s412 + $0x1d0] sm:$0xff]
    %v472 = vld [vmem:[%s412 + $0x1d8] sm:$0xff]
    %v473 = vld [vmem:[%s412 + $0x1e0] sm:$0xff]
    %v474 = vld [vmem:[%s412 + $0x1e8] sm:$0xff]
    %v475 = vld [vmem:[%s412 + $0x1f0] sm:$0xff]
    %v476 = vld [vmem:[%s412 + $0x1f8] sm:$0xff]
    %v477 = vpack.c.bf16 %v126, %v126
    %v542 = vunpack.c.l.b16 %v413
    %v543 = vunpack.c.h.b16 %v413
    %v544 = vunpack.c.l.b16 %v414
    %v545 = vunpack.c.h.b16 %v414
    %v546 = vunpack.c.l.b16 %v415
    %v547 = vunpack.c.h.b16 %v415
    %v548 = vunpack.c.l.b16 %v416
    %v549 = vunpack.c.h.b16 %v416
    %v550 = vunpack.c.l.b16 %v417
    %v551 = vunpack.c.h.b16 %v417
    %v552 = vunpack.c.l.b16 %v418
    %v553 = vunpack.c.h.b16 %v418
    %v554 = vunpack.c.l.b16 %v419
    %v555 = vunpack.c.h.b16 %v419
    %v556 = vunpack.c.l.b16 %v420
    %v557 = vunpack.c.h.b16 %v420
    %v558 = vunpack.c.l.b16 %v421
    %v559 = vunpack.c.h.b16 %v421
    %v560 = vunpack.c.l.b16 %v422
    %v561 = vunpack.c.h.b16 %v422
    %v562 = vunpack.c.l.b16 %v423
    %v563 = vunpack.c.h.b16 %v423
    %v564 = vunpack.c.l.b16 %v424
    %v565 = vunpack.c.h.b16 %v424
    %v566 = vunpack.c.l.b16 %v425
    %v567 = vunpack.c.h.b16 %v425
    %v568 = vunpack.c.l.b16 %v426
    %v569 = vunpack.c.h.b16 %v426
    %v570 = vunpack.c.l.b16 %v427
    %v571 = vunpack.c.h.b16 %v427
    %v572 = vunpack.c.l.b16 %v428
    %v573 = vunpack.c.h.b16 %v428
    %v574 = vunpack.c.l.b16 %v429
    %v575 = vunpack.c.h.b16 %v429
    %v576 = vunpack.c.l.b16 %v430
    %v577 = vunpack.c.h.b16 %v430
    %v578 = vunpack.c.l.b16 %v431
    %v579 = vunpack.c.h.b16 %v431
    %v580 = vunpack.c.l.b16 %v432
    %v581 = vunpack.c.h.b16 %v432
    %v582 = vunpack.c.l.b16 %v433
    %v583 = vunpack.c.h.b16 %v433
    %v584 = vunpack.c.l.b16 %v434
    %v585 = vunpack.c.h.b16 %v434
    %v586 = vunpack.c.l.b16 %v435
    %v587 = vunpack.c.h.b16 %v435
    %v588 = vunpack.c.l.b16 %v436
    %v589 = vunpack.c.h.b16 %v436
    %v590 = vunpack.c.l.b16 %v437
    %v591 = vunpack.c.h.b16 %v437
    %v592 = vunpack.c.l.b16 %v438
    %v593 = vunpack.c.h.b16 %v438
    %v594 = vunpack.c.l.b16 %v439
    %v595 = vunpack.c.h.b16 %v439
    %v596 = vunpack.c.l.b16 %v440
    %v597 = vunpack.c.h.b16 %v440
    %v598 = vunpack.c.l.b16 %v441
    %v599 = vunpack.c.h.b16 %v441
    %v600 = vunpack.c.l.b16 %v442
    %v601 = vunpack.c.h.b16 %v442
    %v602 = vunpack.c.l.b16 %v443
    %v603 = vunpack.c.h.b16 %v443
    %v604 = vunpack.c.l.b16 %v444
    %v605 = vunpack.c.h.b16 %v444
    %v606 = vunpack.c.l.b16 %v445
    %v607 = vunpack.c.h.b16 %v445
    %v608 = vunpack.c.l.b16 %v446
    %v609 = vunpack.c.h.b16 %v446
    %v610 = vunpack.c.l.b16 %v447
    %v611 = vunpack.c.h.b16 %v447
    %v612 = vunpack.c.l.b16 %v448
    %v613 = vunpack.c.h.b16 %v448
    %v614 = vunpack.c.l.b16 %v449
    %v615 = vunpack.c.h.b16 %v449
    %v616 = vunpack.c.l.b16 %v450
    %v617 = vunpack.c.h.b16 %v450
    %v618 = vunpack.c.l.b16 %v451
    %v619 = vunpack.c.h.b16 %v451
    %v620 = vunpack.c.l.b16 %v452
    %v621 = vunpack.c.h.b16 %v452
    %v622 = vunpack.c.l.b16 %v453
    %v623 = vunpack.c.h.b16 %v453
    %v624 = vunpack.c.l.b16 %v454
    %v625 = vunpack.c.h.b16 %v454
    %v626 = vunpack.c.l.b16 %v455
    %v627 = vunpack.c.h.b16 %v455
    %v628 = vunpack.c.l.b16 %v456
    %v629 = vunpack.c.h.b16 %v456
    %v630 = vunpack.c.l.b16 %v457
    %v631 = vunpack.c.h.b16 %v457
    %v632 = vunpack.c.l.b16 %v458
    %v633 = vunpack.c.h.b16 %v458
    %v634 = vunpack.c.l.b16 %v459
    %v635 = vunpack.c.h.b16 %v459
    %v636 = vunpack.c.l.b16 %v460
    %v637 = vunpack.c.h.b16 %v460
    %v638 = vunpack.c.l.b16 %v461
    %v639 = vunpack.c.h.b16 %v461
    %v640 = vunpack.c.l.b16 %v462
    %v641 = vunpack.c.h.b16 %v462
    %v642 = vunpack.c.l.b16 %v463
    %v643 = vunpack.c.h.b16 %v463
    %v644 = vunpack.c.l.b16 %v464
    %v645 = vunpack.c.h.b16 %v464
    %v646 = vunpack.c.l.b16 %v465
    %v647 = vunpack.c.h.b16 %v465
    %v648 = vunpack.c.l.b16 %v466
    %v649 = vunpack.c.h.b16 %v466
    %v650 = vunpack.c.l.b16 %v467
    %v651 = vunpack.c.h.b16 %v467
    %v652 = vunpack.c.l.b16 %v468
    %v653 = vunpack.c.h.b16 %v468
    %v654 = vunpack.c.l.b16 %v469
    %v655 = vunpack.c.h.b16 %v469
    %v656 = vunpack.c.l.b16 %v470
    %v657 = vunpack.c.h.b16 %v470
    %v658 = vunpack.c.l.b16 %v471
    %v659 = vunpack.c.h.b16 %v471
    %v660 = vunpack.c.l.b16 %v472
    %v661 = vunpack.c.h.b16 %v472
    %v662 = vunpack.c.l.b16 %v473
    %v663 = vunpack.c.h.b16 %v473
    %v664 = vunpack.c.l.b16 %v474
    %v665 = vunpack.c.h.b16 %v474
    %v666 = vunpack.c.l.b16 %v475
    %v667 = vunpack.c.h.b16 %v475
    %v668 = vunpack.c.l.b16 %v476
    %v669 = vunpack.c.h.b16 %v476
    %v670 = vpack.c.b16 %v550, %v542
    %v671 = vpack.c.b16 %v551, %v543
    %v672 = vpack.c.b16 %v552, %v544
    %v673 = vpack.c.b16 %v553, %v545
    %v674 = vpack.c.b16 %v554, %v546
    %v675 = vpack.c.b16 %v555, %v547
    %v676 = vpack.c.b16 %v556, %v548
    %v677 = vpack.c.b16 %v557, %v549
    %v678 = vpack.c.b16 %v566, %v558
    %v679 = vpack.c.b16 %v567, %v559
    %v680 = vpack.c.b16 %v568, %v560
    %v681 = vpack.c.b16 %v569, %v561
    %v682 = vpack.c.b16 %v570, %v562
    %v683 = vpack.c.b16 %v571, %v563
    %v684 = vpack.c.b16 %v572, %v564
    %v685 = vpack.c.b16 %v573, %v565
    %v686 = vpack.c.b16 %v582, %v574
    %v687 = vpack.c.b16 %v583, %v575
    %v688 = vpack.c.b16 %v584, %v576
    %v689 = vpack.c.b16 %v585, %v577
    %v690 = vpack.c.b16 %v586, %v578
    %v691 = vpack.c.b16 %v587, %v579
    %v692 = vpack.c.b16 %v588, %v580
    %v693 = vpack.c.b16 %v589, %v581
    %v694 = vpack.c.b16 %v598, %v590
    %v695 = vpack.c.b16 %v599, %v591
    %v696 = vpack.c.b16 %v600, %v592
    %v697 = vpack.c.b16 %v601, %v593
    %v698 = vpack.c.b16 %v602, %v594
    %v699 = vpack.c.b16 %v603, %v595
    %v700 = vpack.c.b16 %v604, %v596
    %v701 = vpack.c.b16 %v605, %v597
    %v702 = vpack.c.b16 %v614, %v606
    %v703 = vpack.c.b16 %v615, %v607
    %v704 = vpack.c.b16 %v616, %v608
    %v705 = vpack.c.b16 %v617, %v609
    %v706 = vpack.c.b16 %v618, %v610
    %v707 = vpack.c.b16 %v619, %v611
    %v708 = vpack.c.b16 %v620, %v612
    %v709 = vpack.c.b16 %v621, %v613
    %v710 = vpack.c.b16 %v630, %v622
    %v711 = vpack.c.b16 %v631, %v623
    %v712 = vpack.c.b16 %v632, %v624
    %v713 = vpack.c.b16 %v633, %v625
    %v714 = vpack.c.b16 %v634, %v626
    %v715 = vpack.c.b16 %v635, %v627
    %v716 = vpack.c.b16 %v636, %v628
    %v717 = vpack.c.b16 %v637, %v629
    %v718 = vpack.c.b16 %v646, %v638
    %v719 = vpack.c.b16 %v647, %v639
    %v720 = vpack.c.b16 %v648, %v640
    %v721 = vpack.c.b16 %v649, %v641
    %v722 = vpack.c.b16 %v650, %v642
    %v723 = vpack.c.b16 %v651, %v643
    %v724 = vpack.c.b16 %v652, %v644
    %v725 = vpack.c.b16 %v653, %v645
    %v726 = vpack.c.b16 %v662, %v654
    %v727 = vpack.c.b16 %v663, %v655
    %v728 = vpack.c.b16 %v664, %v656
    %v729 = vpack.c.b16 %v665, %v657
    %v730 = vpack.c.b16 %v666, %v658
    %v731 = vpack.c.b16 %v667, %v659
    %v732 = vpack.c.b16 %v668, %v660
    %v733 = vpack.c.b16 %v669, %v661
    %798 = vmatprep.subr.bf16.mxu0 %v671
    %799 = vmatpush1.bf16.msra.mxu0 %v670
    %800 = vmatprep.subr.bf16.mxu0 %v679
    %801 = vmatpush1.bf16.msra.mxu0 %v678
    %802 = vmatprep.subr.bf16.mxu0 %v687
    %803 = vmatpush1.bf16.msra.mxu0 %v686
    %804 = vmatprep.subr.bf16.mxu0 %v695
    %805 = vmatpush1.bf16.msra.mxu0 %v694
    %806 = vmatprep.subr.bf16.mxu0 %v703
    %807 = vmatpush1.bf16.msra.mxu0 %v702
    %808 = vmatprep.subr.bf16.mxu0 %v711
    %809 = vmatpush1.bf16.msra.mxu0 %v710
    %810 = vmatprep.subr.bf16.mxu0 %v719
    %811 = vmatpush1.bf16.msra.mxu0 %v718
    %812 = vmatprep.subr.bf16.mxu0 %v727
    %813 = vmatpush1.bf16.msra.mxu0 %v726
    %814 = vmatprep.subr.bf16.mxu0 0
    %815 = vmatpush1.bf16.msra.mxu0 0
    %816 = vmatprep.subr.bf16.mxu0 0
    %817 = vmatpush1.bf16.msra.mxu0 0
    %818 = vmatprep.subr.bf16.mxu0 0
    %819 = vmatpush1.bf16.msra.mxu0 0
    %820 = vmatprep.subr.bf16.mxu0 0
    %821 = vmatpush1.bf16.msra.mxu0 0
    %822 = vmatprep.subr.bf16.mxu0 0
    %823 = vmatpush1.bf16.msra.mxu0 0
    %824 = vmatprep.subr.bf16.mxu0 0
    %825 = vmatpush1.bf16.msra.mxu0 0
    %826 = vmatprep.subr.bf16.mxu0 0
    %827 = vmatpush1.bf16.msra.mxu0 0
    %828 = vmatprep.subr.bf16.mxu0 0
    %829 = vmatpush1.bf16.msra.mxu0 0
    %830 = vmatprep.mubr.bf16.mxu0 0
    %831 = vmatmul.mubr.bf16.gmra.mrb[0].mxu0 %v477
    %v832 = vpop.f32.mrb[0].mxu0
    %v833 = vadd.f32 0.0, %v832
    %v834 = vpop.f32.mrb[0].mxu0
    %v835 = vadd.f32 0.0, %v834
    %v836 = vpop.f32.mrb[0].mxu0
    %v837 = vpop.f32.mrb[0].mxu0
    %838 = vdwg.mxu0
    %839 = vmatprep.subr.bf16.mxu0 %v673
    %840 = vmatpush1.bf16.msra.mxu0 %v672
    %841 = vmatprep.subr.bf16.mxu0 %v681
    %842 = vmatpush1.bf16.msra.mxu0 %v680
    %843 = vmatprep.subr.bf16.mxu0 %v689
    %844 = vmatpush1.bf16.msra.mxu0 %v688
    %845 = vmatprep.subr.bf16.mxu0 %v697
    %846 = vmatpush1.bf16.msra.mxu0 %v696
    %847 = vmatprep.subr.bf16.mxu0 %v705
    %848 = vmatpush1.bf16.msra.mxu0 %v704
    %849 = vmatprep.subr.bf16.mxu0 %v713
    %850 = vmatpush1.bf16.msra.mxu0 %v712
    %851 = vmatprep.subr.bf16.mxu0 %v721
    %852 = vmatpush1.bf16.msra.mxu0 %v720
    %853 = vmatprep.subr.bf16.mxu0 %v729
    %854 = vmatpush1.bf16.msra.mxu0 %v728
    %855 = vmatprep.subr.bf16.mxu0 0
    %856 = vmatpush1.bf16.msra.mxu0 0
    %857 = vmatprep.subr.bf16.mxu0 0
    %858 = vmatpush1.bf16.msra.mxu0 0
    %859 = vmatprep.subr.bf16.mxu0 0
    %860 = vmatpush1.bf16.msra.mxu0 0
    %861 = vmatprep.subr.bf16.mxu0 0
    %862 = vmatpush1.bf16.msra.mxu0 0
    %863 = vmatprep.subr.bf16.mxu0 0
    %864 = vmatpush1.bf16.msra.mxu0 0
    %865 = vmatprep.subr.bf16.mxu0 0
    %866 = vmatpush1.bf16.msra.mxu0 0
    %867 = vmatprep.subr.bf16.mxu0 0
    %868 = vmatpush1.bf16.msra.mxu0 0
    %869 = vmatprep.subr.bf16.mxu0 0
    %870 = vmatpush1.bf16.msra.mxu0 0
    %871 = vmatprep.mubr.bf16.mxu0 0
    %872 = vmatmul.mubr.bf16.gmra.mrb[0].mxu0 %v477
    %v873 = vpop.f32.mrb[0].mxu0
    %v874 = vadd.f32 0.0, %v873
    %v875 = vpop.f32.mrb[0].mxu0
    %v876 = vadd.f32 0.0, %v875
    %v877 = vpop.f32.mrb[0].mxu0
    %v878 = vpop.f32.mrb[0].mxu0
    %879 = vdwg.mxu0
    %880 = vmatprep.subr.bf16.mxu0 %v675
    %881 = vmatpush1.bf16.msra.mxu0 %v674
    %882 = vmatprep.subr.bf16.mxu0 %v683
    %883 = vmatpush1.bf16.msra.mxu0 %v682
    %884 = vmatprep.subr.bf16.mxu0 %v691
    %885 = vmatpush1.bf16.msra.mxu0 %v690
    %886 = vmatprep.subr.bf16.mxu0 %v699
    %887 = vmatpush1.bf16.msra.mxu0 %v698
    %888 = vmatprep.subr.bf16.mxu0 %v707
    %889 = vmatpush1.bf16.msra.mxu0 %v706
    %890 = vmatprep.subr.bf16.mxu0 %v715
    %891 = vmatpush1.bf16.msra.mxu0 %v714
    %892 = vmatprep.subr.bf16.mxu0 %v723
    %893 = vmatpush1.bf16.msra.mxu0 %v722
    %894 = vmatprep.subr.bf16.mxu0 %v731
    %895 = vmatpush1.bf16.msra.mxu0 %v730
    %896 = vmatprep.subr.bf16.mxu0 0
    %897 = vmatpush1.bf16.msra.mxu0 0
    %898 = vmatprep.subr.bf16.mxu0 0
    %899 = vmatpush1.bf16.msra.mxu0 0
    %900 = vmatprep.subr.bf16.mxu0 0
    %901 = vmatpush1.bf16.msra.mxu0 0
    %902 = vmatprep.subr.bf16.mxu0 0
    %903 = vmatpush1.bf16.msra.mxu0 0
    %904 = vmatprep.subr.bf16.mxu0 0
    %905 = vmatpush1.bf16.msra.mxu0 0
    %906 = vmatprep.subr.bf16.mxu0 0
    %907 = vmatpush1.bf16.msra.mxu0 0
    %908 = vmatprep.subr.bf16.mxu0 0
    %909 = vmatpush1.bf16.msra.mxu0 0
    %910 = vmatprep.subr.bf16.mxu0 0
    %911 = vmatpush1.bf16.msra.mxu0 0
    %912 = vmatprep.mubr.bf16.mxu0 0
    %913 = vmatmul.mubr.bf16.gmra.mrb[0].mxu0 %v477
    %v914 = vpop.f32.mrb[0].mxu0
    %v915 = vadd.f32 0.0, %v914
    %v916 = vpop.f32.mrb[0].mxu0
    %v917 = vadd.f32 0.0, %v916
    %v918 = vpop.f32.mrb[0].mxu0
    %v919 = vpop.f32.mrb[0].mxu0
    %920 = vdwg.mxu0
    %921 = vmatprep.subr.bf16.mxu0 %v677
    %922 = vmatpush1.bf16.msra.mxu0 %v676
    %923 = vmatprep.subr.bf16.mxu0 %v685
    %924 = vmatpush1.bf16.msra.mxu0 %v684
    %925 = vmatprep.subr.bf16.mxu0 %v693
    %926 = vmatpush1.bf16.msra.mxu0 %v692
    %927 = vmatprep.subr.bf16.mxu0 %v701
    %928 = vmatpush1.bf16.msra.mxu0 %v700
    %929 = vmatprep.subr.bf16.mxu0 %v709
    %930 = vmatpush1.bf16.msra.mxu0 %v708
    %931 = vmatprep.subr.bf16.mxu0 %v717
    %932 = vmatpush1.bf16.msra.mxu0 %v716
    %933 = vmatprep.subr.bf16.mxu0 %v725
    %934 = vmatpush1.bf16.msra.mxu0 %v724
    %935 = vmatprep.subr.bf16.mxu0 %v733
    %936 = vmatpush1.bf16.msra.mxu0 %v732
    %937 = vmatprep.subr.bf16.mxu0 0
    %938 = vmatpush1.bf16.msra.mxu0 0
    %939 = vmatprep.subr.bf16.mxu0 0
    %940 = vmatpush1.bf16.msra.mxu0 0
    %941 = vmatprep.subr.bf16.mxu0 0
    %942 = vmatpush1.bf16.msra.mxu0 0
    %943 = vmatprep.subr.bf16.mxu0 0
    %944 = vmatpush1.bf16.msra.mxu0 0
    %945 = vmatprep.subr.bf16.mxu0 0
    %946 = vmatpush1.bf16.msra.mxu0 0
    %947 = vmatprep.subr.bf16.mxu0 0
    %948 = vmatpush1.bf16.msra.mxu0 0
    %949 = vmatprep.subr.bf16.mxu0 0
    %950 = vmatpush1.bf16.msra.mxu0 0
    %951 = vmatprep.subr.bf16.mxu0 0
    %952 = vmatpush1.bf16.msra.mxu0 0
    %953 = vmatprep.mubr.bf16.mxu0 0
    %954 = vmatmul.mubr.bf16.gmra.mrb[0].mxu0 %v477
    %v955 = vpop.f32.mrb[0].mxu0
    %v956 = vadd.f32 0.0, %v955
    %v957 = vpop.f32.mrb[0].mxu0
    %v958 = vadd.f32 0.0, %v957
    %v959 = vpop.f32.mrb[0].mxu0
    %v960 = vpop.f32.mrb[0].mxu0
    %961 = vdwg.mxu0
    %v1026 = vunpack.c.l.b16 %v347
    %v1027 = vunpack.c.h.b16 %v347
    %v1028 = vunpack.c.l.b16 %v348
    %v1029 = vunpack.c.h.b16 %v348
    %v1030 = vunpack.c.l.b16 %v349
    %v1031 = vunpack.c.h.b16 %v349
    %v1032 = vunpack.c.l.b16 %v350
    %v1033 = vunpack.c.h.b16 %v350
    %v1034 = vunpack.c.l.b16 %v351
    %v1035 = vunpack.c.h.b16 %v351
    %v1036 = vunpack.c.l.b16 %v352
    %v1037 = vunpack.c.h.b16 %v352
    %v1038 = vunpack.c.l.b16 %v353
    %v1039 = vunpack.c.h.b16 %v353
    %v1040 = vunpack.c.l.b16 %v354
    %v1041 = vunpack.c.h.b16 %v354
    %v1042 = vunpack.c.l.b16 %v355
    %v1043 = vunpack.c.h.b16 %v355
    %v1044 = vunpack.c.l.b16 %v356
    %v1045 = vunpack.c.h.b16 %v356
    %v1046 = vunpack.c.l.b16 %v357
    %v1047 = vunpack.c.h.b16 %v357
    %v1048 = vunpack.c.l.b16 %v358
    %v1049 = vunpack.c.h.b16 %v358
    %v1050 = vunpack.c.l.b16 %v359
    %v1051 = vunpack.c.h.b16 %v359
    %v1052 = vunpack.c.l.b16 %v360
    %v1053 = vunpack.c.h.b16 %v360
    %v1054 = vunpack.c.l.b16 %v361
    %v1055 = vunpack.c.h.b16 %v361
    %v1056 = vunpack.c.l.b16 %v362
    %v1057 = vunpack.c.h.b16 %v362
    %v1058 = vunpack.c.l.b16 %v363
    %v1059 = vunpack.c.h.b16 %v363
    %v1060 = vunpack.c.l.b16 %v364
    %v1061 = vunpack.c.h.b16 %v364
    %v1062 = vunpack.c.l.b16 %v365
    %v1063 = vunpack.c.h.b16 %v365
    %v1064 = vunpack.c.l.b16 %v366
    %v1065 = vunpack.c.h.b16 %v366
    %v1066 = vunpack.c.l.b16 %v367
    %v1067 = vunpack.c.h.b16 %v367
    %v1068 = vunpack.c.l.b16 %v368
    %v1069 = vunpack.c.h.b16 %v368
    %v1070 = vunpack.c.l.b16 %v369
    %v1071 = vunpack.c.h.b16 %v369
    %v1072 = vunpack.c.l.b16 %v370
    %v1073 = vunpack.c.h.b16 %v370
    %v1074 = vunpack.c.l.b16 %v371
    %v1075 = vunpack.c.h.b16 %v371
    %v1076 = vunpack.c.l.b16 %v372
    %v1077 = vunpack.c.h.b16 %v372
    %v1078 = vunpack.c.l.b16 %v373
    %v1079 = vunpack.c.h.b16 %v373
    %v1080 = vunpack.c.l.b16 %v374
    %v1081 = vunpack.c.h.b16 %v374
    %v1082 = vunpack.c.l.b16 %v375
    %v1083 = vunpack.c.h.b16 %v375
    %v1084 = vunpack.c.l.b16 %v376
    %v1085 = vunpack.c.h.b16 %v376
    %v1086 = vunpack.c.l.b16 %v377
    %v1087 = vunpack.c.h.b16 %v377
    %v1088 = vunpack.c.l.b16 %v378
    %v1089 = vunpack.c.h.b16 %v378
    %v1090 = vunpack.c.l.b16 %v379
    %v1091 = vunpack.c.h.b16 %v379
    %v1092 = vunpack.c.l.b16 %v380
    %v1093 = vunpack.c.h.b16 %v380
    %v1094 = vunpack.c.l.b16 %v381
    %v1095 = vunpack.c.h.b16 %v381
    %v1096 = vunpack.c.l.b16 %v382
    %v1097 = vunpack.c.h.b16 %v382
    %v1098 = vunpack.c.l.b16 %v383
    %v1099 = vunpack.c.h.b16 %v383
    %v1100 = vunpack.c.l.b16 %v384
    %v1101 = vunpack.c.h.b16 %v384
    %v1102 = vunpack.c.l.b16 %v385
    %v1103 = vunpack.c.h.b16 %v385
    %v1104 = vunpack.c.l.b16 %v386
    %v1105 = vunpack.c.h.b16 %v386
    %v1106 = vunpack.c.l.b16 %v387
    %v1107 = vunpack.c.h.b16 %v387
    %v1108 = vunpack.c.l.b16 %v388
    %v1109 = vunpack.c.h.b16 %v388
    %v1110 = vunpack.c.l.b16 %v389
    %v1111 = vunpack.c.h.b16 %v389
    %v1112 = vunpack.c.l.b16 %v390
    %v1113 = vunpack.c.h.b16 %v390
    %v1114 = vunpack.c.l.b16 %v391
    %v1115 = vunpack.c.h.b16 %v391
    %v1116 = vunpack.c.l.b16 %v392
    %v1117 = vunpack.c.h.b16 %v392
    %v1118 = vunpack.c.l.b16 %v393
    %v1119 = vunpack.c.h.b16 %v393
    %v1120 = vunpack.c.l.b16 %v394
    %v1121 = vunpack.c.h.b16 %v394
    %v1122 = vunpack.c.l.b16 %v395
    %v1123 = vunpack.c.h.b16 %v395
    %v1124 = vunpack.c.l.b16 %v396
    %v1125 = vunpack.c.h.b16 %v396
    %v1126 = vunpack.c.l.b16 %v397
    %v1127 = vunpack.c.h.b16 %v397
    %v1128 = vunpack.c.l.b16 %v398
    %v1129 = vunpack.c.h.b16 %v398
    %v1130 = vunpack.c.l.b16 %v399
    %v1131 = vunpack.c.h.b16 %v399
    %v1132 = vunpack.c.l.b16 %v400
    %v1133 = vunpack.c.h.b16 %v400
    %v1134 = vunpack.c.l.b16 %v401
    %v1135 = vunpack.c.h.b16 %v401
    %v1136 = vunpack.c.l.b16 %v402
    %v1137 = vunpack.c.h.b16 %v402
    %v1138 = vunpack.c.l.b16 %v403
    %v1139 = vunpack.c.h.b16 %v403
    %v1140 = vunpack.c.l.b16 %v404
    %v1141 = vunpack.c.h.b16 %v404
    %v1142 = vunpack.c.l.b16 %v405
    %v1143 = vunpack.c.h.b16 %v405
    %v1144 = vunpack.c.l.b16 %v406
    %v1145 = vunpack.c.h.b16 %v406
    %v1146 = vunpack.c.l.b16 %v407
    %v1147 = vunpack.c.h.b16 %v407
    %v1148 = vunpack.c.l.b16 %v408
    %v1149 = vunpack.c.h.b16 %v408
    %v1150 = vunpack.c.l.b16 %v409
    %v1151 = vunpack.c.h.b16 %v409
    %v1152 = vunpack.c.l.b16 %v410
    %v1153 = vunpack.c.h.b16 %v410
    %v1154 = vpack.c.b16 %v1034, %v1026
    %v1155 = vpack.c.b16 %v1035, %v1027
    %v1156 = vpack.c.b16 %v1036, %v1028
    %v1157 = vpack.c.b16 %v1037, %v1029
    %v1158 = vpack.c.b16 %v1038, %v1030
    %v1159 = vpack.c.b16 %v1039, %v1031
    %v1160 = vpack.c.b16 %v1040, %v1032
    %v1161 = vpack.c.b16 %v1041, %v1033
    %v1162 = vpack.c.b16 %v1050, %v1042
    %v1163 = vpack.c.b16 %v1051, %v1043
    %v1164 = vpack.c.b16 %v1052, %v1044
    %v1165 = vpack.c.b16 %v1053, %v1045
    %v1166 = vpack.c.b16 %v1054, %v1046
    %v1167 = vpack.c.b16 %v1055, %v1047
    %v1168 = vpack.c.b16 %v1056, %v1048
    %v1169 = vpack.c.b16 %v1057, %v1049
    %v1170 = vpack.c.b16 %v1066, %v1058
    %v1171 = vpack.c.b16 %v1067, %v1059
    %v1172 = vpack.c.b16 %v1068, %v1060
    %v1173 = vpack.c.b16 %v1069, %v1061
    %v1174 = vpack.c.b16 %v1070, %v1062
    %v1175 = vpack.c.b16 %v1071, %v1063
    %v1176 = vpack.c.b16 %v1072, %v1064
    %v1177 = vpack.c.b16 %v1073, %v1065
    %v1178 = vpack.c.b16 %v1082, %v1074
    %v1179 = vpack.c.b16 %v1083, %v1075
    %v1180 = vpack.c.b16 %v1084, %v1076
    %v1181 = vpack.c.b16 %v1085, %v1077
    %v1182 = vpack.c.b16 %v1086, %v1078
    %v1183 = vpack.c.b16 %v1087, %v1079
    %v1184 = vpack.c.b16 %v1088, %v1080
    %v1185 = vpack.c.b16 %v1089, %v1081
    %v1186 = vpack.c.b16 %v1098, %v1090
    %v1187 = vpack.c.b16 %v1099, %v1091
    %v1188 = vpack.c.b16 %v1100, %v1092
    %v1189 = vpack.c.b16 %v1101, %v1093
    %v1190 = vpack.c.b16 %v1102, %v1094
    %v1191 = vpack.c.b16 %v1103, %v1095
    %v1192 = vpack.c.b16 %v1104, %v1096
    %v1193 = vpack.c.b16 %v1105, %v1097
    %v1194 = vpack.c.b16 %v1114, %v1106
    %v1195 = vpack.c.b16 %v1115, %v1107
    %v1196 = vpack.c.b16 %v1116, %v1108
    %v1197 = vpack.c.b16 %v1117, %v1109
    %v1198 = vpack.c.b16 %v1118, %v1110
    %v1199 = vpack.c.b16 %v1119, %v1111
    %v1200 = vpack.c.b16 %v1120, %v1112
    %v1201 = vpack.c.b16 %v1121, %v1113
    %v1202 = vpack.c.b16 %v1130, %v1122
    %v1203 = vpack.c.b16 %v1131, %v1123
    %v1204 = vpack.c.b16 %v1132, %v1124
    %v1205 = vpack.c.b16 %v1133, %v1125
    %v1206 = vpack.c.b16 %v1134, %v1126
    %v1207 = vpack.c.b16 %v1135, %v1127
    %v1208 = vpack.c.b16 %v1136, %v1128
    %v1209 = vpack.c.b16 %v1137, %v1129
    %v1210 = vpack.c.b16 %v1146, %v1138
    %v1211 = vpack.c.b16 %v1147, %v1139
    %v1212 = vpack.c.b16 %v1148, %v1140
    %v1213 = vpack.c.b16 %v1149, %v1141
    %v1214 = vpack.c.b16 %v1150, %v1142
    %v1215 = vpack.c.b16 %v1151, %v1143
    %v1216 = vpack.c.b16 %v1152, %v1144
    %v1217 = vpack.c.b16 %v1153, %v1145
    %1282 = vmatprep.subr.bf16.mxu0 %v1155
    %1283 = vmatpush1.bf16.msra.mxu0 %v1154
    %1284 = vmatprep.subr.bf16.mxu0 %v1163
    %1285 = vmatpush1.bf16.msra.mxu0 %v1162
    %1286 = vmatprep.subr.bf16.mxu0 %v1171
    %1287 = vmatpush1.bf16.msra.mxu0 %v1170
    %1288 = vmatprep.subr.bf16.mxu0 %v1179
    %1289 = vmatpush1.bf16.msra.mxu0 %v1178
    %1290 = vmatprep.subr.bf16.mxu0 %v1187
    %1291 = vmatpush1.bf16.msra.mxu0 %v1186
    %1292 = vmatprep.subr.bf16.mxu0 %v1195
    %1293 = vmatpush1.bf16.msra.mxu0 %v1194
    %1294 = vmatprep.subr.bf16.mxu0 %v1203
    %1295 = vmatpush1.bf16.msra.mxu0 %v1202
    %1296 = vmatprep.subr.bf16.mxu0 %v1211
    %1297 = vmatpush1.bf16.msra.mxu0 %v1210
    %1298 = vmatprep.subr.bf16.mxu0 0
    %1299 = vmatpush1.bf16.msra.mxu0 0
    %1300 = vmatprep.subr.bf16.mxu0 0
    %1301 = vmatpush1.bf16.msra.mxu0 0
    %1302 = vmatprep.subr.bf16.mxu0 0
    %1303 = vmatpush1.bf16.msra.mxu0 0
    %1304 = vmatprep.subr.bf16.mxu0 0
    %1305 = vmatpush1.bf16.msra.mxu0 0
    %1306 = vmatprep.subr.bf16.mxu0 0
    %1307 = vmatpush1.bf16.msra.mxu0 0
    %1308 = vmatprep.subr.bf16.mxu0 0
    %1309 = vmatpush1.bf16.msra.mxu0 0
    %1310 = vmatprep.subr.bf16.mxu0 0
    %1311 = vmatpush1.bf16.msra.mxu0 0
    %1312 = vmatprep.subr.bf16.mxu0 0
    %1313 = vmatpush1.bf16.msra.mxu0 0
    %1314 = vmatprep.mubr.bf16.mxu0 0
    %1315 = vmatmul.mubr.bf16.gmra.mrb[0].mxu0 %v411
    %v1316 = vpop.f32.mrb[0].mxu0
    %v1317 = vadd.f32 %v833, %v1316
    %v1318 = vpop.f32.mrb[0].mxu0
    %v1319 = vadd.f32 %v835, %v1318
    %v1320 = vpop.f32.mrb[0].mxu0
    %v1321 = vpop.f32.mrb[0].mxu0
    %1322 = vdwg.mxu0
    %1323 = vmatprep.subr.bf16.mxu0 %v1157
    %1324 = vmatpush1.bf16.msra.mxu0 %v1156
    %1325 = vmatprep.subr.bf16.mxu0 %v1165
    %1326 = vmatpush1.bf16.msra.mxu0 %v1164
    %1327 = vmatprep.subr.bf16.mxu0 %v1173
    %1328 = vmatpush1.bf16.msra.mxu0 %v1172
    %1329 = vmatprep.subr.bf16.mxu0 %v1181
    %1330 = vmatpush1.bf16.msra.mxu0 %v1180
    %1331 = vmatprep.subr.bf16.mxu0 %v1189
    %1332 = vmatpush1.bf16.msra.mxu0 %v1188
    %1333 = vmatprep.subr.bf16.mxu0 %v1197
    %1334 = vmatpush1.bf16.msra.mxu0 %v1196
    %1335 = vmatprep.subr.bf16.mxu0 %v1205
    %1336 = vmatpush1.bf16.msra.mxu0 %v1204
    %1337 = vmatprep.subr.bf16.mxu0 %v1213
    %1338 = vmatpush1.bf16.msra.mxu0 %v1212
    %1339 = vmatprep.subr.bf16.mxu0 0
    %1340 = vmatpush1.bf16.msra.mxu0 0
    %1341 = vmatprep.subr.bf16.mxu0 0
    %1342 = vmatpush1.bf16.msra.mxu0 0
    %1343 = vmatprep.subr.bf16.mxu0 0
    %1344 = vmatpush1.bf16.msra.mxu0 0
    %1345 = vmatprep.subr.bf16.mxu0 0
    %1346 = vmatpush1.bf16.msra.mxu0 0
    %1347 = vmatprep.subr.bf16.mxu0 0
    %1348 = vmatpush1.bf16.msra.mxu0 0
    %1349 = vmatprep.subr.bf16.mxu0 0
    %1350 = vmatpush1.bf16.msra.mxu0 0
    %1351 = vmatprep.subr.bf16.mxu0 0
    %1352 = vmatpush1.bf16.msra.mxu0 0
    %1353 = vmatprep.subr.bf16.mxu0 0
    %1354 = vmatpush1.bf16.msra.mxu0 0
    %1355 = vmatprep.mubr.bf16.mxu0 0
    %1356 = vmatmul.mubr.bf16.gmra.mrb[0].mxu0 %v411
    %v1357 = vpop.f32.mrb[0].mxu0
    %v1358 = vadd.f32 %v874, %v1357
    %v1359 = vpop.f32.mrb[0].mxu0
    %v1360 = vadd.f32 %v876, %v1359
    %v1361 = vpop.f32.mrb[0].mxu0
    %v1362 = vpop.f32.mrb[0].mxu0
    %1363 = vdwg.mxu0
    %1364 = vmatprep.subr.bf16.mxu0 %v1159
    %1365 = vmatpush1.bf16.msra.mxu0 %v1158
    %1366 = vmatprep.subr.bf16.mxu0 %v1167
    %1367 = vmatpush1.bf16.msra.mxu0 %v1166
    %1368 = vmatprep.subr.bf16.mxu0 %v1175
    %1369 = vmatpush1.bf16.msra.mxu0 %v1174
    %1370 = vmatprep.subr.bf16.mxu0 %v1183
    %1371 = vmatpush1.bf16.msra.mxu0 %v1182
    %1372 = vmatprep.subr.bf16.mxu0 %v1191
    %1373 = vmatpush1.bf16.msra.mxu0 %v1190
    %1374 = vmatprep.subr.bf16.mxu0 %v1199
    %1375 = vmatpush1.bf16.msra.mxu0 %v1198
    %1376 = vmatprep.subr.bf16.mxu0 %v1207
    %1377 = vmatpush1.bf16.msra.mxu0 %v1206
    %1378 = vmatprep.subr.bf16.mxu0 %v1215
    %1379 = vmatpush1.bf16.msra.mxu0 %v1214
    %1380 = vmatprep.subr.bf16.mxu0 0
    %1381 = vmatpush1.bf16.msra.mxu0 0
    %1382 = vmatprep.subr.bf16.mxu0 0
    %1383 = vmatpush1.bf16.msra.mxu0 0
    %1384 = vmatprep.subr.bf16.mxu0 0
    %1385 = vmatpush1.bf16.msra.mxu0 0
    %1386 = vmatprep.subr.bf16.mxu0 0
    %1387 = vmatpush1.bf16.msra.mxu0 0
    %1388 = vmatprep.subr.bf16.mxu0 0
    %1389 = vmatpush1.bf16.msra.mxu0 0
    %1390 = vmatprep.subr.bf16.mxu0 0
    %1391 = vmatpush1.bf16.msra.mxu0 0
    %1392 = vmatprep.subr.bf16.mxu0 0
    %1393 = vmatpush1.bf16.msra.mxu0 0
    %1394 = vmatprep.subr.bf16.mxu0 0
    %1395 = vmatpush1.bf16.msra.mxu0 0
    %1396 = vmatprep.mubr.bf16.mxu0 0
    %1397 = vmatmul.mubr.bf16.gmra.mrb[0].mxu0 %v411
    %v1398 = vpop.f32.mrb[0].mxu0
    %v1399 = vadd.f32 %v915, %v1398
    %v1400 = vpop.f32.mrb[0].mxu0
    %v1401 = vadd.f32 %v917, %v1400
    %v1402 = vpop.f32.mrb[0].mxu0
    %v1403 = vpop.f32.mrb[0].mxu0
    %1404 = vdwg.mxu0
    %1405 = vmatprep.subr.bf16.mxu0 %v1161
    %1406 = vmatpush1.bf16.msra.mxu0 %v1160
    %1407 = vmatprep.subr.bf16.mxu0 %v1169
    %1408 = vmatpush1.bf16.msra.mxu0 %v1168
    %1409 = vmatprep.subr.bf16.mxu0 %v1177
    %1410 = vmatpush1.bf16.msra.mxu0 %v1176
    %1411 = vmatprep.subr.bf16.mxu0 %v1185
    %1412 = vmatpush1.bf16.msra.mxu0 %v1184
    %1413 = vmatprep.subr.bf16.mxu0 %v1193
    %1414 = vmatpush1.bf16.msra.mxu0 %v1192
    %1415 = vmatprep.subr.bf16.mxu0 %v1201
    %1416 = vmatpush1.bf16.msra.mxu0 %v1200
    %1417 = vmatprep.subr.bf16.mxu0 %v1209
    %1418 = vmatpush1.bf16.msra.mxu0 %v1208
    %1419 = vmatprep.subr.bf16.mxu0 %v1217
    %1420 = vmatpush1.bf16.msra.mxu0 %v1216
    %1421 = vmatprep.subr.bf16.mxu0 0
    %1422 = vmatpush1.bf16.msra.mxu0 0
    %1423 = vmatprep.subr.bf16.mxu0 0
    %1424 = vmatpush1.bf16.msra.mxu0 0
    %1425 = vmatprep.subr.bf16.mxu0 0
    %1426 = vmatpush1.bf16.msra.mxu0 0
    %1427 = vmatprep.subr.bf16.mxu0 0
    %1428 = vmatpush1.bf16.msra.mxu0 0
    %1429 = vmatprep.subr.bf16.mxu0 0
    %1430 = vmatpush1.bf16.msra.mxu0 0
    %1431 = vmatprep.subr.bf16.mxu0 0
    %1432 = vmatpush1.bf16.msra.mxu0 0
    %1433 = vmatprep.subr.bf16.mxu0 0
    %1434 = vmatpush1.bf16.msra.mxu0 0
    %1435 = vmatprep.subr.bf16.mxu0 0
    %1436 = vmatpush1.bf16.msra.mxu0 0
    %1437 = vmatprep.mubr.bf16.mxu0 0
    %1438 = vmatmul.mubr.bf16.gmra.mrb[0].mxu0 %v411
    %v1439 = vpop.f32.mrb[0].mxu0
    %v1440 = vadd.f32 %v956, %v1439
    %v1441 = vpop.f32.mrb[0].mxu0
    %v1442 = vadd.f32 %v958, %v1441
    %v1443 = vpop.f32.mrb[0].mxu0
    %v1444 = vpop.f32.mrb[0].mxu0
    %1445 = vdwg.mxu0
    %s1446 = scalar_lea.vmem %s3, 195
    %v1447 = vld [vmem:[%s1446] ss:$8 sm:$0xf]
    %v1448 = vld [vmem:[%s1446] ss:$8 sm:$0xf0]
    %v1449 = vor.u32 %v1447, %v1448
    %v1451 = vlaneseq
    %v1452 = vshrl.u32 %v1451, 7
    %v1453 = vsub.s32 0, %v1452
    %v1454 = vrot.slane %v1449, %v1453
    %v1455 = vlaneseq
    %v1456 = vshrl.u32 %v1455, 7
    %v1457 = vsub.s32 1, %v1456
    %v1458 = vrot.slane %v1449, %v1457
    %v1459 = vlaneseq
    %v1460 = vshrl.u32 %v1459, 7
    %v1461 = vsub.s32 2, %v1460
    %v1462 = vrot.slane %v1449, %v1461
    %v1463 = vlaneseq
    %v1464 = vshrl.u32 %v1463, 7
    %v1465 = vsub.s32 3, %v1464
    %v1466 = vrot.slane %v1449, %v1465
    %v1467 = vlaneseq
    %v1468 = vshrl.u32 %v1467, 7
    %v1469 = vsub.s32 4, %v1468
    %v1470 = vrot.slane %v1449, %v1469
    %v1471 = vlaneseq
    %v1472 = vshrl.u32 %v1471, 7
    %v1473 = vsub.s32 5, %v1472
    %v1474 = vrot.slane %v1449, %v1473
    %v1475 = vlaneseq
    %v1476 = vshrl.u32 %v1475, 7
    %v1477 = vsub.s32 6, %v1476
    %v1478 = vrot.slane %v1449, %v1477
    %v1479 = vlaneseq
    %v1480 = vshrl.u32 %v1479, 7
    %v1481 = vsub.s32 7, %v1480
    %v1482 = vrot.slane %v1449, %v1481
    %v1491 = vadd.f32 %v1317, %v1454
    %v1492 = vadd.f32 %v1319, %v1458
    %v1493 = vadd.f32 %v1358, %v1462
    %v1494 = vadd.f32 %v1360, %v1466
    %v1495 = vadd.f32 %v1399, %v1470
    %v1496 = vadd.f32 %v1401, %v1474
    %v1497 = vadd.f32 %v1440, %v1478
    %v1498 = vadd.f32 %v1442, %v1482
    %v1499 = vld [vmem:[%s3 + $0x85] ss:$0 sm:$0xff]
    %1501 = vset.pattern.permute.xlu0 0
    %1502 = vperm.xlu0 %1501, %v107
    %v1503 = vpop.permute.xlu0 %1502
    %v1505 = vmul.f32 %v1503, %v1499
    %v1506 = vld [vmem:[%s3 + $0x86] ss:$0 sm:$0xff]
    %1507 = vset.pattern.permute.xlu0 1
    %1508 = vperm.xlu0 %1507, %v107
    %v1509 = vpop.permute.xlu0 %1508
    %v1511 = vmul.f32 %v1509, %v1506
    %v1512 = vadd.f32 %v1505, %v1511
    %v1513 = vld [vmem:[%s3 + $0x87] ss:$0 sm:$0xff]
    %1514 = vset.pattern.permute.xlu0 2
    %1515 = vperm.xlu0 %1514, %v107
    %v1516 = vpop.permute.xlu0 %1515
    %v1518 = vmul.f32 %v1516, %v1513
    %v1519 = vadd.f32 %v1512, %v1518
    %v1520 = vadd.f32 %v1519, %v1491
    %v1521 = vxor.u32 %v1520, 2147483648
    %v1522 = vmul.f32 %v1521, 1.442695
    %v1523 = vpow.pop %v1522
    %v1524 = vadd.f32 %v1523, 1.0
    %v1525 = vrcp.pop %v1524
    %v1526 = vmul.f32 1.0, %v1525
    %v1527 = vmul.f32 %v1520, %v1526
    %1528 = vadd.xlane.f32.xlu0 %v1527
    %v1529 = vpop.xlane.xlu0 %1528
    %v1530 = vrcp.pop 128.0
    %v1531 = vmul.f32 %v1529, %v1530
    %v1532 = vsub.f32 %v1527, %v1531
    %v1533 = vmul.f32 %v1532, %v1532
    %1534 = vadd.xlane.f32.xlu0 %v1533
    %v1535 = vpop.xlane.xlu0 %1534
    %v1536 = vmul.f32 %v1535, %v1530
    %v1537 = vadd.f32 %v1536, 1e-05
    %v1538 = vrsqrt.pop %v1537
    %v1539 = vmul.f32 %v1532, %v1538
    %v1540 = vld [vmem:[%s3 + $0x2] ss:$0 sm:$0xff]
    %v1541 = vmul.f32 %v1539, %v1540
    %v1542 = vld [vmem:[%s3 + $0x3] ss:$0 sm:$0xff]
    %v1543 = vadd.f32 %v1541, %v1542
    %v1544 = vadd.f32 %v1543, %v1492
    %v1545 = vld [vmem:[#allocation7] sm:$0xff]
    %v1546 = vld [vmem:[#allocation7 + $0x8] sm:$0xff]
    %v1547 = vld [vmem:[#allocation7 + $0x10] sm:$0xff]
    %v1548 = vld [vmem:[#allocation7 + $0x18] sm:$0xff]
    %v1549 = vld [vmem:[#allocation7 + $0x20] sm:$0xff]
    %v1550 = vld [vmem:[#allocation7 + $0x28] sm:$0xff]
    %v1551 = vld [vmem:[#allocation7 + $0x30] sm:$0xff]
    %v1552 = vld [vmem:[#allocation7 + $0x38] sm:$0xff]
    %v1553 = vld [vmem:[#allocation7 + $0x40] sm:$0xff]
    %v1554 = vld [vmem:[#allocation7 + $0x48] sm:$0xff]
    %v1555 = vld [vmem:[#allocation7 + $0x50] sm:$0xff]
    %v1556 = vld [vmem:[#allocation7 + $0x58] sm:$0xff]
    %v1557 = vld [vmem:[#allocation7 + $0x60] sm:$0xff]
    %v1558 = vld [vmem:[#allocation7 + $0x68] sm:$0xff]
    %v1559 = vld [vmem:[#allocation7 + $0x70] sm:$0xff]
    %v1560 = vld [vmem:[#allocation7 + $0x78] sm:$0xff]
    %v1561 = vpack.c.bf16 %v1544, %v1544
    %s1562 = scalar_lea.vmem %s3, 4
    %v1563 = vld [vmem:[%s1562] ss:$8 sm:$0x3]
    %v1565 = vlaneseq
    %v1566 = vshrl.u32 %v1565, 7
    %v1567 = vsub.s32 0, %v1566
    %v1568 = vrot.slane %v1563, %v1567
    %v1569 = vlaneseq
    %v1570 = vshrl.u32 %v1569, 7
    %v1571 = vsub.s32 1, %v1570
    %v1572 = vrot.slane %v1563, %v1571
    %v1591 = vunpack.c.l.b16 %v1545
    %v1592 = vunpack.c.h.b16 %v1545
    %v1593 = vunpack.c.l.b16 %v1546
    %v1594 = vunpack.c.h.b16 %v1546
    %v1595 = vunpack.c.l.b16 %v1547
    %v1596 = vunpack.c.h.b16 %v1547
    %v1597 = vunpack.c.l.b16 %v1548
    %v1598 = vunpack.c.h.b16 %v1548
    %v1599 = vunpack.c.l.b16 %v1549
    %v1600 = vunpack.c.h.b16 %v1549
    %v1601 = vunpack.c.l.b16 %v1550
    %v1602 = vunpack.c.h.b16 %v1550
    %v1603 = vunpack.c.l.b16 %v1551
    %v1604 = vunpack.c.h.b16 %v1551
    %v1605 = vunpack.c.l.b16 %v1552
    %v1606 = vunpack.c.h.b16 %v1552
    %v1607 = vunpack.c.l.b16 %v1553
    %v1608 = vunpack.c.h.b16 %v1553
    %v1609 = vunpack.c.l.b16 %v1554
    %v1610 = vunpack.c.h.b16 %v1554
    %v1611 = vunpack.c.l.b16 %v1555
    %v1612 = vunpack.c.h.b16 %v1555
    %v1613 = vunpack.c.l.b16 %v1556
    %v1614 = vunpack.c.h.b16 %v1556
    %v1615 = vunpack.c.l.b16 %v1557
    %v1616 = vunpack.c.h.b16 %v1557
    %v1617 = vunpack.c.l.b16 %v1558
    %v1618 = vunpack.c.h.b16 %v1558
    %v1619 = vunpack.c.l.b16 %v1559
    %v1620 = vunpack.c.h.b16 %v1559
    %v1621 = vunpack.c.l.b16 %v1560
    %v1622 = vunpack.c.h.b16 %v1560
    %v1623 = vpack.c.b16 %v1593, %v1591
    %v1624 = vpack.c.b16 %v1594, %v1592
    %v1625 = vpack.c.b16 %v1597, %v1595
    %v1626 = vpack.c.b16 %v1598, %v1596
    %v1627 = vpack.c.b16 %v1601, %v1599
    %v1628 = vpack.c.b16 %v1602, %v1600
    %v1629 = vpack.c.b16 %v1605, %v1603
    %v1630 = vpack.c.b16 %v1606, %v1604
    %v1631 = vpack.c.b16 %v1609, %v1607
    %v1632 = vpack.c.b16 %v1610, %v1608
    %v1633 = vpack.c.b16 %v1613, %v1611
    %v1634 = vpack.c.b16 %v1614, %v1612
    %v1635 = vpack.c.b16 %v1617, %v1615
    %v1636 = vpack.c.b16 %v1618, %v1616
    %v1637 = vpack.c.b16 %v1621, %v1619
    %v1638 = vpack.c.b16 %v1622, %v1620
    %1655 = vmatprep.subr.bf16.mxu0 %v1624
    %1656 = vmatpush1.bf16.msra.mxu0 %v1623
    %1657 = vmatprep.subr.bf16.mxu0 %v1626
    %1658 = vmatpush1.bf16.msra.mxu0 %v1625
    %1659 = vmatprep.subr.bf16.mxu0 %v1628
    %1660 = vmatpush1.bf16.msra.mxu0 %v1627
    %1661 = vmatprep.subr.bf16.mxu0 %v1630
    %1662 = vmatpush1.bf16.msra.mxu0 %v1629
    %1663 = vmatprep.subr.bf16.mxu0 %v1632
    %1664 = vmatpush1.bf16.msra.mxu0 %v1631
    %1665 = vmatprep.subr.bf16.mxu0 %v1634
    %1666 = vmatpush1.bf16.msra.mxu0 %v1633
    %1667 = vmatprep.subr.bf16.mxu0 %v1636
    %1668 = vmatpush1.bf16.msra.mxu0 %v1635
    %1669 = vmatprep.subr.bf16.mxu0 %v1638
    %1670 = vmatpush1.bf16.msra.mxu0 %v1637
    %1671 = vmatprep.subr.bf16.mxu0 0
    %1672 = vmatpush1.bf16.msra.mxu0 0
    %1673 = vmatprep.subr.bf16.mxu0 0
    %1674 = vmatpush1.bf16.msra.mxu0 0
    %1675 = vmatprep.subr.bf16.mxu0 0
    %1676 = vmatpush1.bf16.msra.mxu0 0
    %1677 = vmatprep.subr.bf16.mxu0 0
    %1678 = vmatpush1.bf16.msra.mxu0 0
    %1679 = vmatprep.subr.bf16.mxu0 0
    %1680 = vmatpush1.bf16.msra.mxu0 0
    %1681 = vmatprep.subr.bf16.mxu0 0
    %1682 = vmatpush1.bf16.msra.mxu0 0
    %1683 = vmatprep.subr.bf16.mxu0 0
    %1684 = vmatpush1.bf16.msra.mxu0 0
    %1685 = vmatprep.subr.bf16.mxu0 0
    %1686 = vmatpush1.bf16.msra.mxu0 0
    %1687 = vmatprep.mubr.bf16.mxu0 0
    %1688 = vmatmul.mubr.bf16.gmra.mrb[0].mxu0 %v1561
    %v1689 = vpop.f32.mrb[0].mxu0
    %v1690 = vadd.f32 %v1568, %v1689
    %v1691 = vpop.f32.mrb[0].mxu0
    %v1692 = vadd.f32 %v1572, %v1691
    %v1693 = vpop.f32.mrb[0].mxu0
    %v1694 = vpop.f32.mrb[0].mxu0
    %1695 = vdwg.mxu0
    %v1696 = vxor.u32 %v1690, 2147483648
    %v1697 = vxor.u32 %v1692, 2147483648
    %v1698 = vmul.f32 %v1696, 1.442695
    %v1699 = vpow.pop %v1698
    %v1700 = vmul.f32 %v1697, 1.442695
    %v1701 = vpow.pop %v1700
    %v1702 = vadd.f32 %v1699, 1.0
    %v1703 = vadd.f32 %v1701, 1.0
    %v1704 = vrcp.pop %v1702
    %v1705 = vmul.f32 1.0, %v1704
    %v1706 = vrcp.pop %v1703
    %v1707 = vmul.f32 1.0, %v1706
    %v1708 = vmul.f32 %v1690, %v1705
    %v1709 = vmul.f32 %v1692, %v1707
    %v1710 = vadd.f32 %v1708, %v1709
    %1711 = vadd.xlane.f32.xlu0 %v1710
    %v1712 = vpop.xlane.xlu0 %1711
    %v1713 = vrcp.pop 256.0
    %v1714 = vmul.f32 %v1712, %v1713
    %v1715 = vsub.f32 %v1708, %v1714
    %v1716 = vsub.f32 %v1709, %v1714
    %v1717 = vmul.f32 %v1715, %v1715
    %v1718 = vmul.f32 %v1716, %v1716
    %v1719 = vadd.f32 %v1717, %v1718
    %1720 = vadd.xlane.f32.xlu0 %v1719
    %v1721 = vpop.xlane.xlu0 %1720
    %v1722 = vmul.f32 %v1721, %v1713
    %v1723 = vadd.f32 %v1722, 1e-05
    %v1724 = vrsqrt.pop %v1723
    %v1725 = vmul.f32 %v1715, %v1724
    %v1726 = vmul.f32 %v1716, %v1724
    %s1727 = scalar_lea.vmem %s3, 5
    %v1728 = vld [vmem:[%s1727] ss:$8 sm:$0x3]
    %v1730 = vlaneseq
    %v1731 = vshrl.u32 %v1730, 7
    %v1732 = vsub.s32 0, %v1731
    %v1733 = vrot.slane %v1728, %v1732
    %v1734 = vlaneseq
    %v1735 = vshrl.u32 %v1734, 7
    %v1736 = vsub.s32 1, %v1735
    %v1737 = vrot.slane %v1728, %v1736
    %v1740 = vmul.f32 %v1725, %v1733
    %v1741 = vmul.f32 %v1726, %v1737
    %s1742 = scalar_lea.vmem %s3, 6
    %v1743 = vld [vmem:[%s1742] ss:$8 sm:$0x3]
    %v1745 = vlaneseq
    %v1746 = vshrl.u32 %v1745, 7
    %v1747 = vsub.s32 0, %v1746
    %v1748 = vrot.slane %v1743, %v1747
    %v1749 = vlaneseq
    %v1750 = vshrl.u32 %v1749, 7
    %v1751 = vsub.s32 1, %v1750
    %v1752 = vrot.slane %v1743, %v1751
    %v1755 = vadd.f32 %v1740, %v1748
    %v1756 = vadd.f32 %v1741, %v1752
    %v1757 = vadd.f32 %v1755, %v1493
    %v1758 = vadd.f32 %v1756, %v1494
    %v1759 = vld [vmem:[#allocation6] sm:$0xff]
    %v1760 = vld [vmem:[#allocation6 + $0x8] sm:$0xff]
    %v1761 = vld [vmem:[#allocation6 + $0x10] sm:$0xff]
    %v1762 = vld [vmem:[#allocation6 + $0x18] sm:$0xff]
    %v1763 = vld [vmem:[#allocation6 + $0x20] sm:$0xff]
    %v1764 = vld [vmem:[#allocation6 + $0x28] sm:$0xff]
    %v1765 = vld [vmem:[#allocation6 + $0x30] sm:$0xff]
    %v1766 = vld [vmem:[#allocation6 + $0x38] sm:$0xff]
    %v1767 = vld [vmem:[#allocation6 + $0x40] sm:$0xff]
    %v1768 = vld [vmem:[#allocation6 + $0x48] sm:$0xff]
    %v1769 = vld [vmem:[#allocation6 + $0x50] sm:$0xff]
    %v1770 = vld [vmem:[#allocation6 + $0x58] sm:$0xff]
    %v1771 = vld [vmem:[#allocation6 + $0x60] sm:$0xff]
    %v1772 = vld [vmem:[#allocation6 + $0x68] sm:$0xff]
    %v1773 = vld [vmem:[#allocation6 + $0x70] sm:$0xff]
    %v1774 = vld [vmem:[#allocation6 + $0x78] sm:$0xff]
    %v1775 = vld [vmem:[#allocation6 + $0x80] sm:$0xff]
    %v1776 = vld [vmem:[#allocation6 + $0x88] sm:$0xff]
    %v1777 = vld [vmem:[#allocation6 + $0x90] sm:$0xff]
    %v1778 = vld [vmem:[#allocation6 + $0x98] sm:$0xff]
    %v1779 = vld [vmem:[#allocation6 + $0xa0] sm:$0xff]
    %v1780 = vld [vmem:[#allocation6 + $0xa8] sm:$0xff]
    %v1781 = vld [vmem:[#allocation6 + $0xb0] sm:$0xff]
    %v1782 = vld [vmem:[#allocation6 + $0xb8] sm:$0xff]
    %v1783 = vld [vmem:[#allocation6 + $0xc0] sm:$0xff]
    %v1784 = vld [vmem:[#allocation6 + $0xc8] sm:$0xff]
    %v1785 = vld [vmem:[#allocation6 + $0xd0] sm:$0xff]
    %v1786 = vld [vmem:[#allocation6 + $0xd8] sm:$0xff]
    %v1787 = vld [vmem:[#allocation6 + $0xe0] sm:$0xff]
    %v1788 = vld [vmem:[#allocation6 + $0xe8] sm:$0xff]
    %v1789 = vld [vmem:[#allocation6 + $0xf0] sm:$0xff]
    %v1790 = vld [vmem:[#allocation6 + $0xf8] sm:$0xff]
    %v1791 = vpack.c.bf16 %v1757, %v1757
    %v1792 = vpack.c.bf16 %v1758, %v1758
    %s1793 = scalar_lea.vmem %s3, 7
    %v1794 = vld [vmem:[%s1793] ss:$8 sm:$0x3]
    %v1796 = vlaneseq
    %v1797 = vshrl.u32 %v1796, 7
    %v1798 = vsub.s32 0, %v1797
    %v1799 = vrot.slane %v1794, %v1798
    %v1800 = vlaneseq
    %v1801 = vshrl.u32 %v1800, 7
    %v1802 = vsub.s32 1, %v1801
    %v1803 = vrot.slane %v1794, %v1802
    %v1838 = vunpack.c.l.b16 %v1759
    %v1839 = vunpack.c.h.b16 %v1759
    %v1840 = vunpack.c.l.b16 %v1760
    %v1841 = vunpack.c.h.b16 %v1760
    %v1842 = vunpack.c.l.b16 %v1761
    %v1843 = vunpack.c.h.b16 %v1761
    %v1844 = vunpack.c.l.b16 %v1762
    %v1845 = vunpack.c.h.b16 %v1762
    %v1846 = vunpack.c.l.b16 %v1763
    %v1847 = vunpack.c.h.b16 %v1763
    %v1848 = vunpack.c.l.b16 %v1764
    %v1849 = vunpack.c.h.b16 %v1764
    %v1850 = vunpack.c.l.b16 %v1765
    %v1851 = vunpack.c.h.b16 %v1765
    %v1852 = vunpack.c.l.b16 %v1766
    %v1853 = vunpack.c.h.b16 %v1766
    %v1854 = vunpack.c.l.b16 %v1767
    %v1855 = vunpack.c.h.b16 %v1767
    %v1856 = vunpack.c.l.b16 %v1768
    %v1857 = vunpack.c.h.b16 %v1768
    %v1858 = vunpack.c.l.b16 %v1769
    %v1859 = vunpack.c.h.b16 %v1769
    %v1860 = vunpack.c.l.b16 %v1770
    %v1861 = vunpack.c.h.b16 %v1770
    %v1862 = vunpack.c.l.b16 %v1771
    %v1863 = vunpack.c.h.b16 %v1771
    %v1864 = vunpack.c.l.b16 %v1772
    %v1865 = vunpack.c.h.b16 %v1772
    %v1866 = vunpack.c.l.b16 %v1773
    %v1867 = vunpack.c.h.b16 %v1773
    %v1868 = vunpack.c.l.b16 %v1774
    %v1869 = vunpack.c.h.b16 %v1774
    %v1870 = vunpack.c.l.b16 %v1775
    %v1871 = vunpack.c.h.b16 %v1775
    %v1872 = vunpack.c.l.b16 %v1776
    %v1873 = vunpack.c.h.b16 %v1776
    %v1874 = vunpack.c.l.b16 %v1777
    %v1875 = vunpack.c.h.b16 %v1777
    %v1876 = vunpack.c.l.b16 %v1778
    %v1877 = vunpack.c.h.b16 %v1778
    %v1878 = vunpack.c.l.b16 %v1779
    %v1879 = vunpack.c.h.b16 %v1779
    %v1880 = vunpack.c.l.b16 %v1780
    %v1881 = vunpack.c.h.b16 %v1780
    %v1882 = vunpack.c.l.b16 %v1781
    %v1883 = vunpack.c.h.b16 %v1781
    %v1884 = vunpack.c.l.b16 %v1782
    %v1885 = vunpack.c.h.b16 %v1782
    %v1886 = vunpack.c.l.b16 %v1783
    %v1887 = vunpack.c.h.b16 %v1783
    %v1888 = vunpack.c.l.b16 %v1784
    %v1889 = vunpack.c.h.b16 %v1784
    %v1890 = vunpack.c.l.b16 %v1785
    %v1891 = vunpack.c.h.b16 %v1785
    %v1892 = vunpack.c.l.b16 %v1786
    %v1893 = vunpack.c.h.b16 %v1786
    %v1894 = vunpack.c.l.b16 %v1787
    %v1895 = vunpack.c.h.b16 %v1787
    %v1896 = vunpack.c.l.b16 %v1788
    %v1897 = vunpack.c.h.b16 %v1788
    %v1898 = vunpack.c.l.b16 %v1789
    %v1899 = vunpack.c.h.b16 %v1789
    %v1900 = vunpack.c.l.b16 %v1790
    %v1901 = vunpack.c.h.b16 %v1790
    %v1902 = vpack.c.b16 %v1840, %v1838
    %v1903 = vpack.c.b16 %v1841, %v1839
    %v1904 = vpack.c.b16 %v1844, %v1842
    %v1905 = vpack.c.b16 %v1845, %v1843
    %v1906 = vpack.c.b16 %v1848, %v1846
    %v1907 = vpack.c.b16 %v1849, %v1847
    %v1908 = vpack.c.b16 %v1852, %v1850
    %v1909 = vpack.c.b16 %v1853, %v1851
    %v1910 = vpack.c.b16 %v1856, %v1854
    %v1911 = vpack.c.b16 %v1857, %v1855
    %v1912 = vpack.c.b16 %v1860, %v1858
    %v1913 = vpack.c.b16 %v1861, %v1859
    %v1914 = vpack.c.b16 %v1864, %v1862
    %v1915 = vpack.c.b16 %v1865, %v1863
    %v1916 = vpack.c.b16 %v1868, %v1866
    %v1917 = vpack.c.b16 %v1869, %v1867
    %v1918 = vpack.c.b16 %v1872, %v1870
    %v1919 = vpack.c.b16 %v1873, %v1871
    %v1920 = vpack.c.b16 %v1876, %v1874
    %v1921 = vpack.c.b16 %v1877, %v1875
    %v1922 = vpack.c.b16 %v1880, %v1878
    %v1923 = vpack.c.b16 %v1881, %v1879
    %v1924 = vpack.c.b16 %v1884, %v1882
    %v1925 = vpack.c.b16 %v1885, %v1883
    %v1926 = vpack.c.b16 %v1888, %v1886
    %v1927 = vpack.c.b16 %v1889, %v1887
    %v1928 = vpack.c.b16 %v1892, %v1890
    %v1929 = vpack.c.b16 %v1893, %v1891
    %v1930 = vpack.c.b16 %v1896, %v1894
    %v1931 = vpack.c.b16 %v1897, %v1895
    %v1932 = vpack.c.b16 %v1900, %v1898
    %v1933 = vpack.c.b16 %v1901, %v1899
    %1966 = vmatprep.subr.bf16.mxu0 %v1903
    %1967 = vmatpush1.bf16.msra.mxu0 %v1902
    %1968 = vmatprep.subr.bf16.mxu0 %v1905
    %1969 = vmatpush1.bf16.msra.mxu0 %v1904
    %1970 = vmatprep.subr.bf16.mxu0 %v1907
    %1971 = vmatpush1.bf16.msra.mxu0 %v1906
    %1972 = vmatprep.subr.bf16.mxu0 %v1909
    %1973 = vmatpush1.bf16.msra.mxu0 %v1908
    %1974 = vmatprep.subr.bf16.mxu0 %v1911
    %1975 = vmatpush1.bf16.msra.mxu0 %v1910
    %1976 = vmatprep.subr.bf16.mxu0 %v1913
    %1977 = vmatpush1.bf16.msra.mxu0 %v1912
    %1978 = vmatprep.subr.bf16.mxu0 %v1915
    %1979 = vmatpush1.bf16.msra.mxu0 %v1914
    %1980 = vmatprep.subr.bf16.mxu0 %v1917
    %1981 = vmatpush1.bf16.msra.mxu0 %v1916
    %1982 = vmatprep.subr.bf16.mxu0 %v1919
    %1983 = vmatpush1.bf16.msra.mxu0 %v1918
    %1984 = vmatprep.subr.bf16.mxu0 %v1921
    %1985 = vmatpush1.bf16.msra.mxu0 %v1920
    %1986 = vmatprep.subr.bf16.mxu0 %v1923
    %1987 = vmatpush1.bf16.msra.mxu0 %v1922
    %1988 = vmatprep.subr.bf16.mxu0 %v1925
    %1989 = vmatpush1.bf16.msra.mxu0 %v1924
    %1990 = vmatprep.subr.bf16.mxu0 %v1927
    %1991 = vmatpush1.bf16.msra.mxu0 %v1926
    %1992 = vmatprep.subr.bf16.mxu0 %v1929
    %1993 = vmatpush1.bf16.msra.mxu0 %v1928
    %1994 = vmatprep.subr.bf16.mxu0 %v1931
    %1995 = vmatpush1.bf16.msra.mxu0 %v1930
    %1996 = vmatprep.subr.bf16.mxu0 %v1933
    %1997 = vmatpush1.bf16.msra.mxu0 %v1932
    %1998 = vmatprep.mubr.bf16.mxu0 %v1792
    %1999 = vmatmul.mubr.bf16.gmra.mrb[0].mxu0 %v1791
    %v2000 = vpop.f32.mrb[0].mxu0
    %v2001 = vadd.f32 %v1799, %v2000
    %v2002 = vpop.f32.mrb[0].mxu0
    %v2003 = vadd.f32 %v1803, %v2002
    %v2004 = vpop.f32.mrb[0].mxu0
    %v2005 = vpop.f32.mrb[0].mxu0
    %2006 = vdwg.mxu0
    %v2007 = vxor.u32 %v2001, 2147483648
    %v2008 = vxor.u32 %v2003, 2147483648
    %v2009 = vmul.f32 %v2007, 1.442695
    %v2010 = vpow.pop %v2009
    %v2011 = vmul.f32 %v2008, 1.442695
    %v2012 = vpow.pop %v2011
    %v2013 = vadd.f32 %v2010, 1.0
    %v2014 = vadd.f32 %v2012, 1.0
    %v2015 = vrcp.pop %v2013
    %v2016 = vmul.f32 1.0, %v2015
    %v2017 = vrcp.pop %v2014
    %v2018 = vmul.f32 1.0, %v2017
    %v2019 = vmul.f32 %v2001, %v2016
    %v2020 = vmul.f32 %v2003, %v2018
    %v2021 = vadd.f32 %v2019, %v2020
    %2022 = vadd.xlane.f32.xlu0 %v2021
    %v2023 = vpop.xlane.xlu0 %2022
    %v2024 = vmul.f32 %v2023, %v1713
    %v2025 = vsub.f32 %v2019, %v2024
    %v2026 = vsub.f32 %v2020, %v2024
    %v2027 = vmul.f32 %v2025, %v2025
    %v2028 = vmul.f32 %v2026, %v2026
    %v2029 = vadd.f32 %v2027, %v2028
    %2030 = vadd.xlane.f32.xlu0 %v2029
    %v2031 = vpop.xlane.xlu0 %2030
    %v2032 = vmul.f32 %v2031, %v1713
    %v2033 = vadd.f32 %v2032, 1e-05
    %v2034 = vrsqrt.pop %v2033
    %v2035 = vmul.f32 %v2025, %v2034
    %v2036 = vmul.f32 %v2026, %v2034
    %s2037 = scalar_lea.vmem %s3, 64
    %v2038 = vld [vmem:[%s2037] ss:$8 sm:$0x3]
    %v2040 = vlaneseq
    %v2041 = vshrl.u32 %v2040, 7
    %v2042 = vsub.s32 0, %v2041
    %v2043 = vrot.slane %v2038, %v2042
    %v2044 = vlaneseq
    %v2045 = vshrl.u32 %v2044, 7
    %v2046 = vsub.s32 1, %v2045
    %v2047 = vrot.slane %v2038, %v2046
    %v2050 = vmul.f32 %v2035, %v2043
    %v2051 = vmul.f32 %v2036, %v2047
    %s2052 = scalar_lea.vmem %s3, 65
    %v2053 = vld [vmem:[%s2052] ss:$8 sm:$0x3]
    %v2055 = vlaneseq
    %v2056 = vshrl.u32 %v2055, 7
    %v2057 = vsub.s32 0, %v2056
    %v2058 = vrot.slane %v2053, %v2057
    %v2059 = vlaneseq
    %v2060 = vshrl.u32 %v2059, 7
    %v2061 = vsub.s32 1, %v2060
    %v2062 = vrot.slane %v2053, %v2061
    %v2065 = vadd.f32 %v2050, %v2058
    %v2066 = vadd.f32 %v2051, %v2062
    %v2067 = vadd.f32 %v2065, %v1495
    %v2068 = vadd.f32 %v2066, %v1496
    %s2069 = scalar_lea.vmem [#allocation6], 256
    %v2070 = vld [vmem:[%s2069] sm:$0xff]
    %v2071 = vld [vmem:[%s2069 + $0x8] sm:$0xff]
    %v2072 = vld [vmem:[%s2069 + $0x10] sm:$0xff]
    %v2073 = vld [vmem:[%s2069 + $0x18] sm:$0xff]
    %v2074 = vld [vmem:[%s2069 + $0x20] sm:$0xff]
    %v2075 = vld [vmem:[%s2069 + $0x28] sm:$0xff]
    %v2076 = vld [vmem:[%s2069 + $0x30] sm:$0xff]
    %v2077 = vld [vmem:[%s2069 + $0x38] sm:$0xff]
    %v2078 = vld [vmem:[%s2069 + $0x40] sm:$0xff]
    %v2079 = vld [vmem:[%s2069 + $0x48] sm:$0xff]
    %v2080 = vld [vmem:[%s2069 + $0x50] sm:$0xff]
    %v2081 = vld [vmem:[%s2069 + $0x58] sm:$0xff]
    %v2082 = vld [vmem:[%s2069 + $0x60] sm:$0xff]
    %v2083 = vld [vmem:[%s2069 + $0x68] sm:$0xff]
    %v2084 = vld [vmem:[%s2069 + $0x70] sm:$0xff]
    %v2085 = vld [vmem:[%s2069 + $0x78] sm:$0xff]
    %v2086 = vld [vmem:[%s2069 + $0x80] sm:$0xff]
    %v2087 = vld [vmem:[%s2069 + $0x88] sm:$0xff]
    %v2088 = vld [vmem:[%s2069 + $0x90] sm:$0xff]
    %v2089 = vld [vmem:[%s2069 + $0x98] sm:$0xff]
    %v2090 = vld [vmem:[%s2069 + $0xa0] sm:$0xff]
    %v2091 = vld [vmem:[%s2069 + $0xa8] sm:$0xff]
    %v2092 = vld [vmem:[%s2069 + $0xb0] sm:$0xff]
    %v2093 = vld [vmem:[%s2069 + $0xb8] sm:$0xff]
    %v2094 = vld [vmem:[%s2069 + $0xc0] sm:$0xff]
    %v2095 = vld [vmem:[%s2069 + $0xc8] sm:$0xff]
    %v2096 = vld [vmem:[%s2069 + $0xd0] sm:$0xff]
    %v2097 = vld [vmem:[%s2069 + $0xd8] sm:$0xff]
    %v2098 = vld [vmem:[%s2069 + $0xe0] sm:$0xff]
    %v2099 = vld [vmem:[%s2069 + $0xe8] sm:$0xff]
    %v2100 = vld [vmem:[%s2069 + $0xf0] sm:$0xff]
    %v2101 = vld [vmem:[%s2069 + $0xf8] sm:$0xff]
    %v2102 = vpack.c.bf16 %v2067, %v2067
    %v2103 = vpack.c.bf16 %v2068, %v2068
    %s2104 = scalar_lea.vmem [#allocation6], 512
    %v2105 = vld [vmem:[%s2104] sm:$0xff]
    %v2106 = vld [vmem:[%s2104 + $0x8] sm:$0xff]
    %v2107 = vld [vmem:[%s2104 + $0x10] sm:$0xff]
    %v2108 = vld [vmem:[%s2104 + $0x18] sm:$0xff]
    %v2109 = vld [vmem:[%s2104 + $0x20] sm:$0xff]
    %v2110 = vld [vmem:[%s2104 + $0x28] sm:$0xff]
    %v2111 = vld [vmem:[%s2104 + $0x30] sm:$0xff]
    %v2112 = vld [vmem:[%s2104 + $0x38] sm:$0xff]
    %v2113 = vld [vmem:[%s2104 + $0x40] sm:$0xff]
    %v2114 = vld [vmem:[%s2104 + $0x48] sm:$0xff]
    %v2115 = vld [vmem:[%s2104 + $0x50] sm:$0xff]
    %v2116 = vld [vmem:[%s2104 + $0x58] sm:$0xff]
    %v2117 = vld [vmem:[%s2104 + $0x60] sm:$0xff]
    %v2118 = vld [vmem:[%s2104 + $0x68] sm:$0xff]
    %v2119 = vld [vmem:[%s2104 + $0x70] sm:$0xff]
    %v2120 = vld [vmem:[%s2104 + $0x78] sm:$0xff]
    %v2121 = vld [vmem:[%s2104 + $0x80] sm:$0xff]
    %v2122 = vld [vmem:[%s2104 + $0x88] sm:$0xff]
    %v2123 = vld [vmem:[%s2104 + $0x90] sm:$0xff]
    %v2124 = vld [vmem:[%s2104 + $0x98] sm:$0xff]
    %v2125 = vld [vmem:[%s2104 + $0xa0] sm:$0xff]
    %v2126 = vld [vmem:[%s2104 + $0xa8] sm:$0xff]
    %v2127 = vld [vmem:[%s2104 + $0xb0] sm:$0xff]
    %v2128 = vld [vmem:[%s2104 + $0xb8] sm:$0xff]
    %v2129 = vld [vmem:[%s2104 + $0xc0] sm:$0xff]
    %v2130 = vld [vmem:[%s2104 + $0xc8] sm:$0xff]
    %v2131 = vld [vmem:[%s2104 + $0xd0] sm:$0xff]
    %v2132 = vld [vmem:[%s2104 + $0xd8] sm:$0xff]
    %v2133 = vld [vmem:[%s2104 + $0xe0] sm:$0xff]
    %v2134 = vld [vmem:[%s2104 + $0xe8] sm:$0xff]
    %v2135 = vld [vmem:[%s2104 + $0xf0] sm:$0xff]
    %v2136 = vld [vmem:[%s2104 + $0xf8] sm:$0xff]
    %v2137 = vpack.c.bf16 %v1755, %v1755
    %v2138 = vpack.c.bf16 %v1756, %v1756
    %v2171 = vunpack.c.l.b16 %v2105
    %v2172 = vunpack.c.h.b16 %v2105
    %v2173 = vunpack.c.l.b16 %v2106
    %v2174 = vunpack.c.h.b16 %v2106
    %v2175 = vunpack.c.l.b16 %v2107
    %v2176 = vunpack.c.h.b16 %v2107
    %v2177 = vunpack.c.l.b16 %v2108
    %v2178 = vunpack.c.h.b16 %v2108
    %v2179 = vunpack.c.l.b16 %v2109
    %v2180 = vunpack.c.h.b16 %v2109
    %v2181 = vunpack.c.l.b16 %v2110
    %v2182 = vunpack.c.h.b16 %v2110
    %v2183 = vunpack.c.l.b16 %v2111
    %v2184 = vunpack.c.h.b16 %v2111
    %v2185 = vunpack.c.l.b16 %v2112
    %v2186 = vunpack.c.h.b16 %v2112
    %v2187 = vunpack.c.l.b16 %v2113
    %v2188 = vunpack.c.h.b16 %v2113
    %v2189 = vunpack.c.l.b16 %v2114
    %v2190 = vunpack.c.h.b16 %v2114
    %v2191 = vunpack.c.l.b16 %v2115
    %v2192 = vunpack.c.h.b16 %v2115
    %v2193 = vunpack.c.l.b16 %v2116
    %v2194 = vunpack.c.h.b16 %v2116
    %v2195 = vunpack.c.l.b16 %v2117
    %v2196 = vunpack.c.h.b16 %v2117
    %v2197 = vunpack.c.l.b16 %v2118
    %v2198 = vunpack.c.h.b16 %v2118
    %v2199 = vunpack.c.l.b16 %v2119
    %v2200 = vunpack.c.h.b16 %v2119
    %v2201 = vunpack.c.l.b16 %v2120
    %v2202 = vunpack.c.h.b16 %v2120
    %v2203 = vunpack.c.l.b16 %v2121
    %v2204 = vunpack.c.h.b16 %v2121
    %v2205 = vunpack.c.l.b16 %v2122
    %v2206 = vunpack.c.h.b16 %v2122
    %v2207 = vunpack.c.l.b16 %v2123
    %v2208 = vunpack.c.h.b16 %v2123
    %v2209 = vunpack.c.l.b16 %v2124
    %v2210 = vunpack.c.h.b16 %v2124
    %v2211 = vunpack.c.l.b16 %v2125
    %v2212 = vunpack.c.h.b16 %v2125
    %v2213 = vunpack.c.l.b16 %v2126
    %v2214 = vunpack.c.h.b16 %v2126
    %v2215 = vunpack.c.l.b16 %v2127
    %v2216 = vunpack.c.h.b16 %v2127
    %v2217 = vunpack.c.l.b16 %v2128
    %v2218 = vunpack.c.h.b16 %v2128
    %v2219 = vunpack.c.l.b16 %v2129
    %v2220 = vunpack.c.h.b16 %v2129
    %v2221 = vunpack.c.l.b16 %v2130
    %v2222 = vunpack.c.h.b16 %v2130
    %v2223 = vunpack.c.l.b16 %v2131
    %v2224 = vunpack.c.h.b16 %v2131
    %v2225 = vunpack.c.l.b16 %v2132
    %v2226 = vunpack.c.h.b16 %v2132
    %v2227 = vunpack.c.l.b16 %v2133
    %v2228 = vunpack.c.h.b16 %v2133
    %v2229 = vunpack.c.l.b16 %v2134
    %v2230 = vunpack.c.h.b16 %v2134
    %v2231 = vunpack.c.l.b16 %v2135
    %v2232 = vunpack.c.h.b16 %v2135
    %v2233 = vunpack.c.l.b16 %v2136
    %v2234 = vunpack.c.h.b16 %v2136
    %v2235 = vpack.c.b16 %v2173, %v2171
    %v2236 = vpack.c.b16 %v2174, %v2172
    %v2237 = vpack.c.b16 %v2177, %v2175
    %v2238 = vpack.c.b16 %v2178, %v2176
    %v2239 = vpack.c.b16 %v2181, %v2179
    %v2240 = vpack.c.b16 %v2182, %v2180
    %v2241 = vpack.c.b16 %v2185, %v2183
    %v2242 = vpack.c.b16 %v2186, %v2184
    %v2243 = vpack.c.b16 %v2189, %v2187
    %v2244 = vpack.c.b16 %v2190, %v2188
    %v2245 = vpack.c.b16 %v2193, %v2191
    %v2246 = vpack.c.b16 %v2194, %v2192
    %v2247 = vpack.c.b16 %v2197, %v2195
    %v2248 = vpack.c.b16 %v2198, %v2196
    %v2249 = vpack.c.b16 %v2201, %v2199
    %v2250 = vpack.c.b16 %v2202, %v2200
    %v2251 = vpack.c.b16 %v2205, %v2203
    %v2252 = vpack.c.b16 %v2206, %v2204
    %v2253 = vpack.c.b16 %v2209, %v2207
    %v2254 = vpack.c.b16 %v2210, %v2208
    %v2255 = vpack.c.b16 %v2213, %v2211
    %v2256 = vpack.c.b16 %v2214, %v2212
    %v2257 = vpack.c.b16 %v2217, %v2215
    %v2258 = vpack.c.b16 %v2218, %v2216
    %v2259 = vpack.c.b16 %v2221, %v2219
    %v2260 = vpack.c.b16 %v2222, %v2220
    %v2261 = vpack.c.b16 %v2225, %v2223
    %v2262 = vpack.c.b16 %v2226, %v2224
    %v2263 = vpack.c.b16 %v2229, %v2227
    %v2264 = vpack.c.b16 %v2230, %v2228
    %v2265 = vpack.c.b16 %v2233, %v2231
    %v2266 = vpack.c.b16 %v2234, %v2232
    %2299 = vmatprep.subr.bf16.mxu0 %v2236
    %2300 = vmatpush1.bf16.msra.mxu0 %v2235
    %2301 = vmatprep.subr.bf16.mxu0 %v2238
    %2302 = vmatpush1.bf16.msra.mxu0 %v2237
    %2303 = vmatprep.subr.bf16.mxu0 %v2240
    %2304 = vmatpush1.bf16.msra.mxu0 %v2239
    %2305 = vmatprep.subr.bf16.mxu0 %v2242
    %2306 = vmatpush1.bf16.msra.mxu0 %v2241
    %2307 = vmatprep.subr.bf16.mxu0 %v2244
    %2308 = vmatpush1.bf16.msra.mxu0 %v2243
    %2309 = vmatprep.subr.bf16.mxu0 %v2246
    %2310 = vmatpush1.bf16.msra.mxu0 %v2245
    %2311 = vmatprep.subr.bf16.mxu0 %v2248
    %2312 = vmatpush1.bf16.msra.mxu0 %v2247
    %2313 = vmatprep.subr.bf16.mxu0 %v2250
    %2314 = vmatpush1.bf16.msra.mxu0 %v2249
    %2315 = vmatprep.subr.bf16.mxu0 %v2252
    %2316 = vmatpush1.bf16.msra.mxu0 %v2251
    %2317 = vmatprep.subr.bf16.mxu0 %v2254
    %2318 = vmatpush1.bf16.msra.mxu0 %v2253
    %2319 = vmatprep.subr.bf16.mxu0 %v2256
    %2320 = vmatpush1.bf16.msra.mxu0 %v2255
    %2321 = vmatprep.subr.bf16.mxu0 %v2258
    %2322 = vmatpush1.bf16.msra.mxu0 %v2257
    %2323 = vmatprep.subr.bf16.mxu0 %v2260
    %2324 = vmatpush1.bf16.msra.mxu0 %v2259
    %2325 = vmatprep.subr.bf16.mxu0 %v2262
    %2326 = vmatpush1.bf16.msra.mxu0 %v2261
    %2327 = vmatprep.subr.bf16.mxu0 %v2264
    %2328 = vmatpush1.bf16.msra.mxu0 %v2263
    %2329 = vmatprep.subr.bf16.mxu0 %v2266
    %2330 = vmatpush1.bf16.msra.mxu0 %v2265
    %2331 = vmatprep.mubr.bf16.mxu0 %v2138
    %2332 = vmatmul.mubr.bf16.gmra.mrb[0].mxu0 %v2137
    %v2333 = vpop.f32.mrb[0].mxu0
    %v2334 = vadd.f32 0.0, %v2333
    %v2335 = vpop.f32.mrb[0].mxu0
    %v2336 = vadd.f32 0.0, %v2335
    %v2337 = vpop.f32.mrb[0].mxu0
    %v2338 = vpop.f32.mrb[0].mxu0
    %2339 = vdwg.mxu0
    %v2372 = vunpack.c.l.b16 %v2070
    %v2373 = vunpack.c.h.b16 %v2070
    %v2374 = vunpack.c.l.b16 %v2071
    %v2375 = vunpack.c.h.b16 %v2071
    %v2376 = vunpack.c.l.b16 %v2072
    %v2377 = vunpack.c.h.b16 %v2072
    %v2378 = vunpack.c.l.b16 %v2073
    %v2379 = vunpack.c.h.b16 %v2073
    %v2380 = vunpack.c.l.b16 %v2074
    %v2381 = vunpack.c.h.b16 %v2074
    %v2382 = vunpack.c.l.b16 %v2075
    %v2383 = vunpack.c.h.b16 %v2075
    %v2384 = vunpack.c.l.b16 %v2076
    %v2385 = vunpack.c.h.b16 %v2076
    %v2386 = vunpack.c.l.b16 %v2077
    %v2387 = vunpack.c.h.b16 %v2077
    %v2388 = vunpack.c.l.b16 %v2078
    %v2389 = vunpack.c.h.b16 %v2078
    %v2390 = vunpack.c.l.b16 %v2079
    %v2391 = vunpack.c.h.b16 %v2079
    %v2392 = vunpack.c.l.b16 %v2080
    %v2393 = vunpack.c.h.b16 %v2080
    %v2394 = vunpack.c.l.b16 %v2081
    %v2395 = vunpack.c.h.b16 %v2081
    %v2396 = vunpack.c.l.b16 %v2082
    %v2397 = vunpack.c.h.b16 %v2082
    %v2398 = vunpack.c.l.b16 %v2083
    %v2399 = vunpack.c.h.b16 %v2083
    %v2400 = vunpack.c.l.b16 %v2084
    %v2401 = vunpack.c.h.b16 %v2084
    %v2402 = vunpack.c.l.b16 %v2085
    %v2403 = vunpack.c.h.b16 %v2085
    %v2404 = vunpack.c.l.b16 %v2086
    %v2405 = vunpack.c.h.b16 %v2086
    %v2406 = vunpack.c.l.b16 %v2087
    %v2407 = vunpack.c.h.b16 %v2087
    %v2408 = vunpack.c.l.b16 %v2088
    %v2409 = vunpack.c.h.b16 %v2088
    %v2410 = vunpack.c.l.b16 %v2089
    %v2411 = vunpack.c.h.b16 %v2089
    %v2412 = vunpack.c.l.b16 %v2090
    %v2413 = vunpack.c.h.b16 %v2090
    %v2414 = vunpack.c.l.b16 %v2091
    %v2415 = vunpack.c.h.b16 %v2091
    %v2416 = vunpack.c.l.b16 %v2092
    %v2417 = vunpack.c.h.b16 %v2092
    %v2418 = vunpack.c.l.b16 %v2093
    %v2419 = vunpack.c.h.b16 %v2093
    %v2420 = vunpack.c.l.b16 %v2094
    %v2421 = vunpack.c.h.b16 %v2094
    %v2422 = vunpack.c.l.b16 %v2095
    %v2423 = vunpack.c.h.b16 %v2095
    %v2424 = vunpack.c.l.b16 %v2096
    %v2425 = vunpack.c.h.b16 %v2096
    %v2426 = vunpack.c.l.b16 %v2097
    %v2427 = vunpack.c.h.b16 %v2097
    %v2428 = vunpack.c.l.b16 %v2098
    %v2429 = vunpack.c.h.b16 %v2098
    %v2430 = vunpack.c.l.b16 %v2099
    %v2431 = vunpack.c.h.b16 %v2099
    %v2432 = vunpack.c.l.b16 %v2100
    %v2433 = vunpack.c.h.b16 %v2100
    %v2434 = vunpack.c.l.b16 %v2101
    %v2435 = vunpack.c.h.b16 %v2101
    %v2436 = vpack.c.b16 %v2374, %v2372
    %v2437 = vpack.c.b16 %v2375, %v2373
    %v2438 = vpack.c.b16 %v2378, %v2376
    %v2439 = vpack.c.b16 %v2379, %v2377
    %v2440 = vpack.c.b16 %v2382, %v2380
    %v2441 = vpack.c.b16 %v2383, %v2381
    %v2442 = vpack.c.b16 %v2386, %v2384
    %v2443 = vpack.c.b16 %v2387, %v2385
    %v2444 = vpack.c.b16 %v2390, %v2388
    %v2445 = vpack.c.b16 %v2391, %v2389
    %v2446 = vpack.c.b16 %v2394, %v2392
    %v2447 = vpack.c.b16 %v2395, %v2393
    %v2448 = vpack.c.b16 %v2398, %v2396
    %v2449 = vpack.c.b16 %v2399, %v2397
    %v2450 = vpack.c.b16 %v2402, %v2400
    %v2451 = vpack.c.b16 %v2403, %v2401
    %v2452 = vpack.c.b16 %v2406, %v2404
    %v2453 = vpack.c.b16 %v2407, %v2405
    %v2454 = vpack.c.b16 %v2410, %v2408
    %v2455 = vpack.c.b16 %v2411, %v2409
    %v2456 = vpack.c.b16 %v2414, %v2412
    %v2457 = vpack.c.b16 %v2415, %v2413
    %v2458 = vpack.c.b16 %v2418, %v2416
    %v2459 = vpack.c.b16 %v2419, %v2417
    %v2460 = vpack.c.b16 %v2422, %v2420
    %v2461 = vpack.c.b16 %v2423, %v2421
    %v2462 = vpack.c.b16 %v2426, %v2424
    %v2463 = vpack.c.b16 %v2427, %v2425
    %v2464 = vpack.c.b16 %v2430, %v2428
    %v2465 = vpack.c.b16 %v2431, %v2429
    %v2466 = vpack.c.b16 %v2434, %v2432
    %v2467 = vpack.c.b16 %v2435, %v2433
    %2500 = vmatprep.subr.bf16.mxu0 %v2437
    %2501 = vmatpush1.bf16.msra.mxu0 %v2436
    %2502 = vmatprep.subr.bf16.mxu0 %v2439
    %2503 = vmatpush1.bf16.msra.mxu0 %v2438
    %2504 = vmatprep.subr.bf16.mxu0 %v2441
    %2505 = vmatpush1.bf16.msra.mxu0 %v2440
    %2506 = vmatprep.subr.bf16.mxu0 %v2443
    %2507 = vmatpush1.bf16.msra.mxu0 %v2442
    %2508 = vmatprep.subr.bf16.mxu0 %v2445
    %2509 = vmatpush1.bf16.msra.mxu0 %v2444
    %2510 = vmatprep.subr.bf16.mxu0 %v2447
    %2511 = vmatpush1.bf16.msra.mxu0 %v2446
    %2512 = vmatprep.subr.bf16.mxu0 %v2449
    %2513 = vmatpush1.bf16.msra.mxu0 %v2448
    %2514 = vmatprep.subr.bf16.mxu0 %v2451
    %2515 = vmatpush1.bf16.msra.mxu0 %v2450
    %2516 = vmatprep.subr.bf16.mxu0 %v2453
    %2517 = vmatpush1.bf16.msra.mxu0 %v2452
    %2518 = vmatprep.subr.bf16.mxu0 %v2455
    %2519 = vmatpush1.bf16.msra.mxu0 %v2454
    %2520 = vmatprep.subr.bf16.mxu0 %v2457
    %2521 = vmatpush1.bf16.msra.mxu0 %v2456
    %2522 = vmatprep.subr.bf16.mxu0 %v2459
    %2523 = vmatpush1.bf16.msra.mxu0 %v2458
    %2524 = vmatprep.subr.bf16.mxu0 %v2461
    %2525 = vmatpush1.bf16.msra.mxu0 %v2460
    %2526 = vmatprep.subr.bf16.mxu0 %v2463
    %2527 = vmatpush1.bf16.msra.mxu0 %v2462
    %2528 = vmatprep.subr.bf16.mxu0 %v2465
    %2529 = vmatpush1.bf16.msra.mxu0 %v2464
    %2530 = vmatprep.subr.bf16.mxu0 %v2467
    %2531 = vmatpush1.bf16.msra.mxu0 %v2466
    %2532 = vmatprep.mubr.bf16.mxu0 %v2103
    %2533 = vmatmul.mubr.bf16.gmra.mrb[0].mxu0 %v2102
    %v2534 = vpop.f32.mrb[0].mxu0
    %v2535 = vadd.f32 %v2334, %v2534
    %v2536 = vpop.f32.mrb[0].mxu0
    %v2537 = vadd.f32 %v2336, %v2536
    %v2538 = vpop.f32.mrb[0].mxu0
    %v2539 = vpop.f32.mrb[0].mxu0
    %2540 = vdwg.mxu0
    %s2541 = scalar_lea.vmem %s3, 66
    %v2542 = vld [vmem:[%s2541] ss:$8 sm:$0x3]
    %v2544 = vlaneseq
    %v2545 = vshrl.u32 %v2544, 7
    %v2546 = vsub.s32 0, %v2545
    %v2547 = vrot.slane %v2542, %v2546
    %v2548 = vlaneseq
    %v2549 = vshrl.u32 %v2548, 7
    %v2550 = vsub.s32 1, %v2549
    %v2551 = vrot.slane %v2542, %v2550
    %v2554 = vadd.f32 %v2535, %v2547
    %v2555 = vadd.f32 %v2537, %v2551
    %v2556 = vxor.u32 %v2554, 2147483648
    %v2557 = vxor.u32 %v2555, 2147483648
    %v2558 = vmul.f32 %v2556, 1.442695
    %v2559 = vpow.pop %v2558
    %v2560 = vmul.f32 %v2557, 1.442695
    %v2561 = vpow.pop %v2560
    %v2562 = vadd.f32 %v2559, 1.0
    %v2563 = vadd.f32 %v2561, 1.0
    %v2564 = vrcp.pop %v2562
    %v2565 = vmul.f32 1.0, %v2564
    %v2566 = vrcp.pop %v2563
    %v2567 = vmul.f32 1.0, %v2566
    %v2568 = vmul.f32 %v2554, %v2565
    %v2569 = vmul.f32 %v2555, %v2567
    %v2570 = vadd.f32 %v2568, %v2569
    %2571 = vadd.xlane.f32.xlu0 %v2570
    %v2572 = vpop.xlane.xlu0 %2571
    %v2573 = vmul.f32 %v2572, %v1713
    %v2574 = vsub.f32 %v2568, %v2573
    %v2575 = vsub.f32 %v2569, %v2573
    %v2576 = vmul.f32 %v2574, %v2574
    %v2577 = vmul.f32 %v2575, %v2575
    %v2578 = vadd.f32 %v2576, %v2577
    %2579 = vadd.xlane.f32.xlu0 %v2578
    %v2580 = vpop.xlane.xlu0 %2579
    %v2581 = vmul.f32 %v2580, %v1713
    %v2582 = vadd.f32 %v2581, 1e-05
    %v2583 = vrsqrt.pop %v2582
    %v2584 = vmul.f32 %v2574, %v2583
    %v2585 = vmul.f32 %v2575, %v2583
    %s2586 = scalar_lea.vmem %s3, 67
    %v2587 = vld [vmem:[%s2586] ss:$8 sm:$0x3]
    %v2589 = vlaneseq
    %v2590 = vshrl.u32 %v2589, 7
    %v2591 = vsub.s32 0, %v2590
    %v2592 = vrot.slane %v2587, %v2591
    %v2593 = vlaneseq
    %v2594 = vshrl.u32 %v2593, 7
    %v2595 = vsub.s32 1, %v2594
    %v2596 = vrot.slane %v2587, %v2595
    %v2599 = vmul.f32 %v2584, %v2592
    %v2600 = vmul.f32 %v2585, %v2596
    %s2601 = scalar_lea.vmem %s3, 68
    %v2602 = vld [vmem:[%s2601] ss:$8 sm:$0x3]
    %v2604 = vlaneseq
    %v2605 = vshrl.u32 %v2604, 7
    %v2606 = vsub.s32 0, %v2605
    %v2607 = vrot.slane %v2602, %v2606
    %v2608 = vlaneseq
    %v2609 = vshrl.u32 %v2608, 7
    %v2610 = vsub.s32 1, %v2609
    %v2611 = vrot.slane %v2602, %v2610
    %v2614 = vadd.f32 %v2599, %v2607
    %v2615 = vadd.f32 %v2600, %v2611
    %v2616 = vld [vmem:[#allocation9] sm:$0xf]
    %v2617 = vld [vmem:[#allocation9 + $0x4] sm:$0xf]
    %v2618 = vld [vmem:[#allocation9 + $0x8] sm:$0xf]
    %v2619 = vld [vmem:[#allocation9 + $0xc] sm:$0xf]
    %v2620 = vld [vmem:[#allocation9 + $0x10] sm:$0xf]
    %v2621 = vld [vmem:[#allocation9 + $0x14] sm:$0xf]
    %v2622 = vld [vmem:[#allocation9 + $0x18] sm:$0xf]
    %v2623 = vld [vmem:[#allocation9 + $0x1c] sm:$0xf]
    %v2624 = vld [vmem:[#allocation9 + $0x20] sm:$0xf]
    %v2625 = vld [vmem:[#allocation9 + $0x24] sm:$0xf]
    %v2626 = vld [vmem:[#allocation9 + $0x28] sm:$0xf]
    %v2627 = vld [vmem:[#allocation9 + $0x2c] sm:$0xf]
    %v2628 = vld [vmem:[#allocation9 + $0x30] sm:$0xf]
    %v2629 = vld [vmem:[#allocation9 + $0x34] sm:$0xf]
    %v2630 = vld [vmem:[#allocation9 + $0x38] sm:$0xf]
    %v2631 = vld [vmem:[#allocation9 + $0x3c] sm:$0xf]
    %v2632 = vld [vmem:[#allocation9 + $0x40] sm:$0xf]
    %v2633 = vld [vmem:[#allocation9 + $0x44] sm:$0xf]
    %v2634 = vld [vmem:[#allocation9 + $0x48] sm:$0xf]
    %v2635 = vld [vmem:[#allocation9 + $0x4c] sm:$0xf]
    %v2636 = vld [vmem:[#allocation9 + $0x50] sm:$0xf]
    %v2637 = vld [vmem:[#allocation9 + $0x54] sm:$0xf]
    %v2638 = vld [vmem:[#allocation9 + $0x58] sm:$0xf]
    %v2639 = vld [vmem:[#allocation9 + $0x5c] sm:$0xf]
    %v2640 = vld [vmem:[#allocation9 + $0x60] sm:$0xf]
    %v2641 = vld [vmem:[#allocation9 + $0x64] sm:$0xf]
    %v2642 = vld [vmem:[#allocation9 + $0x68] sm:$0xf]
    %v2643 = vld [vmem:[#allocation9 + $0x6c] sm:$0xf]
    %v2644 = vld [vmem:[#allocation9 + $0x70] sm:$0xf]
    %v2645 = vld [vmem:[#allocation9 + $0x74] sm:$0xf]
    %v2646 = vld [vmem:[#allocation9 + $0x78] sm:$0xf]
    %v2647 = vld [vmem:[#allocation9 + $0x7c] sm:$0xf]
    %v2648 = vpack.c.bf16 %v2614, %v2614
    %v2649 = vpack.c.bf16 %v2615, %v2615
    %v2650 = vld [vmem:[%s3 + $0x45] ss:$0 sm:$0xff]
    %v2683 = vunpack.c.l.b16 %v2616
    %v2684 = vunpack.c.l.b16 %v2617
    %v2685 = vunpack.c.l.b16 %v2618
    %v2686 = vunpack.c.l.b16 %v2619
    %v2687 = vunpack.c.l.b16 %v2620
    %v2688 = vunpack.c.l.b16 %v2621
    %v2689 = vunpack.c.l.b16 %v2622
    %v2690 = vunpack.c.l.b16 %v2623
    %v2691 = vunpack.c.l.b16 %v2624
    %v2692 = vunpack.c.l.b16 %v2625
    %v2693 = vunpack.c.l.b16 %v2626
    %v2694 = vunpack.c.l.b16 %v2627
    %v2695 = vunpack.c.l.b16 %v2628
    %v2696 = vunpack.c.l.b16 %v2629
    %v2697 = vunpack.c.l.b16 %v2630
    %v2698 = vunpack.c.l.b16 %v2631
    %v2699 = vunpack.c.l.b16 %v2632
    %v2700 = vunpack.c.l.b16 %v2633
    %v2701 = vunpack.c.l.b16 %v2634
    %v2702 = vunpack.c.l.b16 %v2635
    %v2703 = vunpack.c.l.b16 %v2636
    %v2704 = vunpack.c.l.b16 %v2637
    %v2705 = vunpack.c.l.b16 %v2638
    %v2706 = vunpack.c.l.b16 %v2639
    %v2707 = vunpack.c.l.b16 %v2640
    %v2708 = vunpack.c.l.b16 %v2641
    %v2709 = vunpack.c.l.b16 %v2642
    %v2710 = vunpack.c.l.b16 %v2643
    %v2711 = vunpack.c.l.b16 %v2644
    %v2712 = vunpack.c.l.b16 %v2645
    %v2713 = vunpack.c.l.b16 %v2646
    %v2714 = vunpack.c.l.b16 %v2647
    %v2715 = vpack.c.b16 %v2684, %v2683
    %v2716 = vpack.c.b16 %v2686, %v2685
    %v2717 = vpack.c.b16 %v2688, %v2687
    %v2718 = vpack.c.b16 %v2690, %v2689
    %v2719 = vpack.c.b16 %v2692, %v2691
    %v2720 = vpack.c.b16 %v2694, %v2693
    %v2721 = vpack.c.b16 %v2696, %v2695
    %v2722 = vpack.c.b16 %v2698, %v2697
    %v2723 = vpack.c.b16 %v2700, %v2699
    %v2724 = vpack.c.b16 %v2702, %v2701
    %v2725 = vpack.c.b16 %v2704, %v2703
    %v2726 = vpack.c.b16 %v2706, %v2705
    %v2727 = vpack.c.b16 %v2708, %v2707
    %v2728 = vpack.c.b16 %v2710, %v2709
    %v2729 = vpack.c.b16 %v2712, %v2711
    %v2730 = vpack.c.b16 %v2714, %v2713
    %2747 = vmatprep.subr.bf16.mxu0 0
    %2748 = vmatpush1.bf16.msra.mxu0 %v2715
    %2749 = vmatprep.subr.bf16.mxu0 0
    %2750 = vmatpush1.bf16.msra.mxu0 %v2716
    %2751 = vmatprep.subr.bf16.mxu0 0
    %2752 = vmatpush1.bf16.msra.mxu0 %v2717
    %2753 = vmatprep.subr.bf16.mxu0 0
    %2754 = vmatpush1.bf16.msra.mxu0 %v2718
    %2755 = vmatprep.subr.bf16.mxu0 0
    %2756 = vmatpush1.bf16.msra.mxu0 %v2719
    %2757 = vmatprep.subr.bf16.mxu0 0
    %2758 = vmatpush1.bf16.msra.mxu0 %v2720
    %2759 = vmatprep.subr.bf16.mxu0 0
    %2760 = vmatpush1.bf16.msra.mxu0 %v2721
    %2761 = vmatprep.subr.bf16.mxu0 0
    %2762 = vmatpush1.bf16.msra.mxu0 %v2722
    %2763 = vmatprep.subr.bf16.mxu0 0
    %2764 = vmatpush1.bf16.msra.mxu0 %v2723
    %2765 = vmatprep.subr.bf16.mxu0 0
    %2766 = vmatpush1.bf16.msra.mxu0 %v2724
    %2767 = vmatprep.subr.bf16.mxu0 0
    %2768 = vmatpush1.bf16.msra.mxu0 %v2725
    %2769 = vmatprep.subr.bf16.mxu0 0
    %2770 = vmatpush1.bf16.msra.mxu0 %v2726
    %2771 = vmatprep.subr.bf16.mxu0 0
    %2772 = vmatpush1.bf16.msra.mxu0 %v2727
    %2773 = vmatprep.subr.bf16.mxu0 0
    %2774 = vmatpush1.bf16.msra.mxu0 %v2728
    %2775 = vmatprep.subr.bf16.mxu0 0
    %2776 = vmatpush1.bf16.msra.mxu0 %v2729
    %2777 = vmatprep.subr.bf16.mxu0 0
    %2778 = vmatpush1.bf16.msra.mxu0 %v2730
    %2779 = vmatprep.mubr.bf16.mxu0 %v2649
    %2780 = vmatmul.mubr.bf16.gmra.mrb[0].mxu0 %v2648
    %v2781 = vpop.f32.mrb[0].mxu0
    %v2782 = vadd.f32 %v2650, %v2781
    %v2783 = vpop.f32.mrb[0].mxu0
    %v2784 = vpop.f32.mrb[0].mxu0
    %v2785 = vpop.f32.mrb[0].mxu0
    %2786 = vdwg.mxu0
    %v2787 = vadd.f32 %v2782, %v1497
    %s2788 = scalar_lea.vmem [#allocation2], 128
    %v2789 = vld [vmem:[%s2788] sm:$0xf]
    %v2790 = vld [vmem:[%s2788 + $0x4] sm:$0xf]
    %v2791 = vld [vmem:[%s2788 + $0x8] sm:$0xf]
    %v2792 = vld [vmem:[%s2788 + $0xc] sm:$0xf]
    %v2793 = vld [vmem:[%s2788 + $0x10] sm:$0xf]
    %v2794 = vld [vmem:[%s2788 + $0x14] sm:$0xf]
    %v2795 = vld [vmem:[%s2788 + $0x18] sm:$0xf]
    %v2796 = vld [vmem:[%s2788 + $0x1c] sm:$0xf]
    %v2797 = vld [vmem:[%s2788 + $0x20] sm:$0xf]
    %v2798 = vld [vmem:[%s2788 + $0x24] sm:$0xf]
    %v2799 = vld [vmem:[%s2788 + $0x28] sm:$0xf]
    %v2800 = vld [vmem:[%s2788 + $0x2c] sm:$0xf]
    %v2801 = vld [vmem:[%s2788 + $0x30] sm:$0xf]
    %v2802 = vld [vmem:[%s2788 + $0x34] sm:$0xf]
    %v2803 = vld [vmem:[%s2788 + $0x38] sm:$0xf]
    %v2804 = vld [vmem:[%s2788 + $0x3c] sm:$0xf]
    %v2805 = vpack.c.bf16 %v2787, %v2787
    %s2806 = scalar_lea.vmem [#allocation2], 192
    %v2807 = vld [vmem:[%s2806] sm:$0xf]
    %v2808 = vld [vmem:[%s2806 + $0x4] sm:$0xf]
    %v2809 = vld [vmem:[%s2806 + $0x8] sm:$0xf]
    %v2810 = vld [vmem:[%s2806 + $0xc] sm:$0xf]
    %v2811 = vld [vmem:[%s2806 + $0x10] sm:$0xf]
    %v2812 = vld [vmem:[%s2806 + $0x14] sm:$0xf]
    %v2813 = vld [vmem:[%s2806 + $0x18] sm:$0xf]
    %v2814 = vld [vmem:[%s2806 + $0x1c] sm:$0xf]
    %v2815 = vld [vmem:[%s2806 + $0x20] sm:$0xf]
    %v2816 = vld [vmem:[%s2806 + $0x24] sm:$0xf]
    %v2817 = vld [vmem:[%s2806 + $0x28] sm:$0xf]
    %v2818 = vld [vmem:[%s2806 + $0x2c] sm:$0xf]
    %v2819 = vld [vmem:[%s2806 + $0x30] sm:$0xf]
    %v2820 = vld [vmem:[%s2806 + $0x34] sm:$0xf]
    %v2821 = vld [vmem:[%s2806 + $0x38] sm:$0xf]
    %v2822 = vld [vmem:[%s2806 + $0x3c] sm:$0xf]
    %v2823 = vpack.c.bf16 %v1543, %v1543
    %v2840 = vunpack.c.l.b16 %v2807
    %v2841 = vunpack.c.l.b16 %v2808
    %v2842 = vunpack.c.l.b16 %v2809
    %v2843 = vunpack.c.l.b16 %v2810
    %v2844 = vunpack.c.l.b16 %v2811
    %v2845 = vunpack.c.l.b16 %v2812
    %v2846 = vunpack.c.l.b16 %v2813
    %v2847 = vunpack.c.l.b16 %v2814
    %v2848 = vunpack.c.l.b16 %v2815
    %v2849 = vunpack.c.l.b16 %v2816
    %v2850 = vunpack.c.l.b16 %v2817
    %v2851 = vunpack.c.l.b16 %v2818
    %v2852 = vunpack.c.l.b16 %v2819
    %v2853 = vunpack.c.l.b16 %v2820
    %v2854 = vunpack.c.l.b16 %v2821
    %v2855 = vunpack.c.l.b16 %v2822
    %v2856 = vpack.c.b16 %v2841, %v2840
    %v2857 = vpack.c.b16 %v2843, %v2842
    %v2858 = vpack.c.b16 %v2845, %v2844
    %v2859 = vpack.c.b16 %v2847, %v2846
    %v2860 = vpack.c.b16 %v2849, %v2848
    %v2861 = vpack.c.b16 %v2851, %v2850
    %v2862 = vpack.c.b16 %v2853, %v2852
    %v2863 = vpack.c.b16 %v2855, %v2854
    %2872 = vmatprep.subr.bf16.mxu0 0
    %2873 = vmatpush1.bf16.msra.mxu0 %v2856
    %2874 = vmatprep.subr.bf16.mxu0 0
    %2875 = vmatpush1.bf16.msra.mxu0 %v2857
    %2876 = vmatprep.subr.bf16.mxu0 0
    %2877 = vmatpush1.bf16.msra.mxu0 %v2858
    %2878 = vmatprep.subr.bf16.mxu0 0
    %2879 = vmatpush1.bf16.msra.mxu0 %v2859
    %2880 = vmatprep.subr.bf16.mxu0 0
    %2881 = vmatpush1.bf16.msra.mxu0 %v2860
    %2882 = vmatprep.subr.bf16.mxu0 0
    %2883 = vmatpush1.bf16.msra.mxu0 %v2861
    %2884 = vmatprep.subr.bf16.mxu0 0
    %2885 = vmatpush1.bf16.msra.mxu0 %v2862
    %2886 = vmatprep.subr.bf16.mxu0 0
    %2887 = vmatpush1.bf16.msra.mxu0 %v2863
    %2888 = vmatprep.subr.bf16.mxu0 0
    %2889 = vmatpush1.bf16.msra.mxu0 0
    %2890 = vmatprep.subr.bf16.mxu0 0
    %2891 = vmatpush1.bf16.msra.mxu0 0
    %2892 = vmatprep.subr.bf16.mxu0 0
    %2893 = vmatpush1.bf16.msra.mxu0 0
    %2894 = vmatprep.subr.bf16.mxu0 0
    %2895 = vmatpush1.bf16.msra.mxu0 0
    %2896 = vmatprep.subr.bf16.mxu0 0
    %2897 = vmatpush1.bf16.msra.mxu0 0
    %2898 = vmatprep.subr.bf16.mxu0 0
    %2899 = vmatpush1.bf16.msra.mxu0 0
    %2900 = vmatprep.subr.bf16.mxu0 0
    %2901 = vmatpush1.bf16.msra.mxu0 0
    %2902 = vmatprep.subr.bf16.mxu0 0
    %2903 = vmatpush1.bf16.msra.mxu0 0
    %2904 = vmatprep.mubr.bf16.mxu0 0
    %2905 = vmatmul.mubr.bf16.gmra.mrb[0].mxu0 %v2823
    %v2906 = vpop.f32.mrb[0].mxu0
    %v2907 = vadd.f32 0.0, %v2906
    %v2908 = vpop.f32.mrb[0].mxu0
    %v2909 = vpop.f32.mrb[0].mxu0
    %v2910 = vpop.f32.mrb[0].mxu0
    %2911 = vdwg.mxu0
    %v2928 = vunpack.c.l.b16 %v2789
    %v2929 = vunpack.c.l.b16 %v2790
    %v2930 = vunpack.c.l.b16 %v2791
    %v2931 = vunpack.c.l.b16 %v2792
    %v2932 = vunpack.c.l.b16 %v2793
    %v2933 = vunpack.c.l.b16 %v2794
    %v2934 = vunpack.c.l.b16 %v2795
    %v2935 = vunpack.c.l.b16 %v2796
    %v2936 = vunpack.c.l.b16 %v2797
    %v2937 = vunpack.c.l.b16 %v2798
    %v2938 = vunpack.c.l.b16 %v2799
    %v2939 = vunpack.c.l.b16 %v2800
    %v2940 = vunpack.c.l.b16 %v2801
    %v2941 = vunpack.c.l.b16 %v2802
    %v2942 = vunpack.c.l.b16 %v2803
    %v2943 = vunpack.c.l.b16 %v2804
    %v2944 = vpack.c.b16 %v2929, %v2928
    %v2945 = vpack.c.b16 %v2931, %v2930
    %v2946 = vpack.c.b16 %v2933, %v2932
    %v2947 = vpack.c.b16 %v2935, %v2934
    %v2948 = vpack.c.b16 %v2937, %v2936
    %v2949 = vpack.c.b16 %v2939, %v2938
    %v2950 = vpack.c.b16 %v2941, %v2940
    %v2951 = vpack.c.b16 %v2943, %v2942
    %2960 = vmatprep.subr.bf16.mxu0 0
    %2961 = vmatpush1.bf16.msra.mxu0 %v2944
    %2962 = vmatprep.subr.bf16.mxu0 0
    %2963 = vmatpush1.bf16.msra.mxu0 %v2945
    %2964 = vmatprep.subr.bf16.mxu0 0
    %2965 = vmatpush1.bf16.msra.mxu0 %v2946
    %2966 = vmatprep.subr.bf16.mxu0 0
    %2967 = vmatpush1.bf16.msra.mxu0 %v2947
    %2968 = vmatprep.subr.bf16.mxu0 0
    %2969 = vmatpush1.bf16.msra.mxu0 %v2948
    %2970 = vmatprep.subr.bf16.mxu0 0
    %2971 = vmatpush1.bf16.msra.mxu0 %v2949
    %2972 = vmatprep.subr.bf16.mxu0 0
    %2973 = vmatpush1.bf16.msra.mxu0 %v2950
    %2974 = vmatprep.subr.bf16.mxu0 0
    %2975 = vmatpush1.bf16.msra.mxu0 %v2951
    %2976 = vmatprep.subr.bf16.mxu0 0
    %2977 = vmatpush1.bf16.msra.mxu0 0
    %2978 = vmatprep.subr.bf16.mxu0 0
    %2979 = vmatpush1.bf16.msra.mxu0 0
    %2980 = vmatprep.subr.bf16.mxu0 0
    %2981 = vmatpush1.bf16.msra.mxu0 0
    %2982 = vmatprep.subr.bf16.mxu0 0
    %2983 = vmatpush1.bf16.msra.mxu0 0
    %2984 = vmatprep.subr.bf16.mxu0 0
    %2985 = vmatpush1.bf16.msra.mxu0 0
    %2986 = vmatprep.subr.bf16.mxu0 0
    %2987 = vmatpush1.bf16.msra.mxu0 0
    %2988 = vmatprep.subr.bf16.mxu0 0
    %2989 = vmatpush1.bf16.msra.mxu0 0
    %2990 = vmatprep.subr.bf16.mxu0 0
    %2991 = vmatpush1.bf16.msra.mxu0 0
    %2992 = vmatprep.mubr.bf16.mxu0 0
    %2993 = vmatmul.mubr.bf16.gmra.mrb[0].mxu0 %v2805
    %v2994 = vpop.f32.mrb[0].mxu0
    %v2995 = vadd.f32 %v2907, %v2994
    %v2996 = vpop.f32.mrb[0].mxu0
    %v2997 = vpop.f32.mrb[0].mxu0
    %v2998 = vpop.f32.mrb[0].mxu0
    %2999 = vdwg.mxu0
    %v3000 = vld [vmem:[%s3 + $0x46] ss:$0 sm:$0xff]
    %v3001 = vadd.f32 %v2995, %v3000
    %v3002 = vxor.u32 %v3001, 2147483648
    %v3003 = vmul.f32 %v3002, 1.442695
    %v3004 = vpow.pop %v3003
    %v3005 = vadd.f32 %v3004, 1.0
    %v3006 = vrcp.pop %v3005
    %v3007 = vmul.f32 1.0, %v3006
    %v3008 = vmul.f32 %v3001, %v3007
    %3009 = vadd.xlane.f32.xlu0 %v3008
    %v3010 = vpop.xlane.xlu0 %3009
    %v3011 = vmul.f32 %v3010, %v1530
    %v3012 = vsub.f32 %v3008, %v3011
    %v3013 = vmul.f32 %v3012, %v3012
    %3014 = vadd.xlane.f32.xlu0 %v3013
    %v3015 = vpop.xlane.xlu0 %3014
    %v3016 = vmul.f32 %v3015, %v1530
    %v3017 = vadd.f32 %v3016, 1e-05
    %v3018 = vrsqrt.pop %v3017
    %v3019 = vmul.f32 %v3012, %v3018
    %v3020 = vld [vmem:[%s3 + $0x47] ss:$0 sm:$0xff]
    %v3021 = vmul.f32 %v3019, %v3020
    %v3022 = vld [vmem:[%s3 + $0x80] ss:$0 sm:$0xff]
    %v3023 = vadd.f32 %v3021, %v3022
    %v3024 = vadd.f32 %v3023, %v1498
    %v3025 = vld [vmem:[%s9] sm:$0xf]
    %v3026 = vld [vmem:[%s9 + $0x4] sm:$0xf]
    %v3027 = vld [vmem:[%s9 + $0x8] sm:$0xf]
    %v3028 = vld [vmem:[%s9 + $0xc] sm:$0xf]
    %v3029 = vld [vmem:[%s9 + $0x10] sm:$0xf]
    %v3030 = vld [vmem:[%s9 + $0x14] sm:$0xf]
    %v3031 = vld [vmem:[%s9 + $0x18] sm:$0xf]
    %v3032 = vld [vmem:[%s9 + $0x1c] sm:$0xf]
    %v3033 = vld [vmem:[%s9 + $0x20] sm:$0xf]
    %v3034 = vld [vmem:[%s9 + $0x24] sm:$0xf]
    %v3035 = vld [vmem:[%s9 + $0x28] sm:$0xf]
    %v3036 = vld [vmem:[%s9 + $0x2c] sm:$0xf]
    %v3037 = vld [vmem:[%s9 + $0x30] sm:$0xf]
    %v3038 = vld [vmem:[%s9 + $0x34] sm:$0xf]
    %v3039 = vld [vmem:[%s9 + $0x38] sm:$0xf]
    %v3040 = vld [vmem:[%s9 + $0x3c] sm:$0xf]
    %v3041 = vpack.c.bf16 %v3024, %v3024
    %s3042 = scalar_lea.vmem %s9, 64
    %v3043 = vld [vmem:[%s3042] sm:$0xf]
    %v3044 = vld [vmem:[%s3042 + $0x4] sm:$0xf]
    %v3045 = vld [vmem:[%s3042 + $0x8] sm:$0xf]
    %v3046 = vld [vmem:[%s3042 + $0xc] sm:$0xf]
    %v3047 = vld [vmem:[%s3042 + $0x10] sm:$0xf]
    %v3048 = vld [vmem:[%s3042 + $0x14] sm:$0xf]
    %v3049 = vld [vmem:[%s3042 + $0x18] sm:$0xf]
    %v3050 = vld [vmem:[%s3042 + $0x1c] sm:$0xf]
    %v3051 = vld [vmem:[%s3042 + $0x20] sm:$0xf]
    %v3052 = vld [vmem:[%s3042 + $0x24] sm:$0xf]
    %v3053 = vld [vmem:[%s3042 + $0x28] sm:$0xf]
    %v3054 = vld [vmem:[%s3042 + $0x2c] sm:$0xf]
    %v3055 = vld [vmem:[%s3042 + $0x30] sm:$0xf]
    %v3056 = vld [vmem:[%s3042 + $0x34] sm:$0xf]
    %v3057 = vld [vmem:[%s3042 + $0x38] sm:$0xf]
    %v3058 = vld [vmem:[%s3042 + $0x3c] sm:$0xf]
    %v3075 = vunpack.c.l.b16 %v3043
    %v3076 = vunpack.c.l.b16 %v3044
    %v3077 = vunpack.c.l.b16 %v3045
    %v3078 = vunpack.c.l.b16 %v3046
    %v3079 = vunpack.c.l.b16 %v3047
    %v3080 = vunpack.c.l.b16 %v3048
    %v3081 = vunpack.c.l.b16 %v3049
    %v3082 = vunpack.c.l.b16 %v3050
    %v3083 = vunpack.c.l.b16 %v3051
    %v3084 = vunpack.c.l.b16 %v3052
    %v3085 = vunpack.c.l.b16 %v3053
    %v3086 = vunpack.c.l.b16 %v3054
    %v3087 = vunpack.c.l.b16 %v3055
    %v3088 = vunpack.c.l.b16 %v3056
    %v3089 = vunpack.c.l.b16 %v3057
    %v3090 = vunpack.c.l.b16 %v3058
    %v3091 = vpack.c.b16 %v3076, %v3075
    %v3092 = vpack.c.b16 %v3078, %v3077
    %v3093 = vpack.c.b16 %v3080, %v3079
    %v3094 = vpack.c.b16 %v3082, %v3081
    %v3095 = vpack.c.b16 %v3084, %v3083
    %v3096 = vpack.c.b16 %v3086, %v3085
    %v3097 = vpack.c.b16 %v3088, %v3087
    %v3098 = vpack.c.b16 %v3090, %v3089
    %3107 = vmatprep.subr.bf16.mxu0 0
    %3108 = vmatpush1.bf16.msra.mxu0 %v3091
    %3109 = vmatprep.subr.bf16.mxu0 0
    %3110 = vmatpush1.bf16.msra.mxu0 %v3092
    %3111 = vmatprep.subr.bf16.mxu0 0
    %3112 = vmatpush1.bf16.msra.mxu0 %v3093
    %3113 = vmatprep.subr.bf16.mxu0 0
    %3114 = vmatpush1.bf16.msra.mxu0 %v3094
    %3115 = vmatprep.subr.bf16.mxu0 0
    %3116 = vmatpush1.bf16.msra.mxu0 %v3095
    %3117 = vmatprep.subr.bf16.mxu0 0
    %3118 = vmatpush1.bf16.msra.mxu0 %v3096
    %3119 = vmatprep.subr.bf16.mxu0 0
    %3120 = vmatpush1.bf16.msra.mxu0 %v3097
    %3121 = vmatprep.subr.bf16.mxu0 0
    %3122 = vmatpush1.bf16.msra.mxu0 %v3098
    %3123 = vmatprep.subr.bf16.mxu0 0
    %3124 = vmatpush1.bf16.msra.mxu0 0
    %3125 = vmatprep.subr.bf16.mxu0 0
    %3126 = vmatpush1.bf16.msra.mxu0 0
    %3127 = vmatprep.subr.bf16.mxu0 0
    %3128 = vmatpush1.bf16.msra.mxu0 0
    %3129 = vmatprep.subr.bf16.mxu0 0
    %3130 = vmatpush1.bf16.msra.mxu0 0
    %3131 = vmatprep.subr.bf16.mxu0 0
    %3132 = vmatpush1.bf16.msra.mxu0 0
    %3133 = vmatprep.subr.bf16.mxu0 0
    %3134 = vmatpush1.bf16.msra.mxu0 0
    %3135 = vmatprep.subr.bf16.mxu0 0
    %3136 = vmatpush1.bf16.msra.mxu0 0
    %3137 = vmatprep.subr.bf16.mxu0 0
    %3138 = vmatpush1.bf16.msra.mxu0 0
    %3139 = vmatprep.mubr.bf16.mxu0 0
    %3140 = vmatmul.mubr.bf16.gmra.mrb[0].mxu0 %v2823
    %v3141 = vpop.f32.mrb[0].mxu0
    %v3142 = vadd.f32 0.0, %v3141
    %v3143 = vpop.f32.mrb[0].mxu0
    %v3144 = vpop.f32.mrb[0].mxu0
    %v3145 = vpop.f32.mrb[0].mxu0
    %3146 = vdwg.mxu0
    %v3163 = vunpack.c.l.b16 %v3025
    %v3164 = vunpack.c.l.b16 %v3026
    %v3165 = vunpack.c.l.b16 %v3027
    %v3166 = vunpack.c.l.b16 %v3028
    %v3167 = vunpack.c.l.b16 %v3029
    %v3168 = vunpack.c.l.b16 %v3030
    %v3169 = vunpack.c.l.b16 %v3031
    %v3170 = vunpack.c.l.b16 %v3032
    %v3171 = vunpack.c.l.b16 %v3033
    %v3172 = vunpack.c.l.b16 %v3034
    %v3173 = vunpack.c.l.b16 %v3035
    %v3174 = vunpack.c.l.b16 %v3036
    %v3175 = vunpack.c.l.b16 %v3037
    %v3176 = vunpack.c.l.b16 %v3038
    %v3177 = vunpack.c.l.b16 %v3039
    %v3178 = vunpack.c.l.b16 %v3040
    %v3179 = vpack.c.b16 %v3164, %v3163
    %v3180 = vpack.c.b16 %v3166, %v3165
    %v3181 = vpack.c.b16 %v3168, %v3167
    %v3182 = vpack.c.b16 %v3170, %v3169
    %v3183 = vpack.c.b16 %v3172, %v3171
    %v3184 = vpack.c.b16 %v3174, %v3173
    %v3185 = vpack.c.b16 %v3176, %v3175
    %v3186 = vpack.c.b16 %v3178, %v3177
    %3195 = vmatprep.subr.bf16.mxu0 0
    %3196 = vmatpush1.bf16.msra.mxu0 %v3179
    %3197 = vmatprep.subr.bf16.mxu0 0
    %3198 = vmatpush1.bf16.msra.mxu0 %v3180
    %3199 = vmatprep.subr.bf16.mxu0 0
    %3200 = vmatpush1.bf16.msra.mxu0 %v3181
    %3201 = vmatprep.subr.bf16.mxu0 0
    %3202 = vmatpush1.bf16.msra.mxu0 %v3182
    %3203 = vmatprep.subr.bf16.mxu0 0
    %3204 = vmatpush1.bf16.msra.mxu0 %v3183
    %3205 = vmatprep.subr.bf16.mxu0 0
    %3206 = vmatpush1.bf16.msra.mxu0 %v3184
    %3207 = vmatprep.subr.bf16.mxu0 0
    %3208 = vmatpush1.bf16.msra.mxu0 %v3185
    %3209 = vmatprep.subr.bf16.mxu0 0
    %3210 = vmatpush1.bf16.msra.mxu0 %v3186
    %3211 = vmatprep.subr.bf16.mxu0 0
    %3212 = vmatpush1.bf16.msra.mxu0 0
    %3213 = vmatprep.subr.bf16.mxu0 0
    %3214 = vmatpush1.bf16.msra.mxu0 0
    %3215 = vmatprep.subr.bf16.mxu0 0
    %3216 = vmatpush1.bf16.msra.mxu0 0
    %3217 = vmatprep.subr.bf16.mxu0 0
    %3218 = vmatpush1.bf16.msra.mxu0 0
    %3219 = vmatprep.subr.bf16.mxu0 0
    %3220 = vmatpush1.bf16.msra.mxu0 0
    %3221 = vmatprep.subr.bf16.mxu0 0
    %3222 = vmatpush1.bf16.msra.mxu0 0
    %3223 = vmatprep.subr.bf16.mxu0 0
    %3224 = vmatpush1.bf16.msra.mxu0 0
    %3225 = vmatprep.subr.bf16.mxu0 0
    %3226 = vmatpush1.bf16.msra.mxu0 0
    %3227 = vmatprep.mubr.bf16.mxu0 0
    %3228 = vmatmul.mubr.bf16.gmra.mrb[0].mxu0 %v3041
    %v3229 = vpop.f32.mrb[0].mxu0
    %v3230 = vadd.f32 %v3142, %v3229
    %v3231 = vpop.f32.mrb[0].mxu0
    %v3232 = vpop.f32.mrb[0].mxu0
    %v3233 = vpop.f32.mrb[0].mxu0
    %3234 = vdwg.mxu0
    %v3235 = vld [vmem:[%s3 + $0x81] ss:$0 sm:$0xff]
    %v3236 = vadd.f32 %v3230, %v3235
    %v3237 = vxor.u32 %v3236, 2147483648
    %v3238 = vmul.f32 %v3237, 1.442695
    %v3239 = vpow.pop %v3238
    %v3240 = vadd.f32 %v3239, 1.0
    %v3241 = vrcp.pop %v3240
    %v3242 = vmul.f32 1.0, %v3241
    %v3243 = vmul.f32 %v3236, %v3242
    %vm3244 = vcmask 523264
    %v3245 = vsel %vm3244, %v3243, 0.0
    %3246 = vadd.xlane.f32.xlu0 %v3245
    %v3247 = vpop.xlane.xlu0 %3246
    %v3248 = vrcp.pop 64.0
    %v3249 = vmul.f32 %v3247, %v3248
    %v3250 = vsub.f32 %v3243, %v3249
    %v3251 = vmul.f32 %v3250, %v3250
    %v3252 = vsel %vm3244, %v3251, 0.0
    %3253 = vadd.xlane.f32.xlu0 %v3252
    %v3254 = vpop.xlane.xlu0 %3253
    %v3255 = vmul.f32 %v3254, %v3248
    %v3256 = vadd.f32 %v3255, 1e-05
    %v3257 = vrsqrt.pop %v3256
    %v3258 = vmul.f32 %v3250, %v3257
    %v3259 = vld [vmem:[%s3 + $0x82] ss:$0 sm:$0xff]
    %v3260 = vmul.f32 %v3258, %v3259
    %v3261 = vld [vmem:[%s3 + $0x83] ss:$0 sm:$0xff]
    %v3262 = vadd.f32 %v3260, %v3261
    %v3263 = vld [vmem:[%s10] sm:$0xf]
    %v3264 = vld [vmem:[%s10 + $0x4] sm:$0xf]
    %v3265 = vld [vmem:[%s10 + $0x8] sm:$0xf]
    %v3266 = vld [vmem:[%s10 + $0xc] sm:$0xf]
    %v3267 = vld [vmem:[%s10 + $0x10] sm:$0xf]
    %v3268 = vld [vmem:[%s10 + $0x14] sm:$0xf]
    %v3269 = vld [vmem:[%s10 + $0x18] sm:$0xf]
    %v3270 = vld [vmem:[%s10 + $0x1c] sm:$0xf]
    %v3271 = vpack.c.bf16 %v3262, %v3262
    %v3272 = vld [vmem:[%s3 + $0x84] ss:$0 sm:$0xff]
    %v3281 = vunpack.c.l.b16 %v3263
    %v3282 = vunpack.c.l.b16 %v3264
    %v3283 = vunpack.c.l.b16 %v3265
    %v3284 = vunpack.c.l.b16 %v3266
    %v3285 = vunpack.c.l.b16 %v3267
    %v3286 = vunpack.c.l.b16 %v3268
    %v3287 = vunpack.c.l.b16 %v3269
    %v3288 = vunpack.c.l.b16 %v3270
    %v3289 = vpack.c.b16 %v3282, %v3281
    %v3290 = vpack.c.b16 %v3284, %v3283
    %v3291 = vpack.c.b16 %v3286, %v3285
    %v3292 = vpack.c.b16 %v3288, %v3287
    %v3298 = vsel %vm3244, %v3271, 0
    %3300 = vmatprep.subr.bf16.mxu0 0
    %3301 = vmatpush1.bf16.msra.mxu0 %v3289
    %3302 = vmatprep.subr.bf16.mxu0 0
    %3303 = vmatpush1.bf16.msra.mxu0 %v3290
    %3304 = vmatprep.subr.bf16.mxu0 0
    %3305 = vmatpush1.bf16.msra.mxu0 %v3291
    %3306 = vmatprep.subr.bf16.mxu0 0
    %3307 = vmatpush1.bf16.msra.mxu0 %v3292
    %3308 = vmatprep.subr.bf16.mxu0 0
    %3309 = vmatpush1.bf16.msra.mxu0 0
    %3310 = vmatprep.subr.bf16.mxu0 0
    %3311 = vmatpush1.bf16.msra.mxu0 0
    %3312 = vmatprep.subr.bf16.mxu0 0
    %3313 = vmatpush1.bf16.msra.mxu0 0
    %3314 = vmatprep.subr.bf16.mxu0 0
    %3315 = vmatpush1.bf16.msra.mxu0 0
    %3316 = vmatprep.subr.bf16.mxu0 0
    %3317 = vmatpush1.bf16.msra.mxu0 0
    %3318 = vmatprep.subr.bf16.mxu0 0
    %3319 = vmatpush1.bf16.msra.mxu0 0
    %3320 = vmatprep.subr.bf16.mxu0 0
    %3321 = vmatpush1.bf16.msra.mxu0 0
    %3322 = vmatprep.subr.bf16.mxu0 0
    %3323 = vmatpush1.bf16.msra.mxu0 0
    %3324 = vmatprep.subr.bf16.mxu0 0
    %3325 = vmatpush1.bf16.msra.mxu0 0
    %3326 = vmatprep.subr.bf16.mxu0 0
    %3327 = vmatpush1.bf16.msra.mxu0 0
    %3328 = vmatprep.subr.bf16.mxu0 0
    %3329 = vmatpush1.bf16.msra.mxu0 0
    %3330 = vmatprep.subr.bf16.mxu0 0
    %3331 = vmatpush1.bf16.msra.mxu0 0
    %3332 = vmatprep.mubr.bf16.mxu0 0
    %3333 = vmatmul.mubr.bf16.gmra.mrb[0].mxu0 %v3298
    %v3334 = vpop.f32.mrb[0].mxu0
    %v3335 = vadd.f32 %v3272, %v3334
    %v3336 = vpop.f32.mrb[0].mxu0
    %v3337 = vpop.f32.mrb[0].mxu0
    %v3338 = vpop.f32.mrb[0].mxu0
    %3339 = vdwg.mxu0
    %vm3340 = vcmask 23552
    %3341 = vst.msk [vmem:[%s11] sm:$0xff] %vm3340, %v3335
    // Predicated region
    $region66: #{conditional_unet1d.1} parent=1 // pred_check
      _
    $region67: #{conditional_unet1d.1} parent=1 // pred_check_branch
      %3343 = sbr.rel (0) target = $region69
    $region68: #{conditional_unet1d.1} parent=1 // pred_region
      _
    $region69: #{conditional_unet1d.1} parent=1 // pred_fallthru
      _
    // Predicated region
    $region70: #{conditional_unet1d.1} parent=1 // pred_check
      _
    $region71: #{conditional_unet1d.1} parent=1 // pred_check_branch
      %3345 = sbr.rel (0) target = $region73
    $region72: #{conditional_unet1d.1} parent=1 // pred_region
      _
    $region73: #{conditional_unet1d.1} parent=1 // pred_fallthru
      _
    %3346 = vsyncpa [#allocation3], 1
    %3347 = vsyncpa [#allocation5], 1
    %3348 = vsyncpa [#allocation8], 1

</llo_original>
